<compile_context>
chip_gen: v5e
topology: v5e:2x2
jax: 0.10.0
libtpu: 0.0.40
codegen_flags: <defaults>
</compile_context>

<pallas_src>
import functools
import math

import jax
import jax.numpy as jnp
from jax.experimental import pallas as pl
from jax.experimental.pallas import tpu as pltpu


def _mlp_kernel(x_ref, w1_ref, b1_ref, w2_ref, b2_ref, w3_ref, b3_ref,
                w4_ref, b4_ref, o_ref):
    # One batch tile (TM, D_in) in bf16 against VMEM-resident bf16 weights.
    # Each dot accumulates in f32 on the MXU; activations are re-cast to bf16
    # between layers so every matmul stays a native bf16 MXU pass.
    h = jnp.dot(x_ref[...], w1_ref[...],
                preferred_element_type=jnp.float32) + b1_ref[...]
    h = jnp.dot(h.astype(jnp.bfloat16), w2_ref[...],
                preferred_element_type=jnp.float32) + b2_ref[...]
    h = jnp.dot(h.astype(jnp.bfloat16), w3_ref[...],
                preferred_element_type=jnp.float32) + b3_ref[...]
    h = jnp.dot(h.astype(jnp.bfloat16), w4_ref[...],
                preferred_element_type=jnp.float32) + b4_ref[...]
    o_ref[...] = h.astype(o_ref.dtype)


def _round_up(x, m):
    return (x + m - 1) // m * m


@functools.partial(jax.jit, static_argnames=("img_size",))
def mlp_forward(x, params, *, img_size):
    d_in = img_size * img_size
    # Flatten exactly like torch.reshape(x, (-1, img_size*img_size)).
    x2d = jnp.reshape(x, (-1, d_in))
    batch = x2d.shape[0]

    (w1, b1), (w2, b2), (w3, b3), (w4, b4) = params
    hidden = w1.shape[1]
    num_classes = w4.shape[1]

    # Zero-pad the hidden dim to a lane multiple (500 -> 512). Exact: padded
    # activation columns are 0 (zero weight cols + zero bias), and padded weight
    # rows only multiply those zeros.
    hp = _round_up(hidden, 128)
    ph = hp - hidden
    w1p = jnp.pad(w1, ((0, 0), (0, ph)))
    b1p = jnp.pad(b1, ((0, 0), (0, ph)))
    w2p = jnp.pad(w2, ((0, ph), (0, ph)))
    b2p = jnp.pad(b2, ((0, 0), (0, ph)))
    w3p = jnp.pad(w3, ((0, ph), (0, ph)))
    b3p = jnp.pad(b3, ((0, 0), (0, ph)))
    w4p = jnp.pad(w4, ((0, ph), (0, 0)))

    # bf16 activations/weights (halves HBM weight traffic); biases stay f32.
    x_bf = x2d.astype(jnp.bfloat16)
    w1p, w2p, w3p, w4p = (w.astype(jnp.bfloat16) for w in (w1p, w2p, w3p, w4p))
    b1p = b1p.astype(jnp.float32)
    b2p = b2p.astype(jnp.float32)
    b3p = b3p.astype(jnp.float32)
    b4f = b4.astype(jnp.float32)

    # Batch tiling: weights are DMA'd into VMEM once and reused across all
    # batch tiles (constant index_map); only x/out tiles stream per grid step.
    tm = 128 if batch >= 128 else _round_up(max(batch, 8), 8)
    bp = _round_up(batch, tm)
    if bp != batch:
        x_bf = jnp.pad(x_bf, ((0, bp - batch), (0, 0)))
    n_tiles = bp // tm

    def const(shape):
        return pl.BlockSpec(shape, lambda i: (0, 0))

    flops = 2 * bp * (d_in * hp + 2 * hp * hp + hp * num_classes)
    bytes_accessed = (
        x_bf.size * 2
        + (w1p.size + w2p.size + w3p.size + w4p.size) * 2
        + (b1p.size + b2p.size + b3p.size + b4f.size) * 4
        + bp * num_classes * 4
    )

    out = pl.pallas_call(
        _mlp_kernel,
        out_shape=jax.ShapeDtypeStruct((bp, num_classes), jnp.float32),
        grid_spec=pltpu.PrefetchScalarGridSpec(
            num_scalar_prefetch=0,
            grid=(n_tiles,),
            in_specs=[
                pl.BlockSpec((tm, d_in), lambda i: (i, 0)),   # x tile
                const((d_in, hp)), const((1, hp)),            # layer 1
                const((hp, hp)), const((1, hp)),              # layer 2
                const((hp, hp)), const((1, hp)),              # layer 3
                const((hp, num_classes)), const((1, num_classes)),  # layer 4
            ],
            out_specs=pl.BlockSpec((tm, num_classes), lambda i: (i, 0)),
        ),
        compiler_params=pltpu.CompilerParams(
            dimension_semantics=("parallel",),  # v7x: shard batch tiles over 2 TCs
        ),
        cost_estimate=pl.CostEstimate(
            flops=flops, transcendentals=0, bytes_accessed=bytes_accessed),
    )(x_bf, w1p, b1p, w2p, b2p, w3p, b3p, w4p, b4f)

    return out[:batch]


def init_linear(key, in_features, out_features):
    # PyTorch nn.Linear default init: U(-1/sqrt(in), 1/sqrt(in)) for W and b.
    kw, kb = jax.random.split(key)
    bound = 1.0 / math.sqrt(in_features)
    # Stored transposed: (in_features, out_features), so kernel does x @ W + b.
    w = jax.random.uniform(kw, (in_features, out_features), jnp.float32,
                           minval=-bound, maxval=bound)
    b = jax.random.uniform(kb, (1, out_features), jnp.float32,
                           minval=-bound, maxval=bound)
    return w, b


def make_params(key, img_size, hidden_size, num_classes):
    k1, k2, k3, k4 = jax.random.split(key, 4)
    d_in = img_size * img_size
    return (
        init_linear(k1, d_in, hidden_size),
        init_linear(k2, hidden_size, hidden_size),
        init_linear(k3, hidden_size, hidden_size),
        init_linear(k4, hidden_size, num_classes),
    )


if __name__ == "__main__":
    img_size = 28
    hidden_size = 500
    num_classes = 10
    batch = 16  # small demo batch; exercises the batch grid (2 tiles of 8 rows)

    key = jax.random.PRNGKey(0)
    k_x, k_p = jax.random.split(key)

    # NCHW input like a batch of MNIST images: (B, 1, 28, 28)
    x = jax.random.normal(k_x, (batch, 1, img_size, img_size), jnp.float32)
    params = make_params(k_p, img_size, hidden_size, num_classes)

    out = mlp_forward(x, params, img_size=img_size)
    out = jax.block_until_ready(out)

    # Sanity check vs full-f32 reference of the same math (loose tolerance
    # because the kernel runs weights/activations in bf16).
    x2d = jnp.reshape(x, (-1, img_size * img_size))
    ref = x2d
    for w, b in params:
        ref = ref @ w + b
    assert out.shape == (batch, num_classes)
    assert jnp.allclose(out, ref, atol=5e-2, rtol=5e-2), (
        float(jnp.max(jnp.abs(out - ref))))

    print("KERNEL_OK")
</pallas_src>

<mosaic_0001>
module attributes {stable_mosaic.version = 11 : i64} {
  func.func @_mlp_kernel(%arg0: i32, %arg1: memref<16x784xbf16, #tpu.memory_space<vmem>>, %arg2: memref<784x512xbf16, #tpu.memory_space<vmem>>, %arg3: memref<1x512xf32, #tpu.memory_space<vmem>>, %arg4: memref<512x512xbf16, #tpu.memory_space<vmem>>, %arg5: memref<1x512xf32, #tpu.memory_space<vmem>>, %arg6: memref<512x512xbf16, #tpu.memory_space<vmem>>, %arg7: memref<1x512xf32, #tpu.memory_space<vmem>>, %arg8: memref<512x10xbf16, #tpu.memory_space<vmem>>, %arg9: memref<1x10xf32, #tpu.memory_space<vmem>>, %arg10: memref<16x10xf32, #tpu.memory_space<vmem>>) attributes {dimension_semantics = [#tpu.dimension_semantics<parallel>], iteration_bounds = array<i64: 1>, scalar_prefetch = 0 : i64, scratch_operands = 0 : i64, tpu.core_type = #tpu.core_type<tc>, window_params = [{transform_indices = @transform_0, window_bounds = array<i64: 16, 784>}, {pipeline_mode = #tpu.pipeline_mode<synchronous>, transform_indices = @transform_1, window_bounds = array<i64: 784, 512>}, {pipeline_mode = #tpu.pipeline_mode<synchronous>, transform_indices = @transform_2, window_bounds = array<i64: 1, 512>}, {pipeline_mode = #tpu.pipeline_mode<synchronous>, transform_indices = @transform_3, window_bounds = array<i64: 512, 512>}, {pipeline_mode = #tpu.pipeline_mode<synchronous>, transform_indices = @transform_4, window_bounds = array<i64: 1, 512>}, {pipeline_mode = #tpu.pipeline_mode<synchronous>, transform_indices = @transform_5, window_bounds = array<i64: 512, 512>}, {pipeline_mode = #tpu.pipeline_mode<synchronous>, transform_indices = @transform_6, window_bounds = array<i64: 1, 512>}, {pipeline_mode = #tpu.pipeline_mode<synchronous>, transform_indices = @transform_7, window_bounds = array<i64: 512, 10>}, {pipeline_mode = #tpu.pipeline_mode<synchronous>, transform_indices = @transform_8, window_bounds = array<i64: 1, 10>}, {transform_indices = @transform_9, window_bounds = array<i64: 16, 10>}]} {
    %c0 = arith.constant 0 : index
    %c0_0 = arith.constant 0 : index
    %0 = vector.load %arg1[%c0, %c0_0] : memref<16x784xbf16, #tpu.memory_space<vmem>>, vector<16x784xbf16>
    %c0_1 = arith.constant 0 : index
    %c0_2 = arith.constant 0 : index
    %1 = vector.load %arg2[%c0_1, %c0_2] : memref<784x512xbf16, #tpu.memory_space<vmem>>, vector<784x512xbf16>
    %cst = arith.constant dense<0.000000e+00> : vector<16x512xf32>
    %2 = tpu.matmul %0, %1, %cst {dimension_numbers = #tpu.dot_dimension_numbers<[1], [0], [0], [1], [0, 0, 1, 1], [], []>} : vector<16x784xbf16>, vector<784x512xbf16>, vector<16x512xf32> -> vector<16x512xf32>
    %c0_3 = arith.constant 0 : index
    %c0_4 = arith.constant 0 : index
    %3 = vector.load %arg3[%c0_3, %c0_4] : memref<1x512xf32, #tpu.memory_space<vmem>>, vector<1x512xf32>
    %4 = vector.broadcast %3 : vector<1x512xf32> to vector<16x512xf32>
    %5 = arith.addf %2, %4 : vector<16x512xf32>
    %6 = arith.truncf %5 : vector<16x512xf32> to vector<16x512xbf16>
    %c0_5 = arith.constant 0 : index
    %c0_6 = arith.constant 0 : index
    %7 = vector.load %arg4[%c0_5, %c0_6] : memref<512x512xbf16, #tpu.memory_space<vmem>>, vector<512x512xbf16>
    %cst_7 = arith.constant dense<0.000000e+00> : vector<16x512xf32>
    %8 = tpu.matmul %6, %7, %cst_7 {dimension_numbers = #tpu.dot_dimension_numbers<[1], [0], [0], [1], [0, 0, 1, 1], [], []>} : vector<16x512xbf16>, vector<512x512xbf16>, vector<16x512xf32> -> vector<16x512xf32>
    %c0_8 = arith.constant 0 : index
    %c0_9 = arith.constant 0 : index
    %9 = vector.load %arg5[%c0_8, %c0_9] : memref<1x512xf32, #tpu.memory_space<vmem>>, vector<1x512xf32>
    %10 = vector.broadcast %9 : vector<1x512xf32> to vector<16x512xf32>
    %11 = arith.addf %8, %10 : vector<16x512xf32>
    %12 = arith.truncf %11 : vector<16x512xf32> to vector<16x512xbf16>
    %c0_10 = arith.constant 0 : index
    %c0_11 = arith.constant 0 : index
    %13 = vector.load %arg6[%c0_10, %c0_11] : memref<512x512xbf16, #tpu.memory_space<vmem>>, vector<512x512xbf16>
    %cst_12 = arith.constant dense<0.000000e+00> : vector<16x512xf32>
    %14 = tpu.matmul %12, %13, %cst_12 {dimension_numbers = #tpu.dot_dimension_numbers<[1], [0], [0], [1], [0, 0, 1, 1], [], []>} : vector<16x512xbf16>, vector<512x512xbf16>, vector<16x512xf32> -> vector<16x512xf32>
    %c0_13 = arith.constant 0 : index
    %c0_14 = arith.constant 0 : index
    %15 = vector.load %arg7[%c0_13, %c0_14] : memref<1x512xf32, #tpu.memory_space<vmem>>, vector<1x512xf32>
    %16 = vector.broadcast %15 : vector<1x512xf32> to vector<16x512xf32>
    %17 = arith.addf %14, %16 : vector<16x512xf32>
    %18 = arith.truncf %17 : vector<16x512xf32> to vector<16x512xbf16>
    %c0_15 = arith.constant 0 : index
    %c0_16 = arith.constant 0 : index
    %19 = vector.load %arg8[%c0_15, %c0_16] : memref<512x10xbf16, #tpu.memory_space<vmem>>, vector<512x10xbf16>
    %cst_17 = arith.constant dense<0.000000e+00> : vector<16x10xf32>
    %20 = tpu.matmul %18, %19, %cst_17 {dimension_numbers = #tpu.dot_dimension_numbers<[1], [0], [0], [1], [0, 0, 1, 1], [], []>} : vector<16x512xbf16>, vector<512x10xbf16>, vector<16x10xf32> -> vector<16x10xf32>
    %c0_18 = arith.constant 0 : index
    %c0_19 = arith.constant 0 : index
    %21 = vector.load %arg9[%c0_18, %c0_19] : memref<1x10xf32, #tpu.memory_space<vmem>>, vector<1x10xf32>
    %22 = vector.broadcast %21 : vector<1x10xf32> to vector<16x10xf32>
    %23 = arith.addf %20, %22 : vector<16x10xf32>
    %c0_20 = arith.constant 0 : index
    %c0_21 = arith.constant 0 : index
    %24 = vector.load %arg10[%c0_20, %c0_21] : memref<16x10xf32, #tpu.memory_space<vmem>>, vector<16x10xf32>
    tpu.vector_store %arg10[%c0_20, %c0_21], %23 {strides = array<i32>} : memref<16x10xf32, #tpu.memory_space<vmem>>, vector<16x10xf32>,
    return
  }
  func.func @transform_0(%arg0: i32) -> (i32, i32) {
    %c0_i32 = arith.constant 0 : i32
    %c0_i32_0 = arith.constant 0 : i32
    return %arg0, %c0_i32 : i32, i32
  }
  func.func @transform_1(%arg0: i32) -> (i32, i32) {
    %c0_i32 = arith.constant 0 : i32
    %c0_i32_0 = arith.constant 0 : i32
    %c0_i32_1 = arith.constant 0 : i32
    return %c0_i32, %c0_i32_0 : i32, i32
  }
  func.func @transform_2(%arg0: i32) -> (i32, i32) {
    %c0_i32 = arith.constant 0 : i32
    %c0_i32_0 = arith.constant 0 : i32
    %c0_i32_1 = arith.constant 0 : i32
    return %c0_i32, %c0_i32_0 : i32, i32
  }
  func.func @transform_3(%arg0: i32) -> (i32, i32) {
    %c0_i32 = arith.constant 0 : i32
    %c0_i32_0 = arith.constant 0 : i32
    %c0_i32_1 = arith.constant 0 : i32
    return %c0_i32, %c0_i32_0 : i32, i32
  }
  func.func @transform_4(%arg0: i32) -> (i32, i32) {
    %c0_i32 = arith.constant 0 : i32
    %c0_i32_0 = arith.constant 0 : i32
    %c0_i32_1 = arith.constant 0 : i32
    return %c0_i32, %c0_i32_0 : i32, i32
  }
  func.func @transform_5(%arg0: i32) -> (i32, i32) {
    %c0_i32 = arith.constant 0 : i32
    %c0_i32_0 = arith.constant 0 : i32
    %c0_i32_1 = arith.constant 0 : i32
    return %c0_i32, %c0_i32_0 : i32, i32
  }
  func.func @transform_6(%arg0: i32) -> (i32, i32) {
    %c0_i32 = arith.constant 0 : i32
    %c0_i32_0 = arith.constant 0 : i32
    %c0_i32_1 = arith.constant 0 : i32
    return %c0_i32, %c0_i32_0 : i32, i32
  }
  func.func @transform_7(%arg0: i32) -> (i32, i32) {
    %c0_i32 = arith.constant 0 : i32
    %c0_i32_0 = arith.constant 0 : i32
    %c0_i32_1 = arith.constant 0 : i32
    return %c0_i32, %c0_i32_0 : i32, i32
  }
  func.func @transform_8(%arg0: i32) -> (i32, i32) {
    %c0_i32 = arith.constant 0 : i32
    %c0_i32_0 = arith.constant 0 : i32
    %c0_i32_1 = arith.constant 0 : i32
    return %c0_i32, %c0_i32_0 : i32, i32
  }
  func.func @transform_9(%arg0: i32) -> (i32, i32) {
    %c0_i32 = arith.constant 0 : i32
    %c0_i32_0 = arith.constant 0 : i32
    return %arg0, %c0_i32 : i32, i32
  }
}

</mosaic_0001>

<llo_original>
// kernel: mlp_forward.1
$region0: #{mlp_forward.1}
  #allocation0 [shape = 'u32[]', space=smem, size = 0x4, offset = 0x4, fixed_abs, tag = 'smem constant byte address 0x4 - core index']
  #allocation1 [shape = 'u32[72,128]{1,0:T(1,128)}', space=vmem, size = 0x9000, scoped, tag = 'internal scratch']
  %s0 = inlined_call_operand.vmem [shape: bf16[16,784], index: 0, kind: input, shape index: {}]
  %s1 = inlined_call_operand.vmem [shape: bf16[784,512], index: 1, kind: input, shape index: {}]
  %s2 = inlined_call_operand.vmem [shape: f32[1,512], index: 2, kind: input, shape index: {}]
  %s3 = inlined_call_operand.vmem [shape: bf16[512,512], index: 3, kind: input, shape index: {}]
  %s4 = inlined_call_operand.vmem [shape: f32[1,512], index: 4, kind: input, shape index: {}]
  %s5 = inlined_call_operand.vmem [shape: bf16[512,512], index: 5, kind: input, shape index: {}]
  %s6 = inlined_call_operand.vmem [shape: f32[1,512], index: 6, kind: input, shape index: {}]
  %s7 = inlined_call_operand.vmem [shape: bf16[512,10], index: 7, kind: input, shape index: {}]
  %s8 = inlined_call_operand.vmem [shape: f32[1,10], index: 8, kind: input, shape index: {}]
  %s9 = inlined_call_operand.hbm [shape: f32[16,10], index: 9, kind: output, shape index: {}]
  %s10 = sld [smem:[#allocation0]]
  $region46: #{mlp_forward.1} parent=0
    _
  %s12 = ssub.s32 1, %s10
  %s13 = scalar_select 0, %s12, %s10
  $region1: #{mlp_forward.1} parent=0
    #allocation2 [shape = 'u8[8192]{0}', space=vmem, size = 0x2000, scoped, tag = 'output window, operand 0, single buffered']
    #allocation3 [shape = 's32[1]{0}', space=sflag, size = 0x4, scoped, tag = 'scoped memory for mlp_forward.1']
    %14 = vsyncpa [#allocation3], 0
    // Predicated region
    $region2: #{mlp_forward.1} parent=1 // pred_check
      _
    $region3: #{mlp_forward.1} parent=1 // pred_check_branch
      %16 = sbr.rel (0) target = $region5
    $region4: #{mlp_forward.1} parent=1 // pred_region
      _
    $region5: #{mlp_forward.1} parent=1 // pred_fallthru
      _
    // Predicated region
    $region6: #{mlp_forward.1} parent=1 // pred_check
      _
    $region7: #{mlp_forward.1} parent=1 // pred_check_branch
      %18 = sbr.rel (0) target = $region9
    $region8: #{mlp_forward.1} parent=1 // pred_region
      _
    $region9: #{mlp_forward.1} parent=1 // pred_fallthru
      _
    // Predicated region
    $region10: #{mlp_forward.1} parent=1 // pred_check
      _
    $region11: #{mlp_forward.1} parent=1 // pred_check_branch
      %20 = sbr.rel (0) target = $region13
    $region12: #{mlp_forward.1} parent=1 // pred_region
      _
    $region13: #{mlp_forward.1} parent=1 // pred_fallthru
      _
    // Predicated region
    $region14: #{mlp_forward.1} parent=1 // pred_check
      _
    $region15: #{mlp_forward.1} parent=1 // pred_check_branch
      %22 = sbr.rel (0) target = $region17
    $region16: #{mlp_forward.1} parent=1 // pred_region
      _
    $region17: #{mlp_forward.1} parent=1 // pred_fallthru
      _
    // Predicated region
    $region18: #{mlp_forward.1} parent=1 // pred_check
      _
    $region19: #{mlp_forward.1} parent=1 // pred_check_branch
      %24 = sbr.rel (0) target = $region21
    $region20: #{mlp_forward.1} parent=1 // pred_region
      _
    $region21: #{mlp_forward.1} parent=1 // pred_fallthru
      _
    // Predicated region
    $region22: #{mlp_forward.1} parent=1 // pred_check
      _
    $region23: #{mlp_forward.1} parent=1 // pred_check_branch
      %26 = sbr.rel (0) target = $region25
    $region24: #{mlp_forward.1} parent=1 // pred_region
      _
    $region25: #{mlp_forward.1} parent=1 // pred_fallthru
      _
    // Predicated region
    $region26: #{mlp_forward.1} parent=1 // pred_check
      _
    $region27: #{mlp_forward.1} parent=1 // pred_check_branch
      %28 = sbr.rel (0) target = $region29
    $region28: #{mlp_forward.1} parent=1 // pred_region
      _
    $region29: #{mlp_forward.1} parent=1 // pred_fallthru
      _
    // Predicated region
    $region30: #{mlp_forward.1} parent=1 // pred_check
      _
    $region31: #{mlp_forward.1} parent=1 // pred_check_branch
      %30 = sbr.rel (0) target = $region33
    $region32: #{mlp_forward.1} parent=1 // pred_region
      _
    $region33: #{mlp_forward.1} parent=1 // pred_fallthru
      _
    // Predicated region
    $region34: #{mlp_forward.1} parent=1 // pred_check
      _
    $region35: #{mlp_forward.1} parent=1 // pred_check_branch
      %32 = sbr.rel (0) target = $region37
    $region36: #{mlp_forward.1} parent=1 // pred_region
      _
    $region37: #{mlp_forward.1} parent=1 // pred_fallthru
      _
    %v34 = vld [vmem:[%s0] sm:$0xff]
    %v35 = vld [vmem:[%s0 + $0x8] sm:$0xff]
    %v36 = vld [vmem:[%s0 + $0x10] sm:$0xff]
    %v37 = vld [vmem:[%s0 + $0x18] sm:$0xf]
    %v38 = vld [vmem:[%s0 + $0x1c] sm:$0xff]
    %v39 = vld [vmem:[%s0 + $0x24] sm:$0xff]
    %v40 = vld [vmem:[%s0 + $0x2c] sm:$0xff]
    %v41 = vld [vmem:[%s0 + $0x34] sm:$0xf]
    %v42 = vld [vmem:[%s1] sm:$0xff]
    %v43 = vld [vmem:[%s1 + $0x8] sm:$0xff]
    %v44 = vld [vmem:[%s1 + $0x10] sm:$0xff]
    %v45 = vld [vmem:[%s1 + $0x18] sm:$0xff]
    %v46 = vld [vmem:[%s1 + $0x20] sm:$0xff]
    %v47 = vld [vmem:[%s1 + $0x28] sm:$0xff]
    %v48 = vld [vmem:[%s1 + $0x30] sm:$0xff]
    %v49 = vld [vmem:[%s1 + $0x38] sm:$0xff]
    %v50 = vld [vmem:[%s1 + $0x40] sm:$0xff]
    %v51 = vld [vmem:[%s1 + $0x48] sm:$0xff]
    %v52 = vld [vmem:[%s1 + $0x50] sm:$0xff]
    %v53 = vld [vmem:[%s1 + $0x58] sm:$0xff]
    %v54 = vld [vmem:[%s1 + $0x60] sm:$0xff]
    %v55 = vld [vmem:[%s1 + $0x68] sm:$0xff]
    %v56 = vld [vmem:[%s1 + $0x70] sm:$0xff]
    %v57 = vld [vmem:[%s1 + $0x78] sm:$0xff]
    %v58 = vld [vmem:[%s1 + $0x80] sm:$0xff]
    %v59 = vld [vmem:[%s1 + $0x88] sm:$0xff]
    %v60 = vld [vmem:[%s1 + $0x90] sm:$0xff]
    %v61 = vld [vmem:[%s1 + $0x98] sm:$0xff]
    %v62 = vld [vmem:[%s1 + $0xa0] sm:$0xff]
    %v63 = vld [vmem:[%s1 + $0xa8] sm:$0xff]
    %v64 = vld [vmem:[%s1 + $0xb0] sm:$0xff]
    %v65 = vld [vmem:[%s1 + $0xb8] sm:$0xff]
    %v66 = vld [vmem:[%s1 + $0xc0] sm:$0xff]
    %v67 = vld [vmem:[%s1 + $0xc8] sm:$0xff]
    %v68 = vld [vmem:[%s1 + $0xd0] sm:$0xff]
    %v69 = vld [vmem:[%s1 + $0xd8] sm:$0xff]
    %v70 = vld [vmem:[%s1 + $0xe0] sm:$0xff]
    %v71 = vld [vmem:[%s1 + $0xe8] sm:$0xff]
    %v72 = vld [vmem:[%s1 + $0xf0] sm:$0xff]
    %v73 = vld [vmem:[%s1 + $0xf8] sm:$0xff]
    %v74 = vld [vmem:[%s1 + $0x100] sm:$0xff]
    %v75 = vld [vmem:[%s1 + $0x108] sm:$0xff]
    %v76 = vld [vmem:[%s1 + $0x110] sm:$0xff]
    %v77 = vld [vmem:[%s1 + $0x118] sm:$0xff]
    %v78 = vld [vmem:[%s1 + $0x120] sm:$0xff]
    %v79 = vld [vmem:[%s1 + $0x128] sm:$0xff]
    %v80 = vld [vmem:[%s1 + $0x130] sm:$0xff]
    %v81 = vld [vmem:[%s1 + $0x138] sm:$0xff]
    %v82 = vld [vmem:[%s1 + $0x140] sm:$0xff]
    %v83 = vld [vmem:[%s1 + $0x148] sm:$0xff]
    %v84 = vld [vmem:[%s1 + $0x150] sm:$0xff]
    %v85 = vld [vmem:[%s1 + $0x158] sm:$0xff]
    %v86 = vld [vmem:[%s1 + $0x160] sm:$0xff]
    %v87 = vld [vmem:[%s1 + $0x168] sm:$0xff]
    %v88 = vld [vmem:[%s1 + $0x170] sm:$0xff]
    %v89 = vld [vmem:[%s1 + $0x178] sm:$0xff]
    %v90 = vld [vmem:[%s1 + $0x180] sm:$0xff]
    %v91 = vld [vmem:[%s1 + $0x188] sm:$0xff]
    %v92 = vld [vmem:[%s1 + $0x190] sm:$0xff]
    %v93 = vld [vmem:[%s1 + $0x198] sm:$0xff]
    %v94 = vld [vmem:[%s1 + $0x1a0] sm:$0xff]
    %v95 = vld [vmem:[%s1 + $0x1a8] sm:$0xff]
    %v96 = vld [vmem:[%s1 + $0x1b0] sm:$0xff]
    %v97 = vld [vmem:[%s1 + $0x1b8] sm:$0xff]
    %v98 = vld [vmem:[%s1 + $0x1c0] sm:$0xff]
    %v99 = vld [vmem:[%s1 + $0x1c8] sm:$0xff]
    %v100 = vld [vmem:[%s1 + $0x1d0] sm:$0xff]
    %v101 = vld [vmem:[%s1 + $0x1d8] sm:$0xff]
    %v102 = vld [vmem:[%s1 + $0x1e0] sm:$0xff]
    %v103 = vld [vmem:[%s1 + $0x1e8] sm:$0xff]
    %v104 = vld [vmem:[%s1 + $0x1f0] sm:$0xff]
    %v105 = vld [vmem:[%s1 + $0x1f8] sm:$0xff]
    %v106 = vld [vmem:[%s1 + $0x200] sm:$0xff]
    %v107 = vld [vmem:[%s1 + $0x208] sm:$0xff]
    %v108 = vld [vmem:[%s1 + $0x210] sm:$0xff]
    %v109 = vld [vmem:[%s1 + $0x218] sm:$0xff]
    %v110 = vld [vmem:[%s1 + $0x220] sm:$0xff]
    %v111 = vld [vmem:[%s1 + $0x228] sm:$0xff]
    %v112 = vld [vmem:[%s1 + $0x230] sm:$0xff]
    %v113 = vld [vmem:[%s1 + $0x238] sm:$0xff]
    %v114 = vld [vmem:[%s1 + $0x240] sm:$0xff]
    %v115 = vld [vmem:[%s1 + $0x248] sm:$0xff]
    %v116 = vld [vmem:[%s1 + $0x250] sm:$0xff]
    %v117 = vld [vmem:[%s1 + $0x258] sm:$0xff]
    %v118 = vld [vmem:[%s1 + $0x260] sm:$0xff]
    %v119 = vld [vmem:[%s1 + $0x268] sm:$0xff]
    %v120 = vld [vmem:[%s1 + $0x270] sm:$0xff]
    %v121 = vld [vmem:[%s1 + $0x278] sm:$0xff]
    %v122 = vld [vmem:[%s1 + $0x280] sm:$0xff]
    %v123 = vld [vmem:[%s1 + $0x288] sm:$0xff]
    %v124 = vld [vmem:[%s1 + $0x290] sm:$0xff]
    %v125 = vld [vmem:[%s1 + $0x298] sm:$0xff]
    %v126 = vld [vmem:[%s1 + $0x2a0] sm:$0xff]
    %v127 = vld [vmem:[%s1 + $0x2a8] sm:$0xff]
    %v128 = vld [vmem:[%s1 + $0x2b0] sm:$0xff]
    %v129 = vld [vmem:[%s1 + $0x2b8] sm:$0xff]
    %v130 = vld [vmem:[%s1 + $0x2c0] sm:$0xff]
    %v131 = vld [vmem:[%s1 + $0x2c8] sm:$0xff]
    %v132 = vld [vmem:[%s1 + $0x2d0] sm:$0xff]
    %v133 = vld [vmem:[%s1 + $0x2d8] sm:$0xff]
    %v134 = vld [vmem:[%s1 + $0x2e0] sm:$0xff]
    %v135 = vld [vmem:[%s1 + $0x2e8] sm:$0xff]
    %v136 = vld [vmem:[%s1 + $0x2f0] sm:$0xff]
    %v137 = vld [vmem:[%s1 + $0x2f8] sm:$0xff]
    %v138 = vld [vmem:[%s1 + $0x300] sm:$0xff]
    %v139 = vld [vmem:[%s1 + $0x308] sm:$0xff]
    %v140 = vld [vmem:[%s1 + $0x310] sm:$0xff]
    %v141 = vld [vmem:[%s1 + $0x318] sm:$0xff]
    %v142 = vld [vmem:[%s1 + $0x320] sm:$0xff]
    %v143 = vld [vmem:[%s1 + $0x328] sm:$0xff]
    %v144 = vld [vmem:[%s1 + $0x330] sm:$0xff]
    %v145 = vld [vmem:[%s1 + $0x338] sm:$0xff]
    %v146 = vld [vmem:[%s1 + $0x340] sm:$0xff]
    %v147 = vld [vmem:[%s1 + $0x348] sm:$0xff]
    %v148 = vld [vmem:[%s1 + $0x350] sm:$0xff]
    %v149 = vld [vmem:[%s1 + $0x358] sm:$0xff]
    %v150 = vld [vmem:[%s1 + $0x360] sm:$0xff]
    %v151 = vld [vmem:[%s1 + $0x368] sm:$0xff]
    %v152 = vld [vmem:[%s1 + $0x370] sm:$0xff]
    %v153 = vld [vmem:[%s1 + $0x378] sm:$0xff]
    %v154 = vld [vmem:[%s1 + $0x380] sm:$0xff]
    %v155 = vld [vmem:[%s1 + $0x388] sm:$0xff]
    %v156 = vld [vmem:[%s1 + $0x390] sm:$0xff]
    %v157 = vld [vmem:[%s1 + $0x398] sm:$0xff]
    %v158 = vld [vmem:[%s1 + $0x3a0] sm:$0xff]
    %v159 = vld [vmem:[%s1 + $0x3a8] sm:$0xff]
    %v160 = vld [vmem:[%s1 + $0x3b0] sm:$0xff]
    %v161 = vld [vmem:[%s1 + $0x3b8] sm:$0xff]
    %v162 = vld [vmem:[%s1 + $0x3c0] sm:$0xff]
    %v163 = vld [vmem:[%s1 + $0x3c8] sm:$0xff]
    %v164 = vld [vmem:[%s1 + $0x3d0] sm:$0xff]
    %v165 = vld [vmem:[%s1 + $0x3d8] sm:$0xff]
    %v166 = vld [vmem:[%s1 + $0x3e0] sm:$0xff]
    %v167 = vld [vmem:[%s1 + $0x3e8] sm:$0xff]
    %v168 = vld [vmem:[%s1 + $0x3f0] sm:$0xff]
    %v169 = vld [vmem:[%s1 + $0x3f8] sm:$0xff]
    %v170 = vld [vmem:[%s1 + $0x400] sm:$0xff]
    %v171 = vld [vmem:[%s1 + $0x408] sm:$0xff]
    %v172 = vld [vmem:[%s1 + $0x410] sm:$0xff]
    %v173 = vld [vmem:[%s1 + $0x418] sm:$0xff]
    %v174 = vld [vmem:[%s1 + $0x420] sm:$0xff]
    %v175 = vld [vmem:[%s1 + $0x428] sm:$0xff]
    %v176 = vld [vmem:[%s1 + $0x430] sm:$0xff]
    %v177 = vld [vmem:[%s1 + $0x438] sm:$0xff]
    %v178 = vld [vmem:[%s1 + $0x440] sm:$0xff]
    %v179 = vld [vmem:[%s1 + $0x448] sm:$0xff]
    %v180 = vld [vmem:[%s1 + $0x450] sm:$0xff]
    %v181 = vld [vmem:[%s1 + $0x458] sm:$0xff]
    %v182 = vld [vmem:[%s1 + $0x460] sm:$0xff]
    %v183 = vld [vmem:[%s1 + $0x468] sm:$0xff]
    %v184 = vld [vmem:[%s1 + $0x470] sm:$0xff]
    %v185 = vld [vmem:[%s1 + $0x478] sm:$0xff]
    %v186 = vld [vmem:[%s1 + $0x480] sm:$0xff]
    %v187 = vld [vmem:[%s1 + $0x488] sm:$0xff]
    %v188 = vld [vmem:[%s1 + $0x490] sm:$0xff]
    %v189 = vld [vmem:[%s1 + $0x498] sm:$0xff]
    %v190 = vld [vmem:[%s1 + $0x4a0] sm:$0xff]
    %v191 = vld [vmem:[%s1 + $0x4a8] sm:$0xff]
    %v192 = vld [vmem:[%s1 + $0x4b0] sm:$0xff]
    %v193 = vld [vmem:[%s1 + $0x4b8] sm:$0xff]
    %v194 = vld [vmem:[%s1 + $0x4c0] sm:$0xff]
    %v195 = vld [vmem:[%s1 + $0x4c8] sm:$0xff]
    %v196 = vld [vmem:[%s1 + $0x4d0] sm:$0xff]
    %v197 = vld [vmem:[%s1 + $0x4d8] sm:$0xff]
    %v198 = vld [vmem:[%s1 + $0x4e0] sm:$0xff]
    %v199 = vld [vmem:[%s1 + $0x4e8] sm:$0xff]
    %v200 = vld [vmem:[%s1 + $0x4f0] sm:$0xff]
    %v201 = vld [vmem:[%s1 + $0x4f8] sm:$0xff]
    %v202 = vld [vmem:[%s1 + $0x500] sm:$0xff]
    %v203 = vld [vmem:[%s1 + $0x508] sm:$0xff]
    %v204 = vld [vmem:[%s1 + $0x510] sm:$0xff]
    %v205 = vld [vmem:[%s1 + $0x518] sm:$0xff]
    %v206 = vld [vmem:[%s1 + $0x520] sm:$0xff]
    %v207 = vld [vmem:[%s1 + $0x528] sm:$0xff]
    %v208 = vld [vmem:[%s1 + $0x530] sm:$0xff]
    %v209 = vld [vmem:[%s1 + $0x538] sm:$0xff]
    %v210 = vld [vmem:[%s1 + $0x540] sm:$0xff]
    %v211 = vld [vmem:[%s1 + $0x548] sm:$0xff]
    %v212 = vld [vmem:[%s1 + $0x550] sm:$0xff]
    %v213 = vld [vmem:[%s1 + $0x558] sm:$0xff]
    %v214 = vld [vmem:[%s1 + $0x560] sm:$0xff]
    %v215 = vld [vmem:[%s1 + $0x568] sm:$0xff]
    %v216 = vld [vmem:[%s1 + $0x570] sm:$0xff]
    %v217 = vld [vmem:[%s1 + $0x578] sm:$0xff]
    %v218 = vld [vmem:[%s1 + $0x580] sm:$0xff]
    %v219 = vld [vmem:[%s1 + $0x588] sm:$0xff]
    %v220 = vld [vmem:[%s1 + $0x590] sm:$0xff]
    %v221 = vld [vmem:[%s1 + $0x598] sm:$0xff]
    %v222 = vld [vmem:[%s1 + $0x5a0] sm:$0xff]
    %v223 = vld [vmem:[%s1 + $0x5a8] sm:$0xff]
    %v224 = vld [vmem:[%s1 + $0x5b0] sm:$0xff]
    %v225 = vld [vmem:[%s1 + $0x5b8] sm:$0xff]
    %v226 = vld [vmem:[%s1 + $0x5c0] sm:$0xff]
    %v227 = vld [vmem:[%s1 + $0x5c8] sm:$0xff]
    %v228 = vld [vmem:[%s1 + $0x5d0] sm:$0xff]
    %v229 = vld [vmem:[%s1 + $0x5d8] sm:$0xff]
    %v230 = vld [vmem:[%s1 + $0x5e0] sm:$0xff]
    %v231 = vld [vmem:[%s1 + $0x5e8] sm:$0xff]
    %v232 = vld [vmem:[%s1 + $0x5f0] sm:$0xff]
    %v233 = vld [vmem:[%s1 + $0x5f8] sm:$0xff]
    %v234 = vld [vmem:[%s1 + $0x600] sm:$0xff]
    %v235 = vld [vmem:[%s1 + $0x608] sm:$0xff]
    %v236 = vld [vmem:[%s1 + $0x610] sm:$0xff]
    %v237 = vld [vmem:[%s1 + $0x618] sm:$0xff]
    %v238 = vld [vmem:[%s2] sm:$0xf]
    %v240 = vperm.slane %v238, 0
    %v241 = vperm.slane %v238, 1
    %v242 = vperm.slane %v238, 2
    %v243 = vperm.slane %v238, 3
    %v256 = vunpack.c.l.b16 %v34
    %v257 = vunpack.c.h.b16 %v34
    %v258 = vunpack.c.l.b16 %v35
    %v259 = vunpack.c.h.b16 %v35
    %v260 = vunpack.c.l.b16 %v36
    %v261 = vunpack.c.h.b16 %v36
    %v262 = vunpack.c.l.b16 %v37
    %v263 = vunpack.c.l.b16 %v38
    %v264 = vunpack.c.h.b16 %v38
    %v265 = vunpack.c.l.b16 %v39
    %v266 = vunpack.c.h.b16 %v39
    %v267 = vunpack.c.l.b16 %v40
    %v268 = vunpack.c.h.b16 %v40
    %v269 = vunpack.c.l.b16 %v41
    %v270 = vpack.c.b16 %v263, %v256
    %v271 = vpack.c.b16 %v264, %v257
    %v272 = vpack.c.b16 %v265, %v258
    %v273 = vpack.c.b16 %v266, %v259
    %v274 = vpack.c.b16 %v267, %v260
    %v275 = vpack.c.b16 %v268, %v261
    %v276 = vpack.c.b16 %v269, %v262
    %v479 = vunpack.c.l.b16 %v42
    %v480 = vunpack.c.h.b16 %v42
    %v481 = vunpack.c.l.b16 %v43
    %v482 = vunpack.c.h.b16 %v43
    %v483 = vunpack.c.l.b16 %v44
    %v484 = vunpack.c.h.b16 %v44
    %v485 = vunpack.c.l.b16 %v45
    %v486 = vunpack.c.h.b16 %v45
    %v487 = vunpack.c.l.b16 %v46
    %v488 = vunpack.c.h.b16 %v46
    %v489 = vunpack.c.l.b16 %v47
    %v490 = vunpack.c.h.b16 %v47
    %v491 = vunpack.c.l.b16 %v48
    %v492 = vunpack.c.h.b16 %v48
    %v493 = vunpack.c.l.b16 %v49
    %v494 = vunpack.c.h.b16 %v49
    %v495 = vunpack.c.l.b16 %v50
    %v496 = vunpack.c.h.b16 %v50
    %v497 = vunpack.c.l.b16 %v51
    %v498 = vunpack.c.h.b16 %v51
    %v499 = vunpack.c.l.b16 %v52
    %v500 = vunpack.c.h.b16 %v52
    %v501 = vunpack.c.l.b16 %v53
    %v502 = vunpack.c.h.b16 %v53
    %v503 = vunpack.c.l.b16 %v54
    %v504 = vunpack.c.h.b16 %v54
    %v505 = vunpack.c.l.b16 %v55
    %v506 = vunpack.c.h.b16 %v55
    %v507 = vunpack.c.l.b16 %v56
    %v508 = vunpack.c.h.b16 %v56
    %v509 = vunpack.c.l.b16 %v57
    %v510 = vunpack.c.h.b16 %v57
    %v511 = vunpack.c.l.b16 %v58
    %v512 = vunpack.c.h.b16 %v58
    %v513 = vunpack.c.l.b16 %v59
    %v514 = vunpack.c.h.b16 %v59
    %v515 = vunpack.c.l.b16 %v60
    %v516 = vunpack.c.h.b16 %v60
    %v517 = vunpack.c.l.b16 %v61
    %v518 = vunpack.c.h.b16 %v61
    %v519 = vunpack.c.l.b16 %v62
    %v520 = vunpack.c.h.b16 %v62
    %v521 = vunpack.c.l.b16 %v63
    %v522 = vunpack.c.h.b16 %v63
    %v523 = vunpack.c.l.b16 %v64
    %v524 = vunpack.c.h.b16 %v64
    %v525 = vunpack.c.l.b16 %v65
    %v526 = vunpack.c.h.b16 %v65
    %v527 = vunpack.c.l.b16 %v66
    %v528 = vunpack.c.h.b16 %v66
    %v529 = vunpack.c.l.b16 %v67
    %v530 = vunpack.c.h.b16 %v67
    %v531 = vunpack.c.l.b16 %v68
    %v532 = vunpack.c.h.b16 %v68
    %v533 = vunpack.c.l.b16 %v69
    %v534 = vunpack.c.h.b16 %v69
    %v535 = vunpack.c.l.b16 %v70
    %v536 = vunpack.c.h.b16 %v70
    %v537 = vunpack.c.l.b16 %v71
    %v538 = vunpack.c.h.b16 %v71
    %v539 = vunpack.c.l.b16 %v72
    %v540 = vunpack.c.h.b16 %v72
    %v541 = vunpack.c.l.b16 %v73
    %v542 = vunpack.c.h.b16 %v73
    %v543 = vunpack.c.l.b16 %v74
    %v544 = vunpack.c.h.b16 %v74
    %v545 = vunpack.c.l.b16 %v75
    %v546 = vunpack.c.h.b16 %v75
    %v547 = vunpack.c.l.b16 %v76
    %v548 = vunpack.c.h.b16 %v76
    %v549 = vunpack.c.l.b16 %v77
    %v550 = vunpack.c.h.b16 %v77
    %v551 = vunpack.c.l.b16 %v78
    %v552 = vunpack.c.h.b16 %v78
    %v553 = vunpack.c.l.b16 %v79
    %v554 = vunpack.c.h.b16 %v79
    %v555 = vunpack.c.l.b16 %v80
    %v556 = vunpack.c.h.b16 %v80
    %v557 = vunpack.c.l.b16 %v81
    %v558 = vunpack.c.h.b16 %v81
    %v559 = vunpack.c.l.b16 %v82
    %v560 = vunpack.c.h.b16 %v82
    %v561 = vunpack.c.l.b16 %v83
    %v562 = vunpack.c.h.b16 %v83
    %v563 = vunpack.c.l.b16 %v84
    %v564 = vunpack.c.h.b16 %v84
    %v565 = vunpack.c.l.b16 %v85
    %v566 = vunpack.c.h.b16 %v85
    %v567 = vunpack.c.l.b16 %v86
    %v568 = vunpack.c.h.b16 %v86
    %v569 = vunpack.c.l.b16 %v87
    %v570 = vunpack.c.h.b16 %v87
    %v571 = vunpack.c.l.b16 %v88
    %v572 = vunpack.c.h.b16 %v88
    %v573 = vunpack.c.l.b16 %v89
    %v574 = vunpack.c.h.b16 %v89
    %v575 = vunpack.c.l.b16 %v90
    %v576 = vunpack.c.h.b16 %v90
    %v577 = vunpack.c.l.b16 %v91
    %v578 = vunpack.c.h.b16 %v91
    %v579 = vunpack.c.l.b16 %v92
    %v580 = vunpack.c.h.b16 %v92
    %v581 = vunpack.c.l.b16 %v93
    %v582 = vunpack.c.h.b16 %v93
    %v583 = vunpack.c.l.b16 %v94
    %v584 = vunpack.c.h.b16 %v94
    %v585 = vunpack.c.l.b16 %v95
    %v586 = vunpack.c.h.b16 %v95
    %v587 = vunpack.c.l.b16 %v96
    %v588 = vunpack.c.h.b16 %v96
    %v589 = vunpack.c.l.b16 %v97
    %v590 = vunpack.c.h.b16 %v97
    %v591 = vunpack.c.l.b16 %v98
    %v592 = vunpack.c.h.b16 %v98
    %v593 = vunpack.c.l.b16 %v99
    %v594 = vunpack.c.h.b16 %v99
    %v595 = vunpack.c.l.b16 %v100
    %v596 = vunpack.c.h.b16 %v100
    %v597 = vunpack.c.l.b16 %v101
    %v598 = vunpack.c.h.b16 %v101
    %v599 = vunpack.c.l.b16 %v102
    %v600 = vunpack.c.h.b16 %v102
    %v601 = vunpack.c.l.b16 %v103
    %v602 = vunpack.c.h.b16 %v103
    %v603 = vunpack.c.l.b16 %v104
    %v604 = vunpack.c.h.b16 %v104
    %v605 = vunpack.c.l.b16 %v105
    %v606 = vunpack.c.h.b16 %v105
    %v607 = vunpack.c.l.b16 %v106
    %v608 = vunpack.c.h.b16 %v106
    %v609 = vunpack.c.l.b16 %v107
    %v610 = vunpack.c.h.b16 %v107
    %v611 = vunpack.c.l.b16 %v108
    %v612 = vunpack.c.h.b16 %v108
    %v613 = vunpack.c.l.b16 %v109
    %v614 = vunpack.c.h.b16 %v109
    %v615 = vunpack.c.l.b16 %v110
    %v616 = vunpack.c.h.b16 %v110
    %v617 = vunpack.c.l.b16 %v111
    %v618 = vunpack.c.h.b16 %v111
    %v619 = vunpack.c.l.b16 %v112
    %v620 = vunpack.c.h.b16 %v112
    %v621 = vunpack.c.l.b16 %v113
    %v622 = vunpack.c.h.b16 %v113
    %v623 = vunpack.c.l.b16 %v114
    %v624 = vunpack.c.h.b16 %v114
    %v625 = vunpack.c.l.b16 %v115
    %v626 = vunpack.c.h.b16 %v115
    %v627 = vunpack.c.l.b16 %v116
    %v628 = vunpack.c.h.b16 %v116
    %v629 = vunpack.c.l.b16 %v117
    %v630 = vunpack.c.h.b16 %v117
    %v631 = vunpack.c.l.b16 %v118
    %v632 = vunpack.c.h.b16 %v118
    %v633 = vunpack.c.l.b16 %v119
    %v634 = vunpack.c.h.b16 %v119
    %v635 = vunpack.c.l.b16 %v120
    %v636 = vunpack.c.h.b16 %v120
    %v637 = vunpack.c.l.b16 %v121
    %v638 = vunpack.c.h.b16 %v121
    %v639 = vunpack.c.l.b16 %v122
    %v640 = vunpack.c.h.b16 %v122
    %v641 = vunpack.c.l.b16 %v123
    %v642 = vunpack.c.h.b16 %v123
    %v643 = vunpack.c.l.b16 %v124
    %v644 = vunpack.c.h.b16 %v124
    %v645 = vunpack.c.l.b16 %v125
    %v646 = vunpack.c.h.b16 %v125
    %v647 = vunpack.c.l.b16 %v126
    %v648 = vunpack.c.h.b16 %v126
    %v649 = vunpack.c.l.b16 %v127
    %v650 = vunpack.c.h.b16 %v127
    %v651 = vunpack.c.l.b16 %v128
    %v652 = vunpack.c.h.b16 %v128
    %v653 = vunpack.c.l.b16 %v129
    %v654 = vunpack.c.h.b16 %v129
    %v655 = vunpack.c.l.b16 %v130
    %v656 = vunpack.c.h.b16 %v130
    %v657 = vunpack.c.l.b16 %v131
    %v658 = vunpack.c.h.b16 %v131
    %v659 = vunpack.c.l.b16 %v132
    %v660 = vunpack.c.h.b16 %v132
    %v661 = vunpack.c.l.b16 %v133
    %v662 = vunpack.c.h.b16 %v133
    %v663 = vunpack.c.l.b16 %v134
    %v664 = vunpack.c.h.b16 %v134
    %v665 = vunpack.c.l.b16 %v135
    %v666 = vunpack.c.h.b16 %v135
    %v667 = vunpack.c.l.b16 %v136
    %v668 = vunpack.c.h.b16 %v136
    %v669 = vunpack.c.l.b16 %v137
    %v670 = vunpack.c.h.b16 %v137
    %v671 = vunpack.c.l.b16 %v138
    %v672 = vunpack.c.h.b16 %v138
    %v673 = vunpack.c.l.b16 %v139
    %v674 = vunpack.c.h.b16 %v139
    %v675 = vunpack.c.l.b16 %v140
    %v676 = vunpack.c.h.b16 %v140
    %v677 = vunpack.c.l.b16 %v141
    %v678 = vunpack.c.h.b16 %v141
    %v679 = vunpack.c.l.b16 %v142
    %v680 = vunpack.c.h.b16 %v142
    %v681 = vunpack.c.l.b16 %v143
    %v682 = vunpack.c.h.b16 %v143
    %v683 = vunpack.c.l.b16 %v144
    %v684 = vunpack.c.h.b16 %v144
    %v685 = vunpack.c.l.b16 %v145
    %v686 = vunpack.c.h.b16 %v145
    %v687 = vunpack.c.l.b16 %v146
    %v688 = vunpack.c.h.b16 %v146
    %v689 = vunpack.c.l.b16 %v147
    %v690 = vunpack.c.h.b16 %v147
    %v691 = vunpack.c.l.b16 %v148
    %v692 = vunpack.c.h.b16 %v148
    %v693 = vunpack.c.l.b16 %v149
    %v694 = vunpack.c.h.b16 %v149
    %v695 = vunpack.c.l.b16 %v150
    %v696 = vunpack.c.h.b16 %v150
    %v697 = vunpack.c.l.b16 %v151
    %v698 = vunpack.c.h.b16 %v151
    %v699 = vunpack.c.l.b16 %v152
    %v700 = vunpack.c.h.b16 %v152
    %v701 = vunpack.c.l.b16 %v153
    %v702 = vunpack.c.h.b16 %v153
    %v703 = vunpack.c.l.b16 %v154
    %v704 = vunpack.c.h.b16 %v154
    %v705 = vunpack.c.l.b16 %v155
    %v706 = vunpack.c.h.b16 %v155
    %v707 = vunpack.c.l.b16 %v156
    %v708 = vunpack.c.h.b16 %v156
    %v709 = vunpack.c.l.b16 %v157
    %v710 = vunpack.c.h.b16 %v157
    %v711 = vunpack.c.l.b16 %v158
    %v712 = vunpack.c.h.b16 %v158
    %v713 = vunpack.c.l.b16 %v159
    %v714 = vunpack.c.h.b16 %v159
    %v715 = vunpack.c.l.b16 %v160
    %v716 = vunpack.c.h.b16 %v160
    %v717 = vunpack.c.l.b16 %v161
    %v718 = vunpack.c.h.b16 %v161
    %v719 = vunpack.c.l.b16 %v162
    %v720 = vunpack.c.h.b16 %v162
    %v721 = vunpack.c.l.b16 %v163
    %v722 = vunpack.c.h.b16 %v163
    %v723 = vunpack.c.l.b16 %v164
    %v724 = vunpack.c.h.b16 %v164
    %v725 = vunpack.c.l.b16 %v165
    %v726 = vunpack.c.h.b16 %v165
    %v727 = vunpack.c.l.b16 %v166
    %v728 = vunpack.c.h.b16 %v166
    %v729 = vunpack.c.l.b16 %v167
    %v730 = vunpack.c.h.b16 %v167
    %v731 = vunpack.c.l.b16 %v168
    %v732 = vunpack.c.h.b16 %v168
    %v733 = vunpack.c.l.b16 %v169
    %v734 = vunpack.c.h.b16 %v169
    %v735 = vunpack.c.l.b16 %v170
    %v736 = vunpack.c.h.b16 %v170
    %v737 = vunpack.c.l.b16 %v171
    %v738 = vunpack.c.h.b16 %v171
    %v739 = vunpack.c.l.b16 %v172
    %v740 = vunpack.c.h.b16 %v172
    %v741 = vunpack.c.l.b16 %v173
    %v742 = vunpack.c.h.b16 %v173
    %v743 = vunpack.c.l.b16 %v174
    %v744 = vunpack.c.h.b16 %v174
    %v745 = vunpack.c.l.b16 %v175
    %v746 = vunpack.c.h.b16 %v175
    %v747 = vunpack.c.l.b16 %v176
    %v748 = vunpack.c.h.b16 %v176
    %v749 = vunpack.c.l.b16 %v177
    %v750 = vunpack.c.h.b16 %v177
    %v751 = vunpack.c.l.b16 %v178
    %v752 = vunpack.c.h.b16 %v178
    %v753 = vunpack.c.l.b16 %v179
    %v754 = vunpack.c.h.b16 %v179
    %v755 = vunpack.c.l.b16 %v180
    %v756 = vunpack.c.h.b16 %v180
    %v757 = vunpack.c.l.b16 %v181
    %v758 = vunpack.c.h.b16 %v181
    %v759 = vunpack.c.l.b16 %v182
    %v760 = vunpack.c.h.b16 %v182
    %v761 = vunpack.c.l.b16 %v183
    %v762 = vunpack.c.h.b16 %v183
    %v763 = vunpack.c.l.b16 %v184
    %v764 = vunpack.c.h.b16 %v184
    %v765 = vunpack.c.l.b16 %v185
    %v766 = vunpack.c.h.b16 %v185
    %v767 = vunpack.c.l.b16 %v186
    %v768 = vunpack.c.h.b16 %v186
    %v769 = vunpack.c.l.b16 %v187
    %v770 = vunpack.c.h.b16 %v187
    %v771 = vunpack.c.l.b16 %v188
    %v772 = vunpack.c.h.b16 %v188
    %v773 = vunpack.c.l.b16 %v189
    %v774 = vunpack.c.h.b16 %v189
    %v775 = vunpack.c.l.b16 %v190
    %v776 = vunpack.c.h.b16 %v190
    %v777 = vunpack.c.l.b16 %v191
    %v778 = vunpack.c.h.b16 %v191
    %v779 = vunpack.c.l.b16 %v192
    %v780 = vunpack.c.h.b16 %v192
    %v781 = vunpack.c.l.b16 %v193
    %v782 = vunpack.c.h.b16 %v193
    %v783 = vunpack.c.l.b16 %v194
    %v784 = vunpack.c.h.b16 %v194
    %v785 = vunpack.c.l.b16 %v195
    %v786 = vunpack.c.h.b16 %v195
    %v787 = vunpack.c.l.b16 %v196
    %v788 = vunpack.c.h.b16 %v196
    %v789 = vunpack.c.l.b16 %v197
    %v790 = vunpack.c.h.b16 %v197
    %v791 = vunpack.c.l.b16 %v198
    %v792 = vunpack.c.h.b16 %v198
    %v793 = vunpack.c.l.b16 %v199
    %v794 = vunpack.c.h.b16 %v199
    %v795 = vunpack.c.l.b16 %v200
    %v796 = vunpack.c.h.b16 %v200
    %v797 = vunpack.c.l.b16 %v201
    %v798 = vunpack.c.h.b16 %v201
    %v799 = vunpack.c.l.b16 %v202
    %v800 = vunpack.c.h.b16 %v202
    %v801 = vunpack.c.l.b16 %v203
    %v802 = vunpack.c.h.b16 %v203
    %v803 = vunpack.c.l.b16 %v204
    %v804 = vunpack.c.h.b16 %v204
    %v805 = vunpack.c.l.b16 %v205
    %v806 = vunpack.c.h.b16 %v205
    %v807 = vunpack.c.l.b16 %v206
    %v808 = vunpack.c.h.b16 %v206
    %v809 = vunpack.c.l.b16 %v207
    %v810 = vunpack.c.h.b16 %v207
    %v811 = vunpack.c.l.b16 %v208
    %v812 = vunpack.c.h.b16 %v208
    %v813 = vunpack.c.l.b16 %v209
    %v814 = vunpack.c.h.b16 %v209
    %v815 = vunpack.c.l.b16 %v210
    %v816 = vunpack.c.h.b16 %v210
    %v817 = vunpack.c.l.b16 %v211
    %v818 = vunpack.c.h.b16 %v211
    %v819 = vunpack.c.l.b16 %v212
    %v820 = vunpack.c.h.b16 %v212
    %v821 = vunpack.c.l.b16 %v213
    %v822 = vunpack.c.h.b16 %v213
    %v823 = vunpack.c.l.b16 %v214
    %v824 = vunpack.c.h.b16 %v214
    %v825 = vunpack.c.l.b16 %v215
    %v826 = vunpack.c.h.b16 %v215
    %v827 = vunpack.c.l.b16 %v216
    %v828 = vunpack.c.h.b16 %v216
    %v829 = vunpack.c.l.b16 %v217
    %v830 = vunpack.c.h.b16 %v217
    %v831 = vunpack.c.l.b16 %v218
    %v832 = vunpack.c.h.b16 %v218
    %v833 = vunpack.c.l.b16 %v219
    %v834 = vunpack.c.h.b16 %v219
    %v835 = vunpack.c.l.b16 %v220
    %v836 = vunpack.c.h.b16 %v220
    %v837 = vunpack.c.l.b16 %v221
    %v838 = vunpack.c.h.b16 %v221
    %v839 = vunpack.c.l.b16 %v222
    %v840 = vunpack.c.h.b16 %v222
    %v841 = vunpack.c.l.b16 %v223
    %v842 = vunpack.c.h.b16 %v223
    %v843 = vunpack.c.l.b16 %v224
    %v844 = vunpack.c.h.b16 %v224
    %v845 = vunpack.c.l.b16 %v225
    %v846 = vunpack.c.h.b16 %v225
    %v847 = vunpack.c.l.b16 %v226
    %v848 = vunpack.c.h.b16 %v226
    %v849 = vunpack.c.l.b16 %v227
    %v850 = vunpack.c.h.b16 %v227
    %v851 = vunpack.c.l.b16 %v228
    %v852 = vunpack.c.h.b16 %v228
    %v853 = vunpack.c.l.b16 %v229
    %v854 = vunpack.c.h.b16 %v229
    %v855 = vunpack.c.l.b16 %v230
    %v856 = vunpack.c.h.b16 %v230
    %v857 = vunpack.c.l.b16 %v231
    %v858 = vunpack.c.h.b16 %v231
    %v859 = vunpack.c.l.b16 %v232
    %v860 = vunpack.c.h.b16 %v232
    %v861 = vunpack.c.l.b16 %v233
    %v862 = vunpack.c.h.b16 %v233
    %v863 = vunpack.c.l.b16 %v234
    %v864 = vunpack.c.h.b16 %v234
    %v865 = vunpack.c.l.b16 %v235
    %v866 = vunpack.c.h.b16 %v235
    %v867 = vunpack.c.l.b16 %v236
    %v868 = vunpack.c.h.b16 %v236
    %v869 = vunpack.c.l.b16 %v237
    %v870 = vunpack.c.h.b16 %v237
    %v871 = vpack.c.b16 %v483, %v479
    %v872 = vpack.c.b16 %v484, %v480
    %v873 = vpack.c.b16 %v485, %v481
    %v874 = vpack.c.b16 %v486, %v482
    %v875 = vpack.c.b16 %v491, %v487
    %v876 = vpack.c.b16 %v492, %v488
    %v877 = vpack.c.b16 %v493, %v489
    %v878 = vpack.c.b16 %v494, %v490
    %v879 = vpack.c.b16 %v499, %v495
    %v880 = vpack.c.b16 %v500, %v496
    %v881 = vpack.c.b16 %v501, %v497
    %v882 = vpack.c.b16 %v502, %v498
    %v883 = vpack.c.b16 %v507, %v503
    %v884 = vpack.c.b16 %v508, %v504
    %v885 = vpack.c.b16 %v509, %v505
    %v886 = vpack.c.b16 %v510, %v506
    %v887 = vpack.c.b16 %v515, %v511
    %v888 = vpack.c.b16 %v516, %v512
    %v889 = vpack.c.b16 %v517, %v513
    %v890 = vpack.c.b16 %v518, %v514
    %v891 = vpack.c.b16 %v523, %v519
    %v892 = vpack.c.b16 %v524, %v520
    %v893 = vpack.c.b16 %v525, %v521
    %v894 = vpack.c.b16 %v526, %v522
    %v895 = vpack.c.b16 %v531, %v527
    %v896 = vpack.c.b16 %v532, %v528
    %v897 = vpack.c.b16 %v533, %v529
    %v898 = vpack.c.b16 %v534, %v530
    %v899 = vpack.c.b16 %v539, %v535
    %v900 = vpack.c.b16 %v540, %v536
    %v901 = vpack.c.b16 %v541, %v537
    %v902 = vpack.c.b16 %v542, %v538
    %v903 = vpack.c.b16 %v547, %v543
    %v904 = vpack.c.b16 %v548, %v544
    %v905 = vpack.c.b16 %v549, %v545
    %v906 = vpack.c.b16 %v550, %v546
    %v907 = vpack.c.b16 %v555, %v551
    %v908 = vpack.c.b16 %v556, %v552
    %v909 = vpack.c.b16 %v557, %v553
    %v910 = vpack.c.b16 %v558, %v554
    %v911 = vpack.c.b16 %v563, %v559
    %v912 = vpack.c.b16 %v564, %v560
    %v913 = vpack.c.b16 %v565, %v561
    %v914 = vpack.c.b16 %v566, %v562
    %v915 = vpack.c.b16 %v571, %v567
    %v916 = vpack.c.b16 %v572, %v568
    %v917 = vpack.c.b16 %v573, %v569
    %v918 = vpack.c.b16 %v574, %v570
    %v919 = vpack.c.b16 %v579, %v575
    %v920 = vpack.c.b16 %v580, %v576
    %v921 = vpack.c.b16 %v581, %v577
    %v922 = vpack.c.b16 %v582, %v578
    %v923 = vpack.c.b16 %v587, %v583
    %v924 = vpack.c.b16 %v588, %v584
    %v925 = vpack.c.b16 %v589, %v585
    %v926 = vpack.c.b16 %v590, %v586
    %v927 = vpack.c.b16 %v595, %v591
    %v928 = vpack.c.b16 %v596, %v592
    %v929 = vpack.c.b16 %v597, %v593
    %v930 = vpack.c.b16 %v598, %v594
    %v931 = vpack.c.b16 %v603, %v599
    %v932 = vpack.c.b16 %v604, %v600
    %v933 = vpack.c.b16 %v605, %v601
    %v934 = vpack.c.b16 %v606, %v602
    %v935 = vpack.c.b16 %v611, %v607
    %v936 = vpack.c.b16 %v612, %v608
    %v937 = vpack.c.b16 %v613, %v609
    %v938 = vpack.c.b16 %v614, %v610
    %v939 = vpack.c.b16 %v619, %v615
    %v940 = vpack.c.b16 %v620, %v616
    %v941 = vpack.c.b16 %v621, %v617
    %v942 = vpack.c.b16 %v622, %v618
    %v943 = vpack.c.b16 %v627, %v623
    %v944 = vpack.c.b16 %v628, %v624
    %v945 = vpack.c.b16 %v629, %v625
    %v946 = vpack.c.b16 %v630, %v626
    %v947 = vpack.c.b16 %v635, %v631
    %v948 = vpack.c.b16 %v636, %v632
    %v949 = vpack.c.b16 %v637, %v633
    %v950 = vpack.c.b16 %v638, %v634
    %v951 = vpack.c.b16 %v643, %v639
    %v952 = vpack.c.b16 %v644, %v640
    %v953 = vpack.c.b16 %v645, %v641
    %v954 = vpack.c.b16 %v646, %v642
    %v955 = vpack.c.b16 %v651, %v647
    %v956 = vpack.c.b16 %v652, %v648
    %v957 = vpack.c.b16 %v653, %v649
    %v958 = vpack.c.b16 %v654, %v650
    %v959 = vpack.c.b16 %v659, %v655
    %v960 = vpack.c.b16 %v660, %v656
    %v961 = vpack.c.b16 %v661, %v657
    %v962 = vpack.c.b16 %v662, %v658
    %v963 = vpack.c.b16 %v667, %v663
    %v964 = vpack.c.b16 %v668, %v664
    %v965 = vpack.c.b16 %v669, %v665
    %v966 = vpack.c.b16 %v670, %v666
    %v967 = vpack.c.b16 %v675, %v671
    %v968 = vpack.c.b16 %v676, %v672
    %v969 = vpack.c.b16 %v677, %v673
    %v970 = vpack.c.b16 %v678, %v674
    %v971 = vpack.c.b16 %v683, %v679
    %v972 = vpack.c.b16 %v684, %v680
    %v973 = vpack.c.b16 %v685, %v681
    %v974 = vpack.c.b16 %v686, %v682
    %v975 = vpack.c.b16 %v691, %v687
    %v976 = vpack.c.b16 %v692, %v688
    %v977 = vpack.c.b16 %v693, %v689
    %v978 = vpack.c.b16 %v694, %v690
    %v979 = vpack.c.b16 %v699, %v695
    %v980 = vpack.c.b16 %v700, %v696
    %v981 = vpack.c.b16 %v701, %v697
    %v982 = vpack.c.b16 %v702, %v698
    %v983 = vpack.c.b16 %v707, %v703
    %v984 = vpack.c.b16 %v708, %v704
    %v985 = vpack.c.b16 %v709, %v705
    %v986 = vpack.c.b16 %v710, %v706
    %v987 = vpack.c.b16 %v715, %v711
    %v988 = vpack.c.b16 %v716, %v712
    %v989 = vpack.c.b16 %v717, %v713
    %v990 = vpack.c.b16 %v718, %v714
    %v991 = vpack.c.b16 %v723, %v719
    %v992 = vpack.c.b16 %v724, %v720
    %v993 = vpack.c.b16 %v725, %v721
    %v994 = vpack.c.b16 %v726, %v722
    %v995 = vpack.c.b16 %v731, %v727
    %v996 = vpack.c.b16 %v732, %v728
    %v997 = vpack.c.b16 %v733, %v729
    %v998 = vpack.c.b16 %v734, %v730
    %v999 = vpack.c.b16 %v739, %v735
    %v1000 = vpack.c.b16 %v740, %v736
    %v1001 = vpack.c.b16 %v741, %v737
    %v1002 = vpack.c.b16 %v742, %v738
    %v1003 = vpack.c.b16 %v747, %v743
    %v1004 = vpack.c.b16 %v748, %v744
    %v1005 = vpack.c.b16 %v749, %v745
    %v1006 = vpack.c.b16 %v750, %v746
    %v1007 = vpack.c.b16 %v755, %v751
    %v1008 = vpack.c.b16 %v756, %v752
    %v1009 = vpack.c.b16 %v757, %v753
    %v1010 = vpack.c.b16 %v758, %v754
    %v1011 = vpack.c.b16 %v763, %v759
    %v1012 = vpack.c.b16 %v764, %v760
    %v1013 = vpack.c.b16 %v765, %v761
    %v1014 = vpack.c.b16 %v766, %v762
    %v1015 = vpack.c.b16 %v771, %v767
    %v1016 = vpack.c.b16 %v772, %v768
    %v1017 = vpack.c.b16 %v773, %v769
    %v1018 = vpack.c.b16 %v774, %v770
    %v1019 = vpack.c.b16 %v779, %v775
    %v1020 = vpack.c.b16 %v780, %v776
    %v1021 = vpack.c.b16 %v781, %v777
    %v1022 = vpack.c.b16 %v782, %v778
    %v1023 = vpack.c.b16 %v787, %v783
    %v1024 = vpack.c.b16 %v788, %v784
    %v1025 = vpack.c.b16 %v789, %v785
    %v1026 = vpack.c.b16 %v790, %v786
    %v1027 = vpack.c.b16 %v795, %v791
    %v1028 = vpack.c.b16 %v796, %v792
    %v1029 = vpack.c.b16 %v797, %v793
    %v1030 = vpack.c.b16 %v798, %v794
    %v1031 = vpack.c.b16 %v803, %v799
    %v1032 = vpack.c.b16 %v804, %v800
    %v1033 = vpack.c.b16 %v805, %v801
    %v1034 = vpack.c.b16 %v806, %v802
    %v1035 = vpack.c.b16 %v811, %v807
    %v1036 = vpack.c.b16 %v812, %v808
    %v1037 = vpack.c.b16 %v813, %v809
    %v1038 = vpack.c.b16 %v814, %v810
    %v1039 = vpack.c.b16 %v819, %v815
    %v1040 = vpack.c.b16 %v820, %v816
    %v1041 = vpack.c.b16 %v821, %v817
    %v1042 = vpack.c.b16 %v822, %v818
    %v1043 = vpack.c.b16 %v827, %v823
    %v1044 = vpack.c.b16 %v828, %v824
    %v1045 = vpack.c.b16 %v829, %v825
    %v1046 = vpack.c.b16 %v830, %v826
    %v1047 = vpack.c.b16 %v835, %v831
    %v1048 = vpack.c.b16 %v836, %v832
    %v1049 = vpack.c.b16 %v837, %v833
    %v1050 = vpack.c.b16 %v838, %v834
    %v1051 = vpack.c.b16 %v843, %v839
    %v1052 = vpack.c.b16 %v844, %v840
    %v1053 = vpack.c.b16 %v845, %v841
    %v1054 = vpack.c.b16 %v846, %v842
    %v1055 = vpack.c.b16 %v851, %v847
    %v1056 = vpack.c.b16 %v852, %v848
    %v1057 = vpack.c.b16 %v853, %v849
    %v1058 = vpack.c.b16 %v854, %v850
    %v1059 = vpack.c.b16 %v859, %v855
    %v1060 = vpack.c.b16 %v860, %v856
    %v1061 = vpack.c.b16 %v861, %v857
    %v1062 = vpack.c.b16 %v862, %v858
    %v1063 = vpack.c.b16 %v867, %v863
    %v1064 = vpack.c.b16 %v868, %v864
    %v1065 = vpack.c.b16 %v869, %v865
    %v1066 = vpack.c.b16 %v870, %v866
    %vm1263 = vcmask 130048
    %v1265 = vsel %vm1263, %v276, 0
    %1267 = vmatpush.bf16.msra.mxu0 %v899
    %1268 = vmatpush.bf16.msra.mxu0 %v895
    %1269 = vmatpush.bf16.msra.mxu0 %v891
    %1270 = vmatpush.bf16.msra.mxu0 %v887
    %1271 = vmatpush.bf16.msra.mxu0 %v883
    %1272 = vmatpush.bf16.msra.mxu0 %v879
    %1273 = vmatpush.bf16.msra.mxu0 %v875
    %1274 = vmatpush.bf16.msra.mxu0 %v871
    %1275 = vmatmul.bf16.gmra.mxu0 %v270
    %v1276 = vpop.f32.mrf.mxu0
    %v1277 = vadd.f32 %v240, %v1276
    %v1278 = vpop.f32.mrf.mxu0
    %v1279 = vadd.f32 %v240, %v1278
    %1280 = vdwg.mxu0
    %1281 = vmatpush.bf16.msra.mxu0 %v931
    %1282 = vmatpush.bf16.msra.mxu0 %v927
    %1283 = vmatpush.bf16.msra.mxu0 %v923
    %1284 = vmatpush.bf16.msra.mxu0 %v919
    %1285 = vmatpush.bf16.msra.mxu0 %v915
    %1286 = vmatpush.bf16.msra.mxu0 %v911
    %1287 = vmatpush.bf16.msra.mxu0 %v907
    %1288 = vmatpush.bf16.msra.mxu0 %v903
    %1289 = vmatmul.bf16.gmra.mxu0 %v271
    %v1290 = vpop.f32.mrf.mxu0
    %v1291 = vadd.f32 %v1277, %v1290
    %v1292 = vpop.f32.mrf.mxu0
    %v1293 = vadd.f32 %v1279, %v1292
    %1294 = vdwg.mxu0
    %1295 = vmatpush.bf16.msra.mxu0 %v963
    %1296 = vmatpush.bf16.msra.mxu0 %v959
    %1297 = vmatpush.bf16.msra.mxu0 %v955
    %1298 = vmatpush.bf16.msra.mxu0 %v951
    %1299 = vmatpush.bf16.msra.mxu0 %v947
    %1300 = vmatpush.bf16.msra.mxu0 %v943
    %1301 = vmatpush.bf16.msra.mxu0 %v939
    %1302 = vmatpush.bf16.msra.mxu0 %v935
    %1303 = vmatmul.bf16.gmra.mxu0 %v272
    %v1304 = vpop.f32.mrf.mxu0
    %v1305 = vadd.f32 %v1291, %v1304
    %v1306 = vpop.f32.mrf.mxu0
    %v1307 = vadd.f32 %v1293, %v1306
    %1308 = vdwg.mxu0
    %1309 = vmatpush.bf16.msra.mxu0 %v995
    %1310 = vmatpush.bf16.msra.mxu0 %v991
    %1311 = vmatpush.bf16.msra.mxu0 %v987
    %1312 = vmatpush.bf16.msra.mxu0 %v983
    %1313 = vmatpush.bf16.msra.mxu0 %v979
    %1314 = vmatpush.bf16.msra.mxu0 %v975
    %1315 = vmatpush.bf16.msra.mxu0 %v971
    %1316 = vmatpush.bf16.msra.mxu0 %v967
    %1317 = vmatmul.bf16.gmra.mxu0 %v273
    %v1318 = vpop.f32.mrf.mxu0
    %v1319 = vadd.f32 %v1305, %v1318
    %v1320 = vpop.f32.mrf.mxu0
    %v1321 = vadd.f32 %v1307, %v1320
    %1322 = vdwg.mxu0
    %1323 = vmatpush.bf16.msra.mxu0 %v1027
    %1324 = vmatpush.bf16.msra.mxu0 %v1023
    %1325 = vmatpush.bf16.msra.mxu0 %v1019
    %1326 = vmatpush.bf16.msra.mxu0 %v1015
    %1327 = vmatpush.bf16.msra.mxu0 %v1011
    %1328 = vmatpush.bf16.msra.mxu0 %v1007
    %1329 = vmatpush.bf16.msra.mxu0 %v1003
    %1330 = vmatpush.bf16.msra.mxu0 %v999
    %1331 = vmatmul.bf16.gmra.mxu0 %v274
    %v1332 = vpop.f32.mrf.mxu0
    %v1333 = vadd.f32 %v1319, %v1332
    %v1334 = vpop.f32.mrf.mxu0
    %v1335 = vadd.f32 %v1321, %v1334
    %1336 = vdwg.mxu0
    %1337 = vmatpush.bf16.msra.mxu0 %v1059
    %1338 = vmatpush.bf16.msra.mxu0 %v1055
    %1339 = vmatpush.bf16.msra.mxu0 %v1051
    %1340 = vmatpush.bf16.msra.mxu0 %v1047
    %1341 = vmatpush.bf16.msra.mxu0 %v1043
    %1342 = vmatpush.bf16.msra.mxu0 %v1039
    %1343 = vmatpush.bf16.msra.mxu0 %v1035
    %1344 = vmatpush.bf16.msra.mxu0 %v1031
    %1345 = vmatmul.bf16.gmra.mxu0 %v275
    %v1346 = vpop.f32.mrf.mxu0
    %v1347 = vadd.f32 %v1333, %v1346
    %v1348 = vpop.f32.mrf.mxu0
    %v1349 = vadd.f32 %v1335, %v1348
    %1350 = vdwg.mxu0
    %1351 = vmatpush.bf16.msra.mxu0 0
    %1352 = vmatpush.bf16.msra.mxu0 0
    %1353 = vmatpush.bf16.msra.mxu0 0
    %1354 = vmatpush.bf16.msra.mxu0 0
    %1355 = vmatpush.bf16.msra.mxu0 0
    %1356 = vmatpush.bf16.msra.mxu0 0
    %1357 = vmatpush.bf16.msra.mxu0 0
    %1358 = vmatpush.bf16.msra.mxu0 %v1063
    %1359 = vmatmul.bf16.gmra.mxu0 %v1265
    %v1360 = vpop.f32.mrf.mxu0
    %v1361 = vadd.f32 %v1347, %v1360
    %v1362 = vpop.f32.mrf.mxu0
    %v1363 = vadd.f32 %v1349, %v1362
    %1364 = vdwg.mxu0
    %1365 = vmatpush.bf16.msra.mxu0 %v900
    %1366 = vmatpush.bf16.msra.mxu0 %v896
    %1367 = vmatpush.bf16.msra.mxu0 %v892
    %1368 = vmatpush.bf16.msra.mxu0 %v888
    %1369 = vmatpush.bf16.msra.mxu0 %v884
    %1370 = vmatpush.bf16.msra.mxu0 %v880
    %1371 = vmatpush.bf16.msra.mxu0 %v876
    %1372 = vmatpush.bf16.msra.mxu0 %v872
    %1373 = vmatmul.bf16.gmra.mxu0 %v270
    %v1374 = vpop.f32.mrf.mxu0
    %v1375 = vadd.f32 %v241, %v1374
    %v1376 = vpop.f32.mrf.mxu0
    %v1377 = vadd.f32 %v241, %v1376
    %1378 = vdwg.mxu0
    %1379 = vmatpush.bf16.msra.mxu0 %v932
    %1380 = vmatpush.bf16.msra.mxu0 %v928
    %1381 = vmatpush.bf16.msra.mxu0 %v924
    %1382 = vmatpush.bf16.msra.mxu0 %v920
    %1383 = vmatpush.bf16.msra.mxu0 %v916
    %1384 = vmatpush.bf16.msra.mxu0 %v912
    %1385 = vmatpush.bf16.msra.mxu0 %v908
    %1386 = vmatpush.bf16.msra.mxu0 %v904
    %1387 = vmatmul.bf16.gmra.mxu0 %v271
    %v1388 = vpop.f32.mrf.mxu0
    %v1389 = vadd.f32 %v1375, %v1388
    %v1390 = vpop.f32.mrf.mxu0
    %v1391 = vadd.f32 %v1377, %v1390
    %1392 = vdwg.mxu0
    %1393 = vmatpush.bf16.msra.mxu0 %v964
    %1394 = vmatpush.bf16.msra.mxu0 %v960
    %1395 = vmatpush.bf16.msra.mxu0 %v956
    %1396 = vmatpush.bf16.msra.mxu0 %v952
    %1397 = vmatpush.bf16.msra.mxu0 %v948
    %1398 = vmatpush.bf16.msra.mxu0 %v944
    %1399 = vmatpush.bf16.msra.mxu0 %v940
    %1400 = vmatpush.bf16.msra.mxu0 %v936
    %1401 = vmatmul.bf16.gmra.mxu0 %v272
    %v1402 = vpop.f32.mrf.mxu0
    %v1403 = vadd.f32 %v1389, %v1402
    %v1404 = vpop.f32.mrf.mxu0
    %v1405 = vadd.f32 %v1391, %v1404
    %1406 = vdwg.mxu0
    %1407 = vmatpush.bf16.msra.mxu0 %v996
    %1408 = vmatpush.bf16.msra.mxu0 %v992
    %1409 = vmatpush.bf16.msra.mxu0 %v988
    %1410 = vmatpush.bf16.msra.mxu0 %v984
    %1411 = vmatpush.bf16.msra.mxu0 %v980
    %1412 = vmatpush.bf16.msra.mxu0 %v976
    %1413 = vmatpush.bf16.msra.mxu0 %v972
    %1414 = vmatpush.bf16.msra.mxu0 %v968
    %1415 = vmatmul.bf16.gmra.mxu0 %v273
    %v1416 = vpop.f32.mrf.mxu0
    %v1417 = vadd.f32 %v1403, %v1416
    %v1418 = vpop.f32.mrf.mxu0
    %v1419 = vadd.f32 %v1405, %v1418
    %1420 = vdwg.mxu0
    %1421 = vmatpush.bf16.msra.mxu0 %v1028
    %1422 = vmatpush.bf16.msra.mxu0 %v1024
    %1423 = vmatpush.bf16.msra.mxu0 %v1020
    %1424 = vmatpush.bf16.msra.mxu0 %v1016
    %1425 = vmatpush.bf16.msra.mxu0 %v1012
    %1426 = vmatpush.bf16.msra.mxu0 %v1008
    %1427 = vmatpush.bf16.msra.mxu0 %v1004
    %1428 = vmatpush.bf16.msra.mxu0 %v1000
    %1429 = vmatmul.bf16.gmra.mxu0 %v274
    %v1430 = vpop.f32.mrf.mxu0
    %v1431 = vadd.f32 %v1417, %v1430
    %v1432 = vpop.f32.mrf.mxu0
    %v1433 = vadd.f32 %v1419, %v1432
    %1434 = vdwg.mxu0
    %1435 = vmatpush.bf16.msra.mxu0 %v1060
    %1436 = vmatpush.bf16.msra.mxu0 %v1056
    %1437 = vmatpush.bf16.msra.mxu0 %v1052
    %1438 = vmatpush.bf16.msra.mxu0 %v1048
    %1439 = vmatpush.bf16.msra.mxu0 %v1044
    %1440 = vmatpush.bf16.msra.mxu0 %v1040
    %1441 = vmatpush.bf16.msra.mxu0 %v1036
    %1442 = vmatpush.bf16.msra.mxu0 %v1032
    %1443 = vmatmul.bf16.gmra.mxu0 %v275
    %v1444 = vpop.f32.mrf.mxu0
    %v1445 = vadd.f32 %v1431, %v1444
    %v1446 = vpop.f32.mrf.mxu0
    %v1447 = vadd.f32 %v1433, %v1446
    %1448 = vdwg.mxu0
    %1449 = vmatpush.bf16.msra.mxu0 0
    %1450 = vmatpush.bf16.msra.mxu0 0
    %1451 = vmatpush.bf16.msra.mxu0 0
    %1452 = vmatpush.bf16.msra.mxu0 0
    %1453 = vmatpush.bf16.msra.mxu0 0
    %1454 = vmatpush.bf16.msra.mxu0 0
    %1455 = vmatpush.bf16.msra.mxu0 0
    %1456 = vmatpush.bf16.msra.mxu0 %v1064
    %1457 = vmatmul.bf16.gmra.mxu0 %v1265
    %v1458 = vpop.f32.mrf.mxu0
    %v1459 = vadd.f32 %v1445, %v1458
    %v1460 = vpop.f32.mrf.mxu0
    %v1461 = vadd.f32 %v1447, %v1460
    %1462 = vdwg.mxu0
    %1463 = vmatpush.bf16.msra.mxu0 %v901
    %1464 = vmatpush.bf16.msra.mxu0 %v897
    %1465 = vmatpush.bf16.msra.mxu0 %v893
    %1466 = vmatpush.bf16.msra.mxu0 %v889
    %1467 = vmatpush.bf16.msra.mxu0 %v885
    %1468 = vmatpush.bf16.msra.mxu0 %v881
    %1469 = vmatpush.bf16.msra.mxu0 %v877
    %1470 = vmatpush.bf16.msra.mxu0 %v873
    %1471 = vmatmul.bf16.gmra.mxu0 %v270
    %v1472 = vpop.f32.mrf.mxu0
    %v1473 = vadd.f32 %v242, %v1472
    %v1474 = vpop.f32.mrf.mxu0
    %v1475 = vadd.f32 %v242, %v1474
    %1476 = vdwg.mxu0
    %1477 = vmatpush.bf16.msra.mxu0 %v933
    %1478 = vmatpush.bf16.msra.mxu0 %v929
    %1479 = vmatpush.bf16.msra.mxu0 %v925
    %1480 = vmatpush.bf16.msra.mxu0 %v921
    %1481 = vmatpush.bf16.msra.mxu0 %v917
    %1482 = vmatpush.bf16.msra.mxu0 %v913
    %1483 = vmatpush.bf16.msra.mxu0 %v909
    %1484 = vmatpush.bf16.msra.mxu0 %v905
    %1485 = vmatmul.bf16.gmra.mxu0 %v271
    %v1486 = vpop.f32.mrf.mxu0
    %v1487 = vadd.f32 %v1473, %v1486
    %v1488 = vpop.f32.mrf.mxu0
    %v1489 = vadd.f32 %v1475, %v1488
    %1490 = vdwg.mxu0
    %1491 = vmatpush.bf16.msra.mxu0 %v965
    %1492 = vmatpush.bf16.msra.mxu0 %v961
    %1493 = vmatpush.bf16.msra.mxu0 %v957
    %1494 = vmatpush.bf16.msra.mxu0 %v953
    %1495 = vmatpush.bf16.msra.mxu0 %v949
    %1496 = vmatpush.bf16.msra.mxu0 %v945
    %1497 = vmatpush.bf16.msra.mxu0 %v941
    %1498 = vmatpush.bf16.msra.mxu0 %v937
    %1499 = vmatmul.bf16.gmra.mxu0 %v272
    %v1500 = vpop.f32.mrf.mxu0
    %v1501 = vadd.f32 %v1487, %v1500
    %v1502 = vpop.f32.mrf.mxu0
    %v1503 = vadd.f32 %v1489, %v1502
    %1504 = vdwg.mxu0
    %1505 = vmatpush.bf16.msra.mxu0 %v997
    %1506 = vmatpush.bf16.msra.mxu0 %v993
    %1507 = vmatpush.bf16.msra.mxu0 %v989
    %1508 = vmatpush.bf16.msra.mxu0 %v985
    %1509 = vmatpush.bf16.msra.mxu0 %v981
    %1510 = vmatpush.bf16.msra.mxu0 %v977
    %1511 = vmatpush.bf16.msra.mxu0 %v973
    %1512 = vmatpush.bf16.msra.mxu0 %v969
    %1513 = vmatmul.bf16.gmra.mxu0 %v273
    %v1514 = vpop.f32.mrf.mxu0
    %v1515 = vadd.f32 %v1501, %v1514
    %v1516 = vpop.f32.mrf.mxu0
    %v1517 = vadd.f32 %v1503, %v1516
    %1518 = vdwg.mxu0
    %1519 = vmatpush.bf16.msra.mxu0 %v1029
    %1520 = vmatpush.bf16.msra.mxu0 %v1025
    %1521 = vmatpush.bf16.msra.mxu0 %v1021
    %1522 = vmatpush.bf16.msra.mxu0 %v1017
    %1523 = vmatpush.bf16.msra.mxu0 %v1013
    %1524 = vmatpush.bf16.msra.mxu0 %v1009
    %1525 = vmatpush.bf16.msra.mxu0 %v1005
    %1526 = vmatpush.bf16.msra.mxu0 %v1001
    %1527 = vmatmul.bf16.gmra.mxu0 %v274
    %v1528 = vpop.f32.mrf.mxu0
    %v1529 = vadd.f32 %v1515, %v1528
    %v1530 = vpop.f32.mrf.mxu0
    %v1531 = vadd.f32 %v1517, %v1530
    %1532 = vdwg.mxu0
    %1533 = vmatpush.bf16.msra.mxu0 %v1061
    %1534 = vmatpush.bf16.msra.mxu0 %v1057
    %1535 = vmatpush.bf16.msra.mxu0 %v1053
    %1536 = vmatpush.bf16.msra.mxu0 %v1049
    %1537 = vmatpush.bf16.msra.mxu0 %v1045
    %1538 = vmatpush.bf16.msra.mxu0 %v1041
    %1539 = vmatpush.bf16.msra.mxu0 %v1037
    %1540 = vmatpush.bf16.msra.mxu0 %v1033
    %1541 = vmatmul.bf16.gmra.mxu0 %v275
    %v1542 = vpop.f32.mrf.mxu0
    %v1543 = vadd.f32 %v1529, %v1542
    %v1544 = vpop.f32.mrf.mxu0
    %v1545 = vadd.f32 %v1531, %v1544
    %1546 = vdwg.mxu0
    %1547 = vmatpush.bf16.msra.mxu0 0
    %1548 = vmatpush.bf16.msra.mxu0 0
    %1549 = vmatpush.bf16.msra.mxu0 0
    %1550 = vmatpush.bf16.msra.mxu0 0
    %1551 = vmatpush.bf16.msra.mxu0 0
    %1552 = vmatpush.bf16.msra.mxu0 0
    %1553 = vmatpush.bf16.msra.mxu0 0
    %1554 = vmatpush.bf16.msra.mxu0 %v1065
    %1555 = vmatmul.bf16.gmra.mxu0 %v1265
    %v1556 = vpop.f32.mrf.mxu0
    %v1557 = vadd.f32 %v1543, %v1556
    %v1558 = vpop.f32.mrf.mxu0
    %v1559 = vadd.f32 %v1545, %v1558
    %1560 = vdwg.mxu0
    %1561 = vmatpush.bf16.msra.mxu0 %v902
    %1562 = vmatpush.bf16.msra.mxu0 %v898
    %1563 = vmatpush.bf16.msra.mxu0 %v894
    %1564 = vmatpush.bf16.msra.mxu0 %v890
    %1565 = vmatpush.bf16.msra.mxu0 %v886
    %1566 = vmatpush.bf16.msra.mxu0 %v882
    %1567 = vmatpush.bf16.msra.mxu0 %v878
    %1568 = vmatpush.bf16.msra.mxu0 %v874
    %1569 = vmatmul.bf16.gmra.mxu0 %v270
    %v1570 = vpop.f32.mrf.mxu0
    %v1571 = vadd.f32 %v243, %v1570
    %v1572 = vpop.f32.mrf.mxu0
    %v1573 = vadd.f32 %v243, %v1572
    %1574 = vdwg.mxu0
    %1575 = vmatpush.bf16.msra.mxu0 %v934
    %1576 = vmatpush.bf16.msra.mxu0 %v930
    %1577 = vmatpush.bf16.msra.mxu0 %v926
    %1578 = vmatpush.bf16.msra.mxu0 %v922
    %1579 = vmatpush.bf16.msra.mxu0 %v918
    %1580 = vmatpush.bf16.msra.mxu0 %v914
    %1581 = vmatpush.bf16.msra.mxu0 %v910
    %1582 = vmatpush.bf16.msra.mxu0 %v906
    %1583 = vmatmul.bf16.gmra.mxu0 %v271
    %v1584 = vpop.f32.mrf.mxu0
    %v1585 = vadd.f32 %v1571, %v1584
    %v1586 = vpop.f32.mrf.mxu0
    %v1587 = vadd.f32 %v1573, %v1586
    %1588 = vdwg.mxu0
    %1589 = vmatpush.bf16.msra.mxu0 %v966
    %1590 = vmatpush.bf16.msra.mxu0 %v962
    %1591 = vmatpush.bf16.msra.mxu0 %v958
    %1592 = vmatpush.bf16.msra.mxu0 %v954
    %1593 = vmatpush.bf16.msra.mxu0 %v950
    %1594 = vmatpush.bf16.msra.mxu0 %v946
    %1595 = vmatpush.bf16.msra.mxu0 %v942
    %1596 = vmatpush.bf16.msra.mxu0 %v938
    %1597 = vmatmul.bf16.gmra.mxu0 %v272
    %v1598 = vpop.f32.mrf.mxu0
    %v1599 = vadd.f32 %v1585, %v1598
    %v1600 = vpop.f32.mrf.mxu0
    %v1601 = vadd.f32 %v1587, %v1600
    %1602 = vdwg.mxu0
    %1603 = vmatpush.bf16.msra.mxu0 %v998
    %1604 = vmatpush.bf16.msra.mxu0 %v994
    %1605 = vmatpush.bf16.msra.mxu0 %v990
    %1606 = vmatpush.bf16.msra.mxu0 %v986
    %1607 = vmatpush.bf16.msra.mxu0 %v982
    %1608 = vmatpush.bf16.msra.mxu0 %v978
    %1609 = vmatpush.bf16.msra.mxu0 %v974
    %1610 = vmatpush.bf16.msra.mxu0 %v970
    %1611 = vmatmul.bf16.gmra.mxu0 %v273
    %v1612 = vpop.f32.mrf.mxu0
    %v1613 = vadd.f32 %v1599, %v1612
    %v1614 = vpop.f32.mrf.mxu0
    %v1615 = vadd.f32 %v1601, %v1614
    %1616 = vdwg.mxu0
    %1617 = vmatpush.bf16.msra.mxu0 %v1030
    %1618 = vmatpush.bf16.msra.mxu0 %v1026
    %1619 = vmatpush.bf16.msra.mxu0 %v1022
    %1620 = vmatpush.bf16.msra.mxu0 %v1018
    %1621 = vmatpush.bf16.msra.mxu0 %v1014
    %1622 = vmatpush.bf16.msra.mxu0 %v1010
    %1623 = vmatpush.bf16.msra.mxu0 %v1006
    %1624 = vmatpush.bf16.msra.mxu0 %v1002
    %1625 = vmatmul.bf16.gmra.mxu0 %v274
    %v1626 = vpop.f32.mrf.mxu0
    %v1627 = vadd.f32 %v1613, %v1626
    %v1628 = vpop.f32.mrf.mxu0
    %v1629 = vadd.f32 %v1615, %v1628
    %1630 = vdwg.mxu0
    %1631 = vmatpush.bf16.msra.mxu0 %v1062
    %1632 = vmatpush.bf16.msra.mxu0 %v1058
    %1633 = vmatpush.bf16.msra.mxu0 %v1054
    %1634 = vmatpush.bf16.msra.mxu0 %v1050
    %1635 = vmatpush.bf16.msra.mxu0 %v1046
    %1636 = vmatpush.bf16.msra.mxu0 %v1042
    %1637 = vmatpush.bf16.msra.mxu0 %v1038
    %1638 = vmatpush.bf16.msra.mxu0 %v1034
    %1639 = vmatmul.bf16.gmra.mxu0 %v275
    %v1640 = vpop.f32.mrf.mxu0
    %v1641 = vadd.f32 %v1627, %v1640
    %v1642 = vpop.f32.mrf.mxu0
    %v1643 = vadd.f32 %v1629, %v1642
    %1644 = vdwg.mxu0
    %1645 = vmatpush.bf16.msra.mxu0 0
    %1646 = vmatpush.bf16.msra.mxu0 0
    %1647 = vmatpush.bf16.msra.mxu0 0
    %1648 = vmatpush.bf16.msra.mxu0 0
    %1649 = vmatpush.bf16.msra.mxu0 0
    %1650 = vmatpush.bf16.msra.mxu0 0
    %1651 = vmatpush.bf16.msra.mxu0 0
    %1652 = vmatpush.bf16.msra.mxu0 %v1066
    %1653 = vmatmul.bf16.gmra.mxu0 %v1265
    %v1654 = vpop.f32.mrf.mxu0
    %v1655 = vadd.f32 %v1641, %v1654
    %v1656 = vpop.f32.mrf.mxu0
    %v1657 = vadd.f32 %v1643, %v1656
    %1658 = vdwg.mxu0
    %v1659 = vpack.c.bf16 %v1363, %v1361
    %v1660 = vpack.c.bf16 %v1461, %v1459
    %v1661 = vpack.c.bf16 %v1559, %v1557
    %v1662 = vpack.c.bf16 %v1657, %v1655
    %v1663 = vld [vmem:[%s3] sm:$0xff]
    %v1664 = vld [vmem:[%s3 + $0x8] sm:$0xff]
    %v1665 = vld [vmem:[%s3 + $0x10] sm:$0xff]
    %v1666 = vld [vmem:[%s3 + $0x18] sm:$0xff]
    %v1667 = vld [vmem:[%s3 + $0x20] sm:$0xff]
    %v1668 = vld [vmem:[%s3 + $0x28] sm:$0xff]
    %v1669 = vld [vmem:[%s3 + $0x30] sm:$0xff]
    %v1670 = vld [vmem:[%s3 + $0x38] sm:$0xff]
    %v1671 = vld [vmem:[%s3 + $0x40] sm:$0xff]
    %v1672 = vld [vmem:[%s3 + $0x48] sm:$0xff]
    %v1673 = vld [vmem:[%s3 + $0x50] sm:$0xff]
    %v1674 = vld [vmem:[%s3 + $0x58] sm:$0xff]
    %v1675 = vld [vmem:[%s3 + $0x60] sm:$0xff]
    %v1676 = vld [vmem:[%s3 + $0x68] sm:$0xff]
    %v1677 = vld [vmem:[%s3 + $0x70] sm:$0xff]
    %v1678 = vld [vmem:[%s3 + $0x78] sm:$0xff]
    %v1679 = vld [vmem:[%s3 + $0x80] sm:$0xff]
    %v1680 = vld [vmem:[%s3 + $0x88] sm:$0xff]
    %v1681 = vld [vmem:[%s3 + $0x90] sm:$0xff]
    %v1682 = vld [vmem:[%s3 + $0x98] sm:$0xff]
    %v1683 = vld [vmem:[%s3 + $0xa0] sm:$0xff]
    %v1684 = vld [vmem:[%s3 + $0xa8] sm:$0xff]
    %v1685 = vld [vmem:[%s3 + $0xb0] sm:$0xff]
    %v1686 = vld [vmem:[%s3 + $0xb8] sm:$0xff]
    %v1687 = vld [vmem:[%s3 + $0xc0] sm:$0xff]
    %v1688 = vld [vmem:[%s3 + $0xc8] sm:$0xff]
    %v1689 = vld [vmem:[%s3 + $0xd0] sm:$0xff]
    %v1690 = vld [vmem:[%s3 + $0xd8] sm:$0xff]
    %v1691 = vld [vmem:[%s3 + $0xe0] sm:$0xff]
    %v1692 = vld [vmem:[%s3 + $0xe8] sm:$0xff]
    %v1693 = vld [vmem:[%s3 + $0xf0] sm:$0xff]
    %v1694 = vld [vmem:[%s3 + $0xf8] sm:$0xff]
    %v1695 = vld [vmem:[%s3 + $0x100] sm:$0xff]
    %v1696 = vld [vmem:[%s3 + $0x108] sm:$0xff]
    %v1697 = vld [vmem:[%s3 + $0x110] sm:$0xff]
    %v1698 = vld [vmem:[%s3 + $0x118] sm:$0xff]
    %v1699 = vld [vmem:[%s3 + $0x120] sm:$0xff]
    %v1700 = vld [vmem:[%s3 + $0x128] sm:$0xff]
    %v1701 = vld [vmem:[%s3 + $0x130] sm:$0xff]
    %v1702 = vld [vmem:[%s3 + $0x138] sm:$0xff]
    %v1703 = vld [vmem:[%s3 + $0x140] sm:$0xff]
    %v1704 = vld [vmem:[%s3 + $0x148] sm:$0xff]
    %v1705 = vld [vmem:[%s3 + $0x150] sm:$0xff]
    %v1706 = vld [vmem:[%s3 + $0x158] sm:$0xff]
    %v1707 = vld [vmem:[%s3 + $0x160] sm:$0xff]
    %v1708 = vld [vmem:[%s3 + $0x168] sm:$0xff]
    %v1709 = vld [vmem:[%s3 + $0x170] sm:$0xff]
    %v1710 = vld [vmem:[%s3 + $0x178] sm:$0xff]
    %v1711 = vld [vmem:[%s3 + $0x180] sm:$0xff]
    %v1712 = vld [vmem:[%s3 + $0x188] sm:$0xff]
    %v1713 = vld [vmem:[%s3 + $0x190] sm:$0xff]
    %v1714 = vld [vmem:[%s3 + $0x198] sm:$0xff]
    %v1715 = vld [vmem:[%s3 + $0x1a0] sm:$0xff]
    %v1716 = vld [vmem:[%s3 + $0x1a8] sm:$0xff]
    %v1717 = vld [vmem:[%s3 + $0x1b0] sm:$0xff]
    %v1718 = vld [vmem:[%s3 + $0x1b8] sm:$0xff]
    %v1719 = vld [vmem:[%s3 + $0x1c0] sm:$0xff]
    %v1720 = vld [vmem:[%s3 + $0x1c8] sm:$0xff]
    %v1721 = vld [vmem:[%s3 + $0x1d0] sm:$0xff]
    %v1722 = vld [vmem:[%s3 + $0x1d8] sm:$0xff]
    %v1723 = vld [vmem:[%s3 + $0x1e0] sm:$0xff]
    %v1724 = vld [vmem:[%s3 + $0x1e8] sm:$0xff]
    %v1725 = vld [vmem:[%s3 + $0x1f0] sm:$0xff]
    %v1726 = vld [vmem:[%s3 + $0x1f8] sm:$0xff]
    %v1727 = vld [vmem:[%s3 + $0x200] sm:$0xff]
    %v1728 = vld [vmem:[%s3 + $0x208] sm:$0xff]
    %v1729 = vld [vmem:[%s3 + $0x210] sm:$0xff]
    %v1730 = vld [vmem:[%s3 + $0x218] sm:$0xff]
    %v1731 = vld [vmem:[%s3 + $0x220] sm:$0xff]
    %v1732 = vld [vmem:[%s3 + $0x228] sm:$0xff]
    %v1733 = vld [vmem:[%s3 + $0x230] sm:$0xff]
    %v1734 = vld [vmem:[%s3 + $0x238] sm:$0xff]
    %v1735 = vld [vmem:[%s3 + $0x240] sm:$0xff]
    %v1736 = vld [vmem:[%s3 + $0x248] sm:$0xff]
    %v1737 = vld [vmem:[%s3 + $0x250] sm:$0xff]
    %v1738 = vld [vmem:[%s3 + $0x258] sm:$0xff]
    %v1739 = vld [vmem:[%s3 + $0x260] sm:$0xff]
    %v1740 = vld [vmem:[%s3 + $0x268] sm:$0xff]
    %v1741 = vld [vmem:[%s3 + $0x270] sm:$0xff]
    %v1742 = vld [vmem:[%s3 + $0x278] sm:$0xff]
    %v1743 = vld [vmem:[%s3 + $0x280] sm:$0xff]
    %v1744 = vld [vmem:[%s3 + $0x288] sm:$0xff]
    %v1745 = vld [vmem:[%s3 + $0x290] sm:$0xff]
    %v1746 = vld [vmem:[%s3 + $0x298] sm:$0xff]
    %v1747 = vld [vmem:[%s3 + $0x2a0] sm:$0xff]
    %v1748 = vld [vmem:[%s3 + $0x2a8] sm:$0xff]
    %v1749 = vld [vmem:[%s3 + $0x2b0] sm:$0xff]
    %v1750 = vld [vmem:[%s3 + $0x2b8] sm:$0xff]
    %v1751 = vld [vmem:[%s3 + $0x2c0] sm:$0xff]
    %v1752 = vld [vmem:[%s3 + $0x2c8] sm:$0xff]
    %v1753 = vld [vmem:[%s3 + $0x2d0] sm:$0xff]
    %v1754 = vld [vmem:[%s3 + $0x2d8] sm:$0xff]
    %v1755 = vld [vmem:[%s3 + $0x2e0] sm:$0xff]
    %v1756 = vld [vmem:[%s3 + $0x2e8] sm:$0xff]
    %v1757 = vld [vmem:[%s3 + $0x2f0] sm:$0xff]
    %v1758 = vld [vmem:[%s3 + $0x2f8] sm:$0xff]
    %v1759 = vld [vmem:[%s3 + $0x300] sm:$0xff]
    %v1760 = vld [vmem:[%s3 + $0x308] sm:$0xff]
    %v1761 = vld [vmem:[%s3 + $0x310] sm:$0xff]
    %v1762 = vld [vmem:[%s3 + $0x318] sm:$0xff]
    %v1763 = vld [vmem:[%s3 + $0x320] sm:$0xff]
    %v1764 = vld [vmem:[%s3 + $0x328] sm:$0xff]
    %v1765 = vld [vmem:[%s3 + $0x330] sm:$0xff]
    %v1766 = vld [vmem:[%s3 + $0x338] sm:$0xff]
    %v1767 = vld [vmem:[%s3 + $0x340] sm:$0xff]
    %v1768 = vld [vmem:[%s3 + $0x348] sm:$0xff]
    %v1769 = vld [vmem:[%s3 + $0x350] sm:$0xff]
    %v1770 = vld [vmem:[%s3 + $0x358] sm:$0xff]
    %v1771 = vld [vmem:[%s3 + $0x360] sm:$0xff]
    %v1772 = vld [vmem:[%s3 + $0x368] sm:$0xff]
    %v1773 = vld [vmem:[%s3 + $0x370] sm:$0xff]
    %v1774 = vld [vmem:[%s3 + $0x378] sm:$0xff]
    %v1775 = vld [vmem:[%s3 + $0x380] sm:$0xff]
    %v1776 = vld [vmem:[%s3 + $0x388] sm:$0xff]
    %v1777 = vld [vmem:[%s3 + $0x390] sm:$0xff]
    %v1778 = vld [vmem:[%s3 + $0x398] sm:$0xff]
    %v1779 = vld [vmem:[%s3 + $0x3a0] sm:$0xff]
    %v1780 = vld [vmem:[%s3 + $0x3a8] sm:$0xff]
    %v1781 = vld [vmem:[%s3 + $0x3b0] sm:$0xff]
    %v1782 = vld [vmem:[%s3 + $0x3b8] sm:$0xff]
    %v1783 = vld [vmem:[%s3 + $0x3c0] sm:$0xff]
    %v1784 = vld [vmem:[%s3 + $0x3c8] sm:$0xff]
    %v1785 = vld [vmem:[%s3 + $0x3d0] sm:$0xff]
    %v1786 = vld [vmem:[%s3 + $0x3d8] sm:$0xff]
    %v1787 = vld [vmem:[%s3 + $0x3e0] sm:$0xff]
    %v1788 = vld [vmem:[%s3 + $0x3e8] sm:$0xff]
    %v1789 = vld [vmem:[%s3 + $0x3f0] sm:$0xff]
    %v1790 = vld [vmem:[%s3 + $0x3f8] sm:$0xff]
    %v1791 = vld [vmem:[%s4] sm:$0xf]
    %v1793 = vperm.slane %v1791, 0
    %v1794 = vperm.slane %v1791, 1
    %v1795 = vperm.slane %v1791, 2
    %v1796 = vperm.slane %v1791, 3
    %v1929 = vunpack.c.l.b16 %v1663
    %v1930 = vunpack.c.h.b16 %v1663
    %v1931 = vunpack.c.l.b16 %v1664
    %v1932 = vunpack.c.h.b16 %v1664
    %v1933 = vunpack.c.l.b16 %v1665
    %v1934 = vunpack.c.h.b16 %v1665
    %v1935 = vunpack.c.l.b16 %v1666
    %v1936 = vunpack.c.h.b16 %v1666
    %v1937 = vunpack.c.l.b16 %v1667
    %v1938 = vunpack.c.h.b16 %v1667
    %v1939 = vunpack.c.l.b16 %v1668
    %v1940 = vunpack.c.h.b16 %v1668
    %v1941 = vunpack.c.l.b16 %v1669
    %v1942 = vunpack.c.h.b16 %v1669
    %v1943 = vunpack.c.l.b16 %v1670
    %v1944 = vunpack.c.h.b16 %v1670
    %v1945 = vunpack.c.l.b16 %v1671
    %v1946 = vunpack.c.h.b16 %v1671
    %v1947 = vunpack.c.l.b16 %v1672
    %v1948 = vunpack.c.h.b16 %v1672
    %v1949 = vunpack.c.l.b16 %v1673
    %v1950 = vunpack.c.h.b16 %v1673
    %v1951 = vunpack.c.l.b16 %v1674
    %v1952 = vunpack.c.h.b16 %v1674
    %v1953 = vunpack.c.l.b16 %v1675
    %v1954 = vunpack.c.h.b16 %v1675
    %v1955 = vunpack.c.l.b16 %v1676
    %v1956 = vunpack.c.h.b16 %v1676
    %v1957 = vunpack.c.l.b16 %v1677
    %v1958 = vunpack.c.h.b16 %v1677
    %v1959 = vunpack.c.l.b16 %v1678
    %v1960 = vunpack.c.h.b16 %v1678
    %v1961 = vunpack.c.l.b16 %v1679
    %v1962 = vunpack.c.h.b16 %v1679
    %v1963 = vunpack.c.l.b16 %v1680
    %v1964 = vunpack.c.h.b16 %v1680
    %v1965 = vunpack.c.l.b16 %v1681
    %v1966 = vunpack.c.h.b16 %v1681
    %v1967 = vunpack.c.l.b16 %v1682
    %v1968 = vunpack.c.h.b16 %v1682
    %v1969 = vunpack.c.l.b16 %v1683
    %v1970 = vunpack.c.h.b16 %v1683
    %v1971 = vunpack.c.l.b16 %v1684
    %v1972 = vunpack.c.h.b16 %v1684
    %v1973 = vunpack.c.l.b16 %v1685
    %v1974 = vunpack.c.h.b16 %v1685
    %v1975 = vunpack.c.l.b16 %v1686
    %v1976 = vunpack.c.h.b16 %v1686
    %v1977 = vunpack.c.l.b16 %v1687
    %v1978 = vunpack.c.h.b16 %v1687
    %v1979 = vunpack.c.l.b16 %v1688
    %v1980 = vunpack.c.h.b16 %v1688
    %v1981 = vunpack.c.l.b16 %v1689
    %v1982 = vunpack.c.h.b16 %v1689
    %v1983 = vunpack.c.l.b16 %v1690
    %v1984 = vunpack.c.h.b16 %v1690
    %v1985 = vunpack.c.l.b16 %v1691
    %v1986 = vunpack.c.h.b16 %v1691
    %v1987 = vunpack.c.l.b16 %v1692
    %v1988 = vunpack.c.h.b16 %v1692
    %v1989 = vunpack.c.l.b16 %v1693
    %v1990 = vunpack.c.h.b16 %v1693
    %v1991 = vunpack.c.l.b16 %v1694
    %v1992 = vunpack.c.h.b16 %v1694
    %v1993 = vunpack.c.l.b16 %v1695
    %v1994 = vunpack.c.h.b16 %v1695
    %v1995 = vunpack.c.l.b16 %v1696
    %v1996 = vunpack.c.h.b16 %v1696
    %v1997 = vunpack.c.l.b16 %v1697
    %v1998 = vunpack.c.h.b16 %v1697
    %v1999 = vunpack.c.l.b16 %v1698
    %v2000 = vunpack.c.h.b16 %v1698
    %v2001 = vunpack.c.l.b16 %v1699
    %v2002 = vunpack.c.h.b16 %v1699
    %v2003 = vunpack.c.l.b16 %v1700
    %v2004 = vunpack.c.h.b16 %v1700
    %v2005 = vunpack.c.l.b16 %v1701
    %v2006 = vunpack.c.h.b16 %v1701
    %v2007 = vunpack.c.l.b16 %v1702
    %v2008 = vunpack.c.h.b16 %v1702
    %v2009 = vunpack.c.l.b16 %v1703
    %v2010 = vunpack.c.h.b16 %v1703
    %v2011 = vunpack.c.l.b16 %v1704
    %v2012 = vunpack.c.h.b16 %v1704
    %v2013 = vunpack.c.l.b16 %v1705
    %v2014 = vunpack.c.h.b16 %v1705
    %v2015 = vunpack.c.l.b16 %v1706
    %v2016 = vunpack.c.h.b16 %v1706
    %v2017 = vunpack.c.l.b16 %v1707
    %v2018 = vunpack.c.h.b16 %v1707
    %v2019 = vunpack.c.l.b16 %v1708
    %v2020 = vunpack.c.h.b16 %v1708
    %v2021 = vunpack.c.l.b16 %v1709
    %v2022 = vunpack.c.h.b16 %v1709
    %v2023 = vunpack.c.l.b16 %v1710
    %v2024 = vunpack.c.h.b16 %v1710
    %v2025 = vunpack.c.l.b16 %v1711
    %v2026 = vunpack.c.h.b16 %v1711
    %v2027 = vunpack.c.l.b16 %v1712
    %v2028 = vunpack.c.h.b16 %v1712
    %v2029 = vunpack.c.l.b16 %v1713
    %v2030 = vunpack.c.h.b16 %v1713
    %v2031 = vunpack.c.l.b16 %v1714
    %v2032 = vunpack.c.h.b16 %v1714
    %v2033 = vunpack.c.l.b16 %v1715
    %v2034 = vunpack.c.h.b16 %v1715
    %v2035 = vunpack.c.l.b16 %v1716
    %v2036 = vunpack.c.h.b16 %v1716
    %v2037 = vunpack.c.l.b16 %v1717
    %v2038 = vunpack.c.h.b16 %v1717
    %v2039 = vunpack.c.l.b16 %v1718
    %v2040 = vunpack.c.h.b16 %v1718
    %v2041 = vunpack.c.l.b16 %v1719
    %v2042 = vunpack.c.h.b16 %v1719
    %v2043 = vunpack.c.l.b16 %v1720
    %v2044 = vunpack.c.h.b16 %v1720
    %v2045 = vunpack.c.l.b16 %v1721
    %v2046 = vunpack.c.h.b16 %v1721
    %v2047 = vunpack.c.l.b16 %v1722
    %v2048 = vunpack.c.h.b16 %v1722
    %v2049 = vunpack.c.l.b16 %v1723
    %v2050 = vunpack.c.h.b16 %v1723
    %v2051 = vunpack.c.l.b16 %v1724
    %v2052 = vunpack.c.h.b16 %v1724
    %v2053 = vunpack.c.l.b16 %v1725
    %v2054 = vunpack.c.h.b16 %v1725
    %v2055 = vunpack.c.l.b16 %v1726
    %v2056 = vunpack.c.h.b16 %v1726
    %v2057 = vunpack.c.l.b16 %v1727
    %v2058 = vunpack.c.h.b16 %v1727
    %v2059 = vunpack.c.l.b16 %v1728
    %v2060 = vunpack.c.h.b16 %v1728
    %v2061 = vunpack.c.l.b16 %v1729
    %v2062 = vunpack.c.h.b16 %v1729
    %v2063 = vunpack.c.l.b16 %v1730
    %v2064 = vunpack.c.h.b16 %v1730
    %v2065 = vunpack.c.l.b16 %v1731
    %v2066 = vunpack.c.h.b16 %v1731
    %v2067 = vunpack.c.l.b16 %v1732
    %v2068 = vunpack.c.h.b16 %v1732
    %v2069 = vunpack.c.l.b16 %v1733
    %v2070 = vunpack.c.h.b16 %v1733
    %v2071 = vunpack.c.l.b16 %v1734
    %v2072 = vunpack.c.h.b16 %v1734
    %v2073 = vunpack.c.l.b16 %v1735
    %v2074 = vunpack.c.h.b16 %v1735
    %v2075 = vunpack.c.l.b16 %v1736
    %v2076 = vunpack.c.h.b16 %v1736
    %v2077 = vunpack.c.l.b16 %v1737
    %v2078 = vunpack.c.h.b16 %v1737
    %v2079 = vunpack.c.l.b16 %v1738
    %v2080 = vunpack.c.h.b16 %v1738
    %v2081 = vunpack.c.l.b16 %v1739
    %v2082 = vunpack.c.h.b16 %v1739
    %v2083 = vunpack.c.l.b16 %v1740
    %v2084 = vunpack.c.h.b16 %v1740
    %v2085 = vunpack.c.l.b16 %v1741
    %v2086 = vunpack.c.h.b16 %v1741
    %v2087 = vunpack.c.l.b16 %v1742
    %v2088 = vunpack.c.h.b16 %v1742
    %v2089 = vunpack.c.l.b16 %v1743
    %v2090 = vunpack.c.h.b16 %v1743
    %v2091 = vunpack.c.l.b16 %v1744
    %v2092 = vunpack.c.h.b16 %v1744
    %v2093 = vunpack.c.l.b16 %v1745
    %v2094 = vunpack.c.h.b16 %v1745
    %v2095 = vunpack.c.l.b16 %v1746
    %v2096 = vunpack.c.h.b16 %v1746
    %v2097 = vunpack.c.l.b16 %v1747
    %v2098 = vunpack.c.h.b16 %v1747
    %v2099 = vunpack.c.l.b16 %v1748
    %v2100 = vunpack.c.h.b16 %v1748
    %v2101 = vunpack.c.l.b16 %v1749
    %v2102 = vunpack.c.h.b16 %v1749
    %v2103 = vunpack.c.l.b16 %v1750
    %v2104 = vunpack.c.h.b16 %v1750
    %v2105 = vunpack.c.l.b16 %v1751
    %v2106 = vunpack.c.h.b16 %v1751
    %v2107 = vunpack.c.l.b16 %v1752
    %v2108 = vunpack.c.h.b16 %v1752
    %v2109 = vunpack.c.l.b16 %v1753
    %v2110 = vunpack.c.h.b16 %v1753
    %v2111 = vunpack.c.l.b16 %v1754
    %v2112 = vunpack.c.h.b16 %v1754
    %v2113 = vunpack.c.l.b16 %v1755
    %v2114 = vunpack.c.h.b16 %v1755
    %v2115 = vunpack.c.l.b16 %v1756
    %v2116 = vunpack.c.h.b16 %v1756
    %v2117 = vunpack.c.l.b16 %v1757
    %v2118 = vunpack.c.h.b16 %v1757
    %v2119 = vunpack.c.l.b16 %v1758
    %v2120 = vunpack.c.h.b16 %v1758
    %v2121 = vunpack.c.l.b16 %v1759
    %v2122 = vunpack.c.h.b16 %v1759
    %v2123 = vunpack.c.l.b16 %v1760
    %v2124 = vunpack.c.h.b16 %v1760
    %v2125 = vunpack.c.l.b16 %v1761
    %v2126 = vunpack.c.h.b16 %v1761
    %v2127 = vunpack.c.l.b16 %v1762
    %v2128 = vunpack.c.h.b16 %v1762
    %v2129 = vunpack.c.l.b16 %v1763
    %v2130 = vunpack.c.h.b16 %v1763
    %v2131 = vunpack.c.l.b16 %v1764
    %v2132 = vunpack.c.h.b16 %v1764
    %v2133 = vunpack.c.l.b16 %v1765
    %v2134 = vunpack.c.h.b16 %v1765
    %v2135 = vunpack.c.l.b16 %v1766
    %v2136 = vunpack.c.h.b16 %v1766
    %v2137 = vunpack.c.l.b16 %v1767
    %v2138 = vunpack.c.h.b16 %v1767
    %v2139 = vunpack.c.l.b16 %v1768
    %v2140 = vunpack.c.h.b16 %v1768
    %v2141 = vunpack.c.l.b16 %v1769
    %v2142 = vunpack.c.h.b16 %v1769
    %v2143 = vunpack.c.l.b16 %v1770
    %v2144 = vunpack.c.h.b16 %v1770
    %v2145 = vunpack.c.l.b16 %v1771
    %v2146 = vunpack.c.h.b16 %v1771
    %v2147 = vunpack.c.l.b16 %v1772
    %v2148 = vunpack.c.h.b16 %v1772
    %v2149 = vunpack.c.l.b16 %v1773
    %v2150 = vunpack.c.h.b16 %v1773
    %v2151 = vunpack.c.l.b16 %v1774
    %v2152 = vunpack.c.h.b16 %v1774
    %v2153 = vunpack.c.l.b16 %v1775
    %v2154 = vunpack.c.h.b16 %v1775
    %v2155 = vunpack.c.l.b16 %v1776
    %v2156 = vunpack.c.h.b16 %v1776
    %v2157 = vunpack.c.l.b16 %v1777
    %v2158 = vunpack.c.h.b16 %v1777
    %v2159 = vunpack.c.l.b16 %v1778
    %v2160 = vunpack.c.h.b16 %v1778
    %v2161 = vunpack.c.l.b16 %v1779
    %v2162 = vunpack.c.h.b16 %v1779
    %v2163 = vunpack.c.l.b16 %v1780
    %v2164 = vunpack.c.h.b16 %v1780
    %v2165 = vunpack.c.l.b16 %v1781
    %v2166 = vunpack.c.h.b16 %v1781
    %v2167 = vunpack.c.l.b16 %v1782
    %v2168 = vunpack.c.h.b16 %v1782
    %v2169 = vunpack.c.l.b16 %v1783
    %v2170 = vunpack.c.h.b16 %v1783
    %v2171 = vunpack.c.l.b16 %v1784
    %v2172 = vunpack.c.h.b16 %v1784
    %v2173 = vunpack.c.l.b16 %v1785
    %v2174 = vunpack.c.h.b16 %v1785
    %v2175 = vunpack.c.l.b16 %v1786
    %v2176 = vunpack.c.h.b16 %v1786
    %v2177 = vunpack.c.l.b16 %v1787
    %v2178 = vunpack.c.h.b16 %v1787
    %v2179 = vunpack.c.l.b16 %v1788
    %v2180 = vunpack.c.h.b16 %v1788
    %v2181 = vunpack.c.l.b16 %v1789
    %v2182 = vunpack.c.h.b16 %v1789
    %v2183 = vunpack.c.l.b16 %v1790
    %v2184 = vunpack.c.h.b16 %v1790
    %v2185 = vpack.c.b16 %v1933, %v1929
    %v2186 = vpack.c.b16 %v1934, %v1930
    %v2187 = vpack.c.b16 %v1935, %v1931
    %v2188 = vpack.c.b16 %v1936, %v1932
    %v2189 = vpack.c.b16 %v1941, %v1937
    %v2190 = vpack.c.b16 %v1942, %v1938
    %v2191 = vpack.c.b16 %v1943, %v1939
    %v2192 = vpack.c.b16 %v1944, %v1940
    %v2193 = vpack.c.b16 %v1949, %v1945
    %v2194 = vpack.c.b16 %v1950, %v1946
    %v2195 = vpack.c.b16 %v1951, %v1947
    %v2196 = vpack.c.b16 %v1952, %v1948
    %v2197 = vpack.c.b16 %v1957, %v1953
    %v2198 = vpack.c.b16 %v1958, %v1954
    %v2199 = vpack.c.b16 %v1959, %v1955
    %v2200 = vpack.c.b16 %v1960, %v1956
    %v2201 = vpack.c.b16 %v1965, %v1961
    %v2202 = vpack.c.b16 %v1966, %v1962
    %v2203 = vpack.c.b16 %v1967, %v1963
    %v2204 = vpack.c.b16 %v1968, %v1964
    %v2205 = vpack.c.b16 %v1973, %v1969
    %v2206 = vpack.c.b16 %v1974, %v1970
    %v2207 = vpack.c.b16 %v1975, %v1971
    %v2208 = vpack.c.b16 %v1976, %v1972
    %v2209 = vpack.c.b16 %v1981, %v1977
    %v2210 = vpack.c.b16 %v1982, %v1978
    %v2211 = vpack.c.b16 %v1983, %v1979
    %v2212 = vpack.c.b16 %v1984, %v1980
    %v2213 = vpack.c.b16 %v1989, %v1985
    %v2214 = vpack.c.b16 %v1990, %v1986
    %v2215 = vpack.c.b16 %v1991, %v1987
    %v2216 = vpack.c.b16 %v1992, %v1988
    %v2217 = vpack.c.b16 %v1997, %v1993
    %v2218 = vpack.c.b16 %v1998, %v1994
    %v2219 = vpack.c.b16 %v1999, %v1995
    %v2220 = vpack.c.b16 %v2000, %v1996
    %v2221 = vpack.c.b16 %v2005, %v2001
    %v2222 = vpack.c.b16 %v2006, %v2002
    %v2223 = vpack.c.b16 %v2007, %v2003
    %v2224 = vpack.c.b16 %v2008, %v2004
    %v2225 = vpack.c.b16 %v2013, %v2009
    %v2226 = vpack.c.b16 %v2014, %v2010
    %v2227 = vpack.c.b16 %v2015, %v2011
    %v2228 = vpack.c.b16 %v2016, %v2012
    %v2229 = vpack.c.b16 %v2021, %v2017
    %v2230 = vpack.c.b16 %v2022, %v2018
    %v2231 = vpack.c.b16 %v2023, %v2019
    %v2232 = vpack.c.b16 %v2024, %v2020
    %v2233 = vpack.c.b16 %v2029, %v2025
    %v2234 = vpack.c.b16 %v2030, %v2026
    %v2235 = vpack.c.b16 %v2031, %v2027
    %v2236 = vpack.c.b16 %v2032, %v2028
    %v2237 = vpack.c.b16 %v2037, %v2033
    %v2238 = vpack.c.b16 %v2038, %v2034
    %v2239 = vpack.c.b16 %v2039, %v2035
    %v2240 = vpack.c.b16 %v2040, %v2036
    %v2241 = vpack.c.b16 %v2045, %v2041
    %v2242 = vpack.c.b16 %v2046, %v2042
    %v2243 = vpack.c.b16 %v2047, %v2043
    %v2244 = vpack.c.b16 %v2048, %v2044
    %v2245 = vpack.c.b16 %v2053, %v2049
    %v2246 = vpack.c.b16 %v2054, %v2050
    %v2247 = vpack.c.b16 %v2055, %v2051
    %v2248 = vpack.c.b16 %v2056, %v2052
    %v2249 = vpack.c.b16 %v2061, %v2057
    %v2250 = vpack.c.b16 %v2062, %v2058
    %v2251 = vpack.c.b16 %v2063, %v2059
    %v2252 = vpack.c.b16 %v2064, %v2060
    %v2253 = vpack.c.b16 %v2069, %v2065
    %v2254 = vpack.c.b16 %v2070, %v2066
    %v2255 = vpack.c.b16 %v2071, %v2067
    %v2256 = vpack.c.b16 %v2072, %v2068
    %v2257 = vpack.c.b16 %v2077, %v2073
    %v2258 = vpack.c.b16 %v2078, %v2074
    %v2259 = vpack.c.b16 %v2079, %v2075
    %v2260 = vpack.c.b16 %v2080, %v2076
    %v2261 = vpack.c.b16 %v2085, %v2081
    %v2262 = vpack.c.b16 %v2086, %v2082
    %v2263 = vpack.c.b16 %v2087, %v2083
    %v2264 = vpack.c.b16 %v2088, %v2084
    %v2265 = vpack.c.b16 %v2093, %v2089
    %v2266 = vpack.c.b16 %v2094, %v2090
    %v2267 = vpack.c.b16 %v2095, %v2091
    %v2268 = vpack.c.b16 %v2096, %v2092
    %v2269 = vpack.c.b16 %v2101, %v2097
    %v2270 = vpack.c.b16 %v2102, %v2098
    %v2271 = vpack.c.b16 %v2103, %v2099
    %v2272 = vpack.c.b16 %v2104, %v2100
    %v2273 = vpack.c.b16 %v2109, %v2105
    %v2274 = vpack.c.b16 %v2110, %v2106
    %v2275 = vpack.c.b16 %v2111, %v2107
    %v2276 = vpack.c.b16 %v2112, %v2108
    %v2277 = vpack.c.b16 %v2117, %v2113
    %v2278 = vpack.c.b16 %v2118, %v2114
    %v2279 = vpack.c.b16 %v2119, %v2115
    %v2280 = vpack.c.b16 %v2120, %v2116
    %v2281 = vpack.c.b16 %v2125, %v2121
    %v2282 = vpack.c.b16 %v2126, %v2122
    %v2283 = vpack.c.b16 %v2127, %v2123
    %v2284 = vpack.c.b16 %v2128, %v2124
    %v2285 = vpack.c.b16 %v2133, %v2129
    %v2286 = vpack.c.b16 %v2134, %v2130
    %v2287 = vpack.c.b16 %v2135, %v2131
    %v2288 = vpack.c.b16 %v2136, %v2132
    %v2289 = vpack.c.b16 %v2141, %v2137
    %v2290 = vpack.c.b16 %v2142, %v2138
    %v2291 = vpack.c.b16 %v2143, %v2139
    %v2292 = vpack.c.b16 %v2144, %v2140
    %v2293 = vpack.c.b16 %v2149, %v2145
    %v2294 = vpack.c.b16 %v2150, %v2146
    %v2295 = vpack.c.b16 %v2151, %v2147
    %v2296 = vpack.c.b16 %v2152, %v2148
    %v2297 = vpack.c.b16 %v2157, %v2153
    %v2298 = vpack.c.b16 %v2158, %v2154
    %v2299 = vpack.c.b16 %v2159, %v2155
    %v2300 = vpack.c.b16 %v2160, %v2156
    %v2301 = vpack.c.b16 %v2165, %v2161
    %v2302 = vpack.c.b16 %v2166, %v2162
    %v2303 = vpack.c.b16 %v2167, %v2163
    %v2304 = vpack.c.b16 %v2168, %v2164
    %v2305 = vpack.c.b16 %v2173, %v2169
    %v2306 = vpack.c.b16 %v2174, %v2170
    %v2307 = vpack.c.b16 %v2175, %v2171
    %v2308 = vpack.c.b16 %v2176, %v2172
    %v2309 = vpack.c.b16 %v2181, %v2177
    %v2310 = vpack.c.b16 %v2182, %v2178
    %v2311 = vpack.c.b16 %v2183, %v2179
    %v2312 = vpack.c.b16 %v2184, %v2180
    %2441 = vmatpush.bf16.msra.mxu0 %v2213
    %2442 = vmatpush.bf16.msra.mxu0 %v2209
    %2443 = vmatpush.bf16.msra.mxu0 %v2205
    %2444 = vmatpush.bf16.msra.mxu0 %v2201
    %2445 = vmatpush.bf16.msra.mxu0 %v2197
    %2446 = vmatpush.bf16.msra.mxu0 %v2193
    %2447 = vmatpush.bf16.msra.mxu0 %v2189
    %2448 = vmatpush.bf16.msra.mxu0 %v2185
    %2449 = vmatmul.bf16.gmra.mxu0 %v1659
    %v2450 = vpop.f32.mrf.mxu0
    %v2451 = vadd.f32 %v1793, %v2450
    %v2452 = vpop.f32.mrf.mxu0
    %v2453 = vadd.f32 %v1793, %v2452
    %2454 = vdwg.mxu0
    %2455 = vmatpush.bf16.msra.mxu0 %v2245
    %2456 = vmatpush.bf16.msra.mxu0 %v2241
    %2457 = vmatpush.bf16.msra.mxu0 %v2237
    %2458 = vmatpush.bf16.msra.mxu0 %v2233
    %2459 = vmatpush.bf16.msra.mxu0 %v2229
    %2460 = vmatpush.bf16.msra.mxu0 %v2225
    %2461 = vmatpush.bf16.msra.mxu0 %v2221
    %2462 = vmatpush.bf16.msra.mxu0 %v2217
    %2463 = vmatmul.bf16.gmra.mxu0 %v1660
    %v2464 = vpop.f32.mrf.mxu0
    %v2465 = vadd.f32 %v2451, %v2464
    %v2466 = vpop.f32.mrf.mxu0
    %v2467 = vadd.f32 %v2453, %v2466
    %2468 = vdwg.mxu0
    %2469 = vmatpush.bf16.msra.mxu0 %v2277
    %2470 = vmatpush.bf16.msra.mxu0 %v2273
    %2471 = vmatpush.bf16.msra.mxu0 %v2269
    %2472 = vmatpush.bf16.msra.mxu0 %v2265
    %2473 = vmatpush.bf16.msra.mxu0 %v2261
    %2474 = vmatpush.bf16.msra.mxu0 %v2257
    %2475 = vmatpush.bf16.msra.mxu0 %v2253
    %2476 = vmatpush.bf16.msra.mxu0 %v2249
    %2477 = vmatmul.bf16.gmra.mxu0 %v1661
    %v2478 = vpop.f32.mrf.mxu0
    %v2479 = vadd.f32 %v2465, %v2478
    %v2480 = vpop.f32.mrf.mxu0
    %v2481 = vadd.f32 %v2467, %v2480
    %2482 = vdwg.mxu0
    %2483 = vmatpush.bf16.msra.mxu0 %v2309
    %2484 = vmatpush.bf16.msra.mxu0 %v2305
    %2485 = vmatpush.bf16.msra.mxu0 %v2301
    %2486 = vmatpush.bf16.msra.mxu0 %v2297
    %2487 = vmatpush.bf16.msra.mxu0 %v2293
    %2488 = vmatpush.bf16.msra.mxu0 %v2289
    %2489 = vmatpush.bf16.msra.mxu0 %v2285
    %2490 = vmatpush.bf16.msra.mxu0 %v2281
    %2491 = vmatmul.bf16.gmra.mxu0 %v1662
    %v2492 = vpop.f32.mrf.mxu0
    %v2493 = vadd.f32 %v2479, %v2492
    %v2494 = vpop.f32.mrf.mxu0
    %v2495 = vadd.f32 %v2481, %v2494
    %2496 = vdwg.mxu0
    %2497 = vmatpush.bf16.msra.mxu0 %v2214
    %2498 = vmatpush.bf16.msra.mxu0 %v2210
    %2499 = vmatpush.bf16.msra.mxu0 %v2206
    %2500 = vmatpush.bf16.msra.mxu0 %v2202
    %2501 = vmatpush.bf16.msra.mxu0 %v2198
    %2502 = vmatpush.bf16.msra.mxu0 %v2194
    %2503 = vmatpush.bf16.msra.mxu0 %v2190
    %2504 = vmatpush.bf16.msra.mxu0 %v2186
    %2505 = vmatmul.bf16.gmra.mxu0 %v1659
    %v2506 = vpop.f32.mrf.mxu0
    %v2507 = vadd.f32 %v1794, %v2506
    %v2508 = vpop.f32.mrf.mxu0
    %v2509 = vadd.f32 %v1794, %v2508
    %2510 = vdwg.mxu0
    %2511 = vmatpush.bf16.msra.mxu0 %v2246
    %2512 = vmatpush.bf16.msra.mxu0 %v2242
    %2513 = vmatpush.bf16.msra.mxu0 %v2238
    %2514 = vmatpush.bf16.msra.mxu0 %v2234
    %2515 = vmatpush.bf16.msra.mxu0 %v2230
    %2516 = vmatpush.bf16.msra.mxu0 %v2226
    %2517 = vmatpush.bf16.msra.mxu0 %v2222
    %2518 = vmatpush.bf16.msra.mxu0 %v2218
    %2519 = vmatmul.bf16.gmra.mxu0 %v1660
    %v2520 = vpop.f32.mrf.mxu0
    %v2521 = vadd.f32 %v2507, %v2520
    %v2522 = vpop.f32.mrf.mxu0
    %v2523 = vadd.f32 %v2509, %v2522
    %2524 = vdwg.mxu0
    %2525 = vmatpush.bf16.msra.mxu0 %v2278
    %2526 = vmatpush.bf16.msra.mxu0 %v2274
    %2527 = vmatpush.bf16.msra.mxu0 %v2270
    %2528 = vmatpush.bf16.msra.mxu0 %v2266
    %2529 = vmatpush.bf16.msra.mxu0 %v2262
    %2530 = vmatpush.bf16.msra.mxu0 %v2258
    %2531 = vmatpush.bf16.msra.mxu0 %v2254
    %2532 = vmatpush.bf16.msra.mxu0 %v2250
    %2533 = vmatmul.bf16.gmra.mxu0 %v1661
    %v2534 = vpop.f32.mrf.mxu0
    %v2535 = vadd.f32 %v2521, %v2534
    %v2536 = vpop.f32.mrf.mxu0
    %v2537 = vadd.f32 %v2523, %v2536
    %2538 = vdwg.mxu0
    %2539 = vmatpush.bf16.msra.mxu0 %v2310
    %2540 = vmatpush.bf16.msra.mxu0 %v2306
    %2541 = vmatpush.bf16.msra.mxu0 %v2302
    %2542 = vmatpush.bf16.msra.mxu0 %v2298
    %2543 = vmatpush.bf16.msra.mxu0 %v2294
    %2544 = vmatpush.bf16.msra.mxu0 %v2290
    %2545 = vmatpush.bf16.msra.mxu0 %v2286
    %2546 = vmatpush.bf16.msra.mxu0 %v2282
    %2547 = vmatmul.bf16.gmra.mxu0 %v1662
    %v2548 = vpop.f32.mrf.mxu0
    %v2549 = vadd.f32 %v2535, %v2548
    %v2550 = vpop.f32.mrf.mxu0
    %v2551 = vadd.f32 %v2537, %v2550
    %2552 = vdwg.mxu0
    %2553 = vmatpush.bf16.msra.mxu0 %v2215
    %2554 = vmatpush.bf16.msra.mxu0 %v2211
    %2555 = vmatpush.bf16.msra.mxu0 %v2207
    %2556 = vmatpush.bf16.msra.mxu0 %v2203
    %2557 = vmatpush.bf16.msra.mxu0 %v2199
    %2558 = vmatpush.bf16.msra.mxu0 %v2195
    %2559 = vmatpush.bf16.msra.mxu0 %v2191
    %2560 = vmatpush.bf16.msra.mxu0 %v2187
    %2561 = vmatmul.bf16.gmra.mxu0 %v1659
    %v2562 = vpop.f32.mrf.mxu0
    %v2563 = vadd.f32 %v1795, %v2562
    %v2564 = vpop.f32.mrf.mxu0
    %v2565 = vadd.f32 %v1795, %v2564
    %2566 = vdwg.mxu0
    %2567 = vmatpush.bf16.msra.mxu0 %v2247
    %2568 = vmatpush.bf16.msra.mxu0 %v2243
    %2569 = vmatpush.bf16.msra.mxu0 %v2239
    %2570 = vmatpush.bf16.msra.mxu0 %v2235
    %2571 = vmatpush.bf16.msra.mxu0 %v2231
    %2572 = vmatpush.bf16.msra.mxu0 %v2227
    %2573 = vmatpush.bf16.msra.mxu0 %v2223
    %2574 = vmatpush.bf16.msra.mxu0 %v2219
    %2575 = vmatmul.bf16.gmra.mxu0 %v1660
    %v2576 = vpop.f32.mrf.mxu0
    %v2577 = vadd.f32 %v2563, %v2576
    %v2578 = vpop.f32.mrf.mxu0
    %v2579 = vadd.f32 %v2565, %v2578
    %2580 = vdwg.mxu0
    %2581 = vmatpush.bf16.msra.mxu0 %v2279
    %2582 = vmatpush.bf16.msra.mxu0 %v2275
    %2583 = vmatpush.bf16.msra.mxu0 %v2271
    %2584 = vmatpush.bf16.msra.mxu0 %v2267
    %2585 = vmatpush.bf16.msra.mxu0 %v2263
    %2586 = vmatpush.bf16.msra.mxu0 %v2259
    %2587 = vmatpush.bf16.msra.mxu0 %v2255
    %2588 = vmatpush.bf16.msra.mxu0 %v2251
    %2589 = vmatmul.bf16.gmra.mxu0 %v1661
    %v2590 = vpop.f32.mrf.mxu0
    %v2591 = vadd.f32 %v2577, %v2590
    %v2592 = vpop.f32.mrf.mxu0
    %v2593 = vadd.f32 %v2579, %v2592
    %2594 = vdwg.mxu0
    %2595 = vmatpush.bf16.msra.mxu0 %v2311
    %2596 = vmatpush.bf16.msra.mxu0 %v2307
    %2597 = vmatpush.bf16.msra.mxu0 %v2303
    %2598 = vmatpush.bf16.msra.mxu0 %v2299
    %2599 = vmatpush.bf16.msra.mxu0 %v2295
    %2600 = vmatpush.bf16.msra.mxu0 %v2291
    %2601 = vmatpush.bf16.msra.mxu0 %v2287
    %2602 = vmatpush.bf16.msra.mxu0 %v2283
    %2603 = vmatmul.bf16.gmra.mxu0 %v1662
    %v2604 = vpop.f32.mrf.mxu0
    %v2605 = vadd.f32 %v2591, %v2604
    %v2606 = vpop.f32.mrf.mxu0
    %v2607 = vadd.f32 %v2593, %v2606
    %2608 = vdwg.mxu0
    %2609 = vmatpush.bf16.msra.mxu0 %v2216
    %2610 = vmatpush.bf16.msra.mxu0 %v2212
    %2611 = vmatpush.bf16.msra.mxu0 %v2208
    %2612 = vmatpush.bf16.msra.mxu0 %v2204
    %2613 = vmatpush.bf16.msra.mxu0 %v2200
    %2614 = vmatpush.bf16.msra.mxu0 %v2196
    %2615 = vmatpush.bf16.msra.mxu0 %v2192
    %2616 = vmatpush.bf16.msra.mxu0 %v2188
    %2617 = vmatmul.bf16.gmra.mxu0 %v1659
    %v2618 = vpop.f32.mrf.mxu0
    %v2619 = vadd.f32 %v1796, %v2618
    %v2620 = vpop.f32.mrf.mxu0
    %v2621 = vadd.f32 %v1796, %v2620
    %2622 = vdwg.mxu0
    %2623 = vmatpush.bf16.msra.mxu0 %v2248
    %2624 = vmatpush.bf16.msra.mxu0 %v2244
    %2625 = vmatpush.bf16.msra.mxu0 %v2240
    %2626 = vmatpush.bf16.msra.mxu0 %v2236
    %2627 = vmatpush.bf16.msra.mxu0 %v2232
    %2628 = vmatpush.bf16.msra.mxu0 %v2228
    %2629 = vmatpush.bf16.msra.mxu0 %v2224
    %2630 = vmatpush.bf16.msra.mxu0 %v2220
    %2631 = vmatmul.bf16.gmra.mxu0 %v1660
    %v2632 = vpop.f32.mrf.mxu0
    %v2633 = vadd.f32 %v2619, %v2632
    %v2634 = vpop.f32.mrf.mxu0
    %v2635 = vadd.f32 %v2621, %v2634
    %2636 = vdwg.mxu0
    %2637 = vmatpush.bf16.msra.mxu0 %v2280
    %2638 = vmatpush.bf16.msra.mxu0 %v2276
    %2639 = vmatpush.bf16.msra.mxu0 %v2272
    %2640 = vmatpush.bf16.msra.mxu0 %v2268
    %2641 = vmatpush.bf16.msra.mxu0 %v2264
    %2642 = vmatpush.bf16.msra.mxu0 %v2260
    %2643 = vmatpush.bf16.msra.mxu0 %v2256
    %2644 = vmatpush.bf16.msra.mxu0 %v2252
    %2645 = vmatmul.bf16.gmra.mxu0 %v1661
    %v2646 = vpop.f32.mrf.mxu0
    %v2647 = vadd.f32 %v2633, %v2646
    %v2648 = vpop.f32.mrf.mxu0
    %v2649 = vadd.f32 %v2635, %v2648
    %2650 = vdwg.mxu0
    %2651 = vmatpush.bf16.msra.mxu0 %v2312
    %2652 = vmatpush.bf16.msra.mxu0 %v2308
    %2653 = vmatpush.bf16.msra.mxu0 %v2304
    %2654 = vmatpush.bf16.msra.mxu0 %v2300
    %2655 = vmatpush.bf16.msra.mxu0 %v2296
    %2656 = vmatpush.bf16.msra.mxu0 %v2292
    %2657 = vmatpush.bf16.msra.mxu0 %v2288
    %2658 = vmatpush.bf16.msra.mxu0 %v2284
    %2659 = vmatmul.bf16.gmra.mxu0 %v1662
    %v2660 = vpop.f32.mrf.mxu0
    %v2661 = vadd.f32 %v2647, %v2660
    %v2662 = vpop.f32.mrf.mxu0
    %v2663 = vadd.f32 %v2649, %v2662
    %2664 = vdwg.mxu0
    %v2665 = vpack.c.bf16 %v2495, %v2493
    %v2666 = vpack.c.bf16 %v2551, %v2549
    %v2667 = vpack.c.bf16 %v2607, %v2605
    %v2668 = vpack.c.bf16 %v2663, %v2661
    %v2669 = vld [vmem:[%s5] sm:$0xff]
    %v2670 = vld [vmem:[%s5 + $0x8] sm:$0xff]
    %v2671 = vld [vmem:[%s5 + $0x10] sm:$0xff]
    %v2672 = vld [vmem:[%s5 + $0x18] sm:$0xff]
    %v2673 = vld [vmem:[%s5 + $0x20] sm:$0xff]
    %v2674 = vld [vmem:[%s5 + $0x28] sm:$0xff]
    %v2675 = vld [vmem:[%s5 + $0x30] sm:$0xff]
    %v2676 = vld [vmem:[%s5 + $0x38] sm:$0xff]
    %v2677 = vld [vmem:[%s5 + $0x40] sm:$0xff]
    %v2678 = vld [vmem:[%s5 + $0x48] sm:$0xff]
    %v2679 = vld [vmem:[%s5 + $0x50] sm:$0xff]
    %v2680 = vld [vmem:[%s5 + $0x58] sm:$0xff]
    %v2681 = vld [vmem:[%s5 + $0x60] sm:$0xff]
    %v2682 = vld [vmem:[%s5 + $0x68] sm:$0xff]
    %v2683 = vld [vmem:[%s5 + $0x70] sm:$0xff]
    %v2684 = vld [vmem:[%s5 + $0x78] sm:$0xff]
    %v2685 = vld [vmem:[%s5 + $0x80] sm:$0xff]
    %v2686 = vld [vmem:[%s5 + $0x88] sm:$0xff]
    %v2687 = vld [vmem:[%s5 + $0x90] sm:$0xff]
    %v2688 = vld [vmem:[%s5 + $0x98] sm:$0xff]
    %v2689 = vld [vmem:[%s5 + $0xa0] sm:$0xff]
    %v2690 = vld [vmem:[%s5 + $0xa8] sm:$0xff]
    %v2691 = vld [vmem:[%s5 + $0xb0] sm:$0xff]
    %v2692 = vld [vmem:[%s5 + $0xb8] sm:$0xff]
    %v2693 = vld [vmem:[%s5 + $0xc0] sm:$0xff]
    %v2694 = vld [vmem:[%s5 + $0xc8] sm:$0xff]
    %v2695 = vld [vmem:[%s5 + $0xd0] sm:$0xff]
    %v2696 = vld [vmem:[%s5 + $0xd8] sm:$0xff]
    %v2697 = vld [vmem:[%s5 + $0xe0] sm:$0xff]
    %v2698 = vld [vmem:[%s5 + $0xe8] sm:$0xff]
    %v2699 = vld [vmem:[%s5 + $0xf0] sm:$0xff]
    %v2700 = vld [vmem:[%s5 + $0xf8] sm:$0xff]
    %v2701 = vld [vmem:[%s5 + $0x100] sm:$0xff]
    %v2702 = vld [vmem:[%s5 + $0x108] sm:$0xff]
    %v2703 = vld [vmem:[%s5 + $0x110] sm:$0xff]
    %v2704 = vld [vmem:[%s5 + $0x118] sm:$0xff]
    %v2705 = vld [vmem:[%s5 + $0x120] sm:$0xff]
    %v2706 = vld [vmem:[%s5 + $0x128] sm:$0xff]
    %v2707 = vld [vmem:[%s5 + $0x130] sm:$0xff]
    %v2708 = vld [vmem:[%s5 + $0x138] sm:$0xff]
    %v2709 = vld [vmem:[%s5 + $0x140] sm:$0xff]
    %v2710 = vld [vmem:[%s5 + $0x148] sm:$0xff]
    %v2711 = vld [vmem:[%s5 + $0x150] sm:$0xff]
    %v2712 = vld [vmem:[%s5 + $0x158] sm:$0xff]
    %v2713 = vld [vmem:[%s5 + $0x160] sm:$0xff]
    %v2714 = vld [vmem:[%s5 + $0x168] sm:$0xff]
    %v2715 = vld [vmem:[%s5 + $0x170] sm:$0xff]
    %v2716 = vld [vmem:[%s5 + $0x178] sm:$0xff]
    %v2717 = vld [vmem:[%s5 + $0x180] sm:$0xff]
    %v2718 = vld [vmem:[%s5 + $0x188] sm:$0xff]
    %v2719 = vld [vmem:[%s5 + $0x190] sm:$0xff]
    %v2720 = vld [vmem:[%s5 + $0x198] sm:$0xff]
    %v2721 = vld [vmem:[%s5 + $0x1a0] sm:$0xff]
    %v2722 = vld [vmem:[%s5 + $0x1a8] sm:$0xff]
    %v2723 = vld [vmem:[%s5 + $0x1b0] sm:$0xff]
    %v2724 = vld [vmem:[%s5 + $0x1b8] sm:$0xff]
    %v2725 = vld [vmem:[%s5 + $0x1c0] sm:$0xff]
    %v2726 = vld [vmem:[%s5 + $0x1c8] sm:$0xff]
    %v2727 = vld [vmem:[%s5 + $0x1d0] sm:$0xff]
    %v2728 = vld [vmem:[%s5 + $0x1d8] sm:$0xff]
    %v2729 = vld [vmem:[%s5 + $0x1e0] sm:$0xff]
    %v2730 = vld [vmem:[%s5 + $0x1e8] sm:$0xff]
    %v2731 = vld [vmem:[%s5 + $0x1f0] sm:$0xff]
    %v2732 = vld [vmem:[%s5 + $0x1f8] sm:$0xff]
    %v2733 = vld [vmem:[%s5 + $0x200] sm:$0xff]
    %v2734 = vld [vmem:[%s5 + $0x208] sm:$0xff]
    %v2735 = vld [vmem:[%s5 + $0x210] sm:$0xff]
    %v2736 = vld [vmem:[%s5 + $0x218] sm:$0xff]
    %v2737 = vld [vmem:[%s5 + $0x220] sm:$0xff]
    %v2738 = vld [vmem:[%s5 + $0x228] sm:$0xff]
    %v2739 = vld [vmem:[%s5 + $0x230] sm:$0xff]
    %v2740 = vld [vmem:[%s5 + $0x238] sm:$0xff]
    %v2741 = vld [vmem:[%s5 + $0x240] sm:$0xff]
    %v2742 = vld [vmem:[%s5 + $0x248] sm:$0xff]
    %v2743 = vld [vmem:[%s5 + $0x250] sm:$0xff]
    %v2744 = vld [vmem:[%s5 + $0x258] sm:$0xff]
    %v2745 = vld [vmem:[%s5 + $0x260] sm:$0xff]
    %v2746 = vld [vmem:[%s5 + $0x268] sm:$0xff]
    %v2747 = vld [vmem:[%s5 + $0x270] sm:$0xff]
    %v2748 = vld [vmem:[%s5 + $0x278] sm:$0xff]
    %v2749 = vld [vmem:[%s5 + $0x280] sm:$0xff]
    %v2750 = vld [vmem:[%s5 + $0x288] sm:$0xff]
    %v2751 = vld [vmem:[%s5 + $0x290] sm:$0xff]
    %v2752 = vld [vmem:[%s5 + $0x298] sm:$0xff]
    %v2753 = vld [vmem:[%s5 + $0x2a0] sm:$0xff]
    %v2754 = vld [vmem:[%s5 + $0x2a8] sm:$0xff]
    %v2755 = vld [vmem:[%s5 + $0x2b0] sm:$0xff]
    %v2756 = vld [vmem:[%s5 + $0x2b8] sm:$0xff]
    %v2757 = vld [vmem:[%s5 + $0x2c0] sm:$0xff]
    %v2758 = vld [vmem:[%s5 + $0x2c8] sm:$0xff]
    %v2759 = vld [vmem:[%s5 + $0x2d0] sm:$0xff]
    %v2760 = vld [vmem:[%s5 + $0x2d8] sm:$0xff]
    %v2761 = vld [vmem:[%s5 + $0x2e0] sm:$0xff]
    %v2762 = vld [vmem:[%s5 + $0x2e8] sm:$0xff]
    %v2763 = vld [vmem:[%s5 + $0x2f0] sm:$0xff]
    %v2764 = vld [vmem:[%s5 + $0x2f8] sm:$0xff]
    %v2765 = vld [vmem:[%s5 + $0x300] sm:$0xff]
    %v2766 = vld [vmem:[%s5 + $0x308] sm:$0xff]
    %v2767 = vld [vmem:[%s5 + $0x310] sm:$0xff]
    %v2768 = vld [vmem:[%s5 + $0x318] sm:$0xff]
    %v2769 = vld [vmem:[%s5 + $0x320] sm:$0xff]
    %v2770 = vld [vmem:[%s5 + $0x328] sm:$0xff]
    %v2771 = vld [vmem:[%s5 + $0x330] sm:$0xff]
    %v2772 = vld [vmem:[%s5 + $0x338] sm:$0xff]
    %v2773 = vld [vmem:[%s5 + $0x340] sm:$0xff]
    %v2774 = vld [vmem:[%s5 + $0x348] sm:$0xff]
    %v2775 = vld [vmem:[%s5 + $0x350] sm:$0xff]
    %v2776 = vld [vmem:[%s5 + $0x358] sm:$0xff]
    %v2777 = vld [vmem:[%s5 + $0x360] sm:$0xff]
    %v2778 = vld [vmem:[%s5 + $0x368] sm:$0xff]
    %v2779 = vld [vmem:[%s5 + $0x370] sm:$0xff]
    %v2780 = vld [vmem:[%s5 + $0x378] sm:$0xff]
    %v2781 = vld [vmem:[%s5 + $0x380] sm:$0xff]
    %v2782 = vld [vmem:[%s5 + $0x388] sm:$0xff]
    %v2783 = vld [vmem:[%s5 + $0x390] sm:$0xff]
    %v2784 = vld [vmem:[%s5 + $0x398] sm:$0xff]
    %v2785 = vld [vmem:[%s5 + $0x3a0] sm:$0xff]
    %v2786 = vld [vmem:[%s5 + $0x3a8] sm:$0xff]
    %v2787 = vld [vmem:[%s5 + $0x3b0] sm:$0xff]
    %v2788 = vld [vmem:[%s5 + $0x3b8] sm:$0xff]
    %v2789 = vld [vmem:[%s5 + $0x3c0] sm:$0xff]
    %v2790 = vld [vmem:[%s5 + $0x3c8] sm:$0xff]
    %v2791 = vld [vmem:[%s5 + $0x3d0] sm:$0xff]
    %v2792 = vld [vmem:[%s5 + $0x3d8] sm:$0xff]
    %v2793 = vld [vmem:[%s5 + $0x3e0] sm:$0xff]
    %v2794 = vld [vmem:[%s5 + $0x3e8] sm:$0xff]
    %v2795 = vld [vmem:[%s5 + $0x3f0] sm:$0xff]
    %v2796 = vld [vmem:[%s5 + $0x3f8] sm:$0xff]
    %v2797 = vld [vmem:[%s6] sm:$0xf]
    %v2799 = vperm.slane %v2797, 0
    %v2800 = vperm.slane %v2797, 1
    %v2801 = vperm.slane %v2797, 2
    %v2802 = vperm.slane %v2797, 3
    %v2935 = vunpack.c.l.b16 %v2669
    %v2936 = vunpack.c.h.b16 %v2669
    %v2937 = vunpack.c.l.b16 %v2670
    %v2938 = vunpack.c.h.b16 %v2670
    %v2939 = vunpack.c.l.b16 %v2671
    %v2940 = vunpack.c.h.b16 %v2671
    %v2941 = vunpack.c.l.b16 %v2672
    %v2942 = vunpack.c.h.b16 %v2672
    %v2943 = vunpack.c.l.b16 %v2673
    %v2944 = vunpack.c.h.b16 %v2673
    %v2945 = vunpack.c.l.b16 %v2674
    %v2946 = vunpack.c.h.b16 %v2674
    %v2947 = vunpack.c.l.b16 %v2675
    %v2948 = vunpack.c.h.b16 %v2675
    %v2949 = vunpack.c.l.b16 %v2676
    %v2950 = vunpack.c.h.b16 %v2676
    %v2951 = vunpack.c.l.b16 %v2677
    %v2952 = vunpack.c.h.b16 %v2677
    %v2953 = vunpack.c.l.b16 %v2678
    %v2954 = vunpack.c.h.b16 %v2678
    %v2955 = vunpack.c.l.b16 %v2679
    %v2956 = vunpack.c.h.b16 %v2679
    %v2957 = vunpack.c.l.b16 %v2680
    %v2958 = vunpack.c.h.b16 %v2680
    %v2959 = vunpack.c.l.b16 %v2681
    %v2960 = vunpack.c.h.b16 %v2681
    %v2961 = vunpack.c.l.b16 %v2682
    %v2962 = vunpack.c.h.b16 %v2682
    %v2963 = vunpack.c.l.b16 %v2683
    %v2964 = vunpack.c.h.b16 %v2683
    %v2965 = vunpack.c.l.b16 %v2684
    %v2966 = vunpack.c.h.b16 %v2684
    %v2967 = vunpack.c.l.b16 %v2685
    %v2968 = vunpack.c.h.b16 %v2685
    %v2969 = vunpack.c.l.b16 %v2686
    %v2970 = vunpack.c.h.b16 %v2686
    %v2971 = vunpack.c.l.b16 %v2687
    %v2972 = vunpack.c.h.b16 %v2687
    %v2973 = vunpack.c.l.b16 %v2688
    %v2974 = vunpack.c.h.b16 %v2688
    %v2975 = vunpack.c.l.b16 %v2689
    %v2976 = vunpack.c.h.b16 %v2689
    %v2977 = vunpack.c.l.b16 %v2690
    %v2978 = vunpack.c.h.b16 %v2690
    %v2979 = vunpack.c.l.b16 %v2691
    %v2980 = vunpack.c.h.b16 %v2691
    %v2981 = vunpack.c.l.b16 %v2692
    %v2982 = vunpack.c.h.b16 %v2692
    %v2983 = vunpack.c.l.b16 %v2693
    %v2984 = vunpack.c.h.b16 %v2693
    %v2985 = vunpack.c.l.b16 %v2694
    %v2986 = vunpack.c.h.b16 %v2694
    %v2987 = vunpack.c.l.b16 %v2695
    %v2988 = vunpack.c.h.b16 %v2695
    %v2989 = vunpack.c.l.b16 %v2696
    %v2990 = vunpack.c.h.b16 %v2696
    %v2991 = vunpack.c.l.b16 %v2697
    %v2992 = vunpack.c.h.b16 %v2697
    %v2993 = vunpack.c.l.b16 %v2698
    %v2994 = vunpack.c.h.b16 %v2698
    %v2995 = vunpack.c.l.b16 %v2699
    %v2996 = vunpack.c.h.b16 %v2699
    %v2997 = vunpack.c.l.b16 %v2700
    %v2998 = vunpack.c.h.b16 %v2700
    %v2999 = vunpack.c.l.b16 %v2701
    %v3000 = vunpack.c.h.b16 %v2701
    %v3001 = vunpack.c.l.b16 %v2702
    %v3002 = vunpack.c.h.b16 %v2702
    %v3003 = vunpack.c.l.b16 %v2703
    %v3004 = vunpack.c.h.b16 %v2703
    %v3005 = vunpack.c.l.b16 %v2704
    %v3006 = vunpack.c.h.b16 %v2704
    %v3007 = vunpack.c.l.b16 %v2705
    %v3008 = vunpack.c.h.b16 %v2705
    %v3009 = vunpack.c.l.b16 %v2706
    %v3010 = vunpack.c.h.b16 %v2706
    %v3011 = vunpack.c.l.b16 %v2707
    %v3012 = vunpack.c.h.b16 %v2707
    %v3013 = vunpack.c.l.b16 %v2708
    %v3014 = vunpack.c.h.b16 %v2708
    %v3015 = vunpack.c.l.b16 %v2709
    %v3016 = vunpack.c.h.b16 %v2709
    %v3017 = vunpack.c.l.b16 %v2710
    %v3018 = vunpack.c.h.b16 %v2710
    %v3019 = vunpack.c.l.b16 %v2711
    %v3020 = vunpack.c.h.b16 %v2711
    %v3021 = vunpack.c.l.b16 %v2712
    %v3022 = vunpack.c.h.b16 %v2712
    %v3023 = vunpack.c.l.b16 %v2713
    %v3024 = vunpack.c.h.b16 %v2713
    %v3025 = vunpack.c.l.b16 %v2714
    %v3026 = vunpack.c.h.b16 %v2714
    %v3027 = vunpack.c.l.b16 %v2715
    %v3028 = vunpack.c.h.b16 %v2715
    %v3029 = vunpack.c.l.b16 %v2716
    %v3030 = vunpack.c.h.b16 %v2716
    %v3031 = vunpack.c.l.b16 %v2717
    %v3032 = vunpack.c.h.b16 %v2717
    %v3033 = vunpack.c.l.b16 %v2718
    %v3034 = vunpack.c.h.b16 %v2718
    %v3035 = vunpack.c.l.b16 %v2719
    %v3036 = vunpack.c.h.b16 %v2719
    %v3037 = vunpack.c.l.b16 %v2720
    %v3038 = vunpack.c.h.b16 %v2720
    %v3039 = vunpack.c.l.b16 %v2721
    %v3040 = vunpack.c.h.b16 %v2721
    %v3041 = vunpack.c.l.b16 %v2722
    %v3042 = vunpack.c.h.b16 %v2722
    %v3043 = vunpack.c.l.b16 %v2723
    %v3044 = vunpack.c.h.b16 %v2723
    %v3045 = vunpack.c.l.b16 %v2724
    %v3046 = vunpack.c.h.b16 %v2724
    %v3047 = vunpack.c.l.b16 %v2725
    %v3048 = vunpack.c.h.b16 %v2725
    %v3049 = vunpack.c.l.b16 %v2726
    %v3050 = vunpack.c.h.b16 %v2726
    %v3051 = vunpack.c.l.b16 %v2727
    %v3052 = vunpack.c.h.b16 %v2727
    %v3053 = vunpack.c.l.b16 %v2728
    %v3054 = vunpack.c.h.b16 %v2728
    %v3055 = vunpack.c.l.b16 %v2729
    %v3056 = vunpack.c.h.b16 %v2729
    %v3057 = vunpack.c.l.b16 %v2730
    %v3058 = vunpack.c.h.b16 %v2730
    %v3059 = vunpack.c.l.b16 %v2731
    %v3060 = vunpack.c.h.b16 %v2731
    %v3061 = vunpack.c.l.b16 %v2732
    %v3062 = vunpack.c.h.b16 %v2732
    %v3063 = vunpack.c.l.b16 %v2733
    %v3064 = vunpack.c.h.b16 %v2733
    %v3065 = vunpack.c.l.b16 %v2734
    %v3066 = vunpack.c.h.b16 %v2734
    %v3067 = vunpack.c.l.b16 %v2735
    %v3068 = vunpack.c.h.b16 %v2735
    %v3069 = vunpack.c.l.b16 %v2736
    %v3070 = vunpack.c.h.b16 %v2736
    %v3071 = vunpack.c.l.b16 %v2737
    %v3072 = vunpack.c.h.b16 %v2737
    %v3073 = vunpack.c.l.b16 %v2738
    %v3074 = vunpack.c.h.b16 %v2738
    %v3075 = vunpack.c.l.b16 %v2739
    %v3076 = vunpack.c.h.b16 %v2739
    %v3077 = vunpack.c.l.b16 %v2740
    %v3078 = vunpack.c.h.b16 %v2740
    %v3079 = vunpack.c.l.b16 %v2741
    %v3080 = vunpack.c.h.b16 %v2741
    %v3081 = vunpack.c.l.b16 %v2742
    %v3082 = vunpack.c.h.b16 %v2742
    %v3083 = vunpack.c.l.b16 %v2743
    %v3084 = vunpack.c.h.b16 %v2743
    %v3085 = vunpack.c.l.b16 %v2744
    %v3086 = vunpack.c.h.b16 %v2744
    %v3087 = vunpack.c.l.b16 %v2745
    %v3088 = vunpack.c.h.b16 %v2745
    %v3089 = vunpack.c.l.b16 %v2746
    %v3090 = vunpack.c.h.b16 %v2746
    %v3091 = vunpack.c.l.b16 %v2747
    %v3092 = vunpack.c.h.b16 %v2747
    %v3093 = vunpack.c.l.b16 %v2748
    %v3094 = vunpack.c.h.b16 %v2748
    %v3095 = vunpack.c.l.b16 %v2749
    %v3096 = vunpack.c.h.b16 %v2749
    %v3097 = vunpack.c.l.b16 %v2750
    %v3098 = vunpack.c.h.b16 %v2750
    %v3099 = vunpack.c.l.b16 %v2751
    %v3100 = vunpack.c.h.b16 %v2751
    %v3101 = vunpack.c.l.b16 %v2752
    %v3102 = vunpack.c.h.b16 %v2752
    %v3103 = vunpack.c.l.b16 %v2753
    %v3104 = vunpack.c.h.b16 %v2753
    %v3105 = vunpack.c.l.b16 %v2754
    %v3106 = vunpack.c.h.b16 %v2754
    %v3107 = vunpack.c.l.b16 %v2755
    %v3108 = vunpack.c.h.b16 %v2755
    %v3109 = vunpack.c.l.b16 %v2756
    %v3110 = vunpack.c.h.b16 %v2756
    %v3111 = vunpack.c.l.b16 %v2757
    %v3112 = vunpack.c.h.b16 %v2757
    %v3113 = vunpack.c.l.b16 %v2758
    %v3114 = vunpack.c.h.b16 %v2758
    %v3115 = vunpack.c.l.b16 %v2759
    %v3116 = vunpack.c.h.b16 %v2759
    %v3117 = vunpack.c.l.b16 %v2760
    %v3118 = vunpack.c.h.b16 %v2760
    %v3119 = vunpack.c.l.b16 %v2761
    %v3120 = vunpack.c.h.b16 %v2761
    %v3121 = vunpack.c.l.b16 %v2762
    %v3122 = vunpack.c.h.b16 %v2762
    %v3123 = vunpack.c.l.b16 %v2763
    %v3124 = vunpack.c.h.b16 %v2763
    %v3125 = vunpack.c.l.b16 %v2764
    %v3126 = vunpack.c.h.b16 %v2764
    %v3127 = vunpack.c.l.b16 %v2765
    %v3128 = vunpack.c.h.b16 %v2765
    %v3129 = vunpack.c.l.b16 %v2766
    %v3130 = vunpack.c.h.b16 %v2766
    %v3131 = vunpack.c.l.b16 %v2767
    %v3132 = vunpack.c.h.b16 %v2767
    %v3133 = vunpack.c.l.b16 %v2768
    %v3134 = vunpack.c.h.b16 %v2768
    %v3135 = vunpack.c.l.b16 %v2769
    %v3136 = vunpack.c.h.b16 %v2769
    %v3137 = vunpack.c.l.b16 %v2770
    %v3138 = vunpack.c.h.b16 %v2770
    %v3139 = vunpack.c.l.b16 %v2771
    %v3140 = vunpack.c.h.b16 %v2771
    %v3141 = vunpack.c.l.b16 %v2772
    %v3142 = vunpack.c.h.b16 %v2772
    %v3143 = vunpack.c.l.b16 %v2773
    %v3144 = vunpack.c.h.b16 %v2773
    %v3145 = vunpack.c.l.b16 %v2774
    %v3146 = vunpack.c.h.b16 %v2774
    %v3147 = vunpack.c.l.b16 %v2775
    %v3148 = vunpack.c.h.b16 %v2775
    %v3149 = vunpack.c.l.b16 %v2776
    %v3150 = vunpack.c.h.b16 %v2776
    %v3151 = vunpack.c.l.b16 %v2777
    %v3152 = vunpack.c.h.b16 %v2777
    %v3153 = vunpack.c.l.b16 %v2778
    %v3154 = vunpack.c.h.b16 %v2778
    %v3155 = vunpack.c.l.b16 %v2779
    %v3156 = vunpack.c.h.b16 %v2779
    %v3157 = vunpack.c.l.b16 %v2780
    %v3158 = vunpack.c.h.b16 %v2780
    %v3159 = vunpack.c.l.b16 %v2781
    %v3160 = vunpack.c.h.b16 %v2781
    %v3161 = vunpack.c.l.b16 %v2782
    %v3162 = vunpack.c.h.b16 %v2782
    %v3163 = vunpack.c.l.b16 %v2783
    %v3164 = vunpack.c.h.b16 %v2783
    %v3165 = vunpack.c.l.b16 %v2784
    %v3166 = vunpack.c.h.b16 %v2784
    %v3167 = vunpack.c.l.b16 %v2785
    %v3168 = vunpack.c.h.b16 %v2785
    %v3169 = vunpack.c.l.b16 %v2786
    %v3170 = vunpack.c.h.b16 %v2786
    %v3171 = vunpack.c.l.b16 %v2787
    %v3172 = vunpack.c.h.b16 %v2787
    %v3173 = vunpack.c.l.b16 %v2788
    %v3174 = vunpack.c.h.b16 %v2788
    %v3175 = vunpack.c.l.b16 %v2789
    %v3176 = vunpack.c.h.b16 %v2789
    %v3177 = vunpack.c.l.b16 %v2790
    %v3178 = vunpack.c.h.b16 %v2790
    %v3179 = vunpack.c.l.b16 %v2791
    %v3180 = vunpack.c.h.b16 %v2791
    %v3181 = vunpack.c.l.b16 %v2792
    %v3182 = vunpack.c.h.b16 %v2792
    %v3183 = vunpack.c.l.b16 %v2793
    %v3184 = vunpack.c.h.b16 %v2793
    %v3185 = vunpack.c.l.b16 %v2794
    %v3186 = vunpack.c.h.b16 %v2794
    %v3187 = vunpack.c.l.b16 %v2795
    %v3188 = vunpack.c.h.b16 %v2795
    %v3189 = vunpack.c.l.b16 %v2796
    %v3190 = vunpack.c.h.b16 %v2796
    %v3191 = vpack.c.b16 %v2939, %v2935
    %v3192 = vpack.c.b16 %v2940, %v2936
    %v3193 = vpack.c.b16 %v2941, %v2937
    %v3194 = vpack.c.b16 %v2942, %v2938
    %v3195 = vpack.c.b16 %v2947, %v2943
    %v3196 = vpack.c.b16 %v2948, %v2944
    %v3197 = vpack.c.b16 %v2949, %v2945
    %v3198 = vpack.c.b16 %v2950, %v2946
    %v3199 = vpack.c.b16 %v2955, %v2951
    %v3200 = vpack.c.b16 %v2956, %v2952
    %v3201 = vpack.c.b16 %v2957, %v2953
    %v3202 = vpack.c.b16 %v2958, %v2954
    %v3203 = vpack.c.b16 %v2963, %v2959
    %v3204 = vpack.c.b16 %v2964, %v2960
    %v3205 = vpack.c.b16 %v2965, %v2961
    %v3206 = vpack.c.b16 %v2966, %v2962
    %v3207 = vpack.c.b16 %v2971, %v2967
    %v3208 = vpack.c.b16 %v2972, %v2968
    %v3209 = vpack.c.b16 %v2973, %v2969
    %v3210 = vpack.c.b16 %v2974, %v2970
    %v3211 = vpack.c.b16 %v2979, %v2975
    %v3212 = vpack.c.b16 %v2980, %v2976
    %v3213 = vpack.c.b16 %v2981, %v2977
    %v3214 = vpack.c.b16 %v2982, %v2978
    %v3215 = vpack.c.b16 %v2987, %v2983
    %v3216 = vpack.c.b16 %v2988, %v2984
    %v3217 = vpack.c.b16 %v2989, %v2985
    %v3218 = vpack.c.b16 %v2990, %v2986
    %v3219 = vpack.c.b16 %v2995, %v2991
    %v3220 = vpack.c.b16 %v2996, %v2992
    %v3221 = vpack.c.b16 %v2997, %v2993
    %v3222 = vpack.c.b16 %v2998, %v2994
    %v3223 = vpack.c.b16 %v3003, %v2999
    %v3224 = vpack.c.b16 %v3004, %v3000
    %v3225 = vpack.c.b16 %v3005, %v3001
    %v3226 = vpack.c.b16 %v3006, %v3002
    %v3227 = vpack.c.b16 %v3011, %v3007
    %v3228 = vpack.c.b16 %v3012, %v3008
    %v3229 = vpack.c.b16 %v3013, %v3009
    %v3230 = vpack.c.b16 %v3014, %v3010
    %v3231 = vpack.c.b16 %v3019, %v3015
    %v3232 = vpack.c.b16 %v3020, %v3016
    %v3233 = vpack.c.b16 %v3021, %v3017
    %v3234 = vpack.c.b16 %v3022, %v3018
    %v3235 = vpack.c.b16 %v3027, %v3023
    %v3236 = vpack.c.b16 %v3028, %v3024
    %v3237 = vpack.c.b16 %v3029, %v3025
    %v3238 = vpack.c.b16 %v3030, %v3026
    %v3239 = vpack.c.b16 %v3035, %v3031
    %v3240 = vpack.c.b16 %v3036, %v3032
    %v3241 = vpack.c.b16 %v3037, %v3033
    %v3242 = vpack.c.b16 %v3038, %v3034
    %v3243 = vpack.c.b16 %v3043, %v3039
    %v3244 = vpack.c.b16 %v3044, %v3040
    %v3245 = vpack.c.b16 %v3045, %v3041
    %v3246 = vpack.c.b16 %v3046, %v3042
    %v3247 = vpack.c.b16 %v3051, %v3047
    %v3248 = vpack.c.b16 %v3052, %v3048
    %v3249 = vpack.c.b16 %v3053, %v3049
    %v3250 = vpack.c.b16 %v3054, %v3050
    %v3251 = vpack.c.b16 %v3059, %v3055
    %v3252 = vpack.c.b16 %v3060, %v3056
    %v3253 = vpack.c.b16 %v3061, %v3057
    %v3254 = vpack.c.b16 %v3062, %v3058
    %v3255 = vpack.c.b16 %v3067, %v3063
    %v3256 = vpack.c.b16 %v3068, %v3064
    %v3257 = vpack.c.b16 %v3069, %v3065
    %v3258 = vpack.c.b16 %v3070, %v3066
    %v3259 = vpack.c.b16 %v3075, %v3071
    %v3260 = vpack.c.b16 %v3076, %v3072
    %v3261 = vpack.c.b16 %v3077, %v3073
    %v3262 = vpack.c.b16 %v3078, %v3074
    %v3263 = vpack.c.b16 %v3083, %v3079
    %v3264 = vpack.c.b16 %v3084, %v3080
    %v3265 = vpack.c.b16 %v3085, %v3081
    %v3266 = vpack.c.b16 %v3086, %v3082
    %v3267 = vpack.c.b16 %v3091, %v3087
    %v3268 = vpack.c.b16 %v3092, %v3088
    %v3269 = vpack.c.b16 %v3093, %v3089
    %v3270 = vpack.c.b16 %v3094, %v3090
    %v3271 = vpack.c.b16 %v3099, %v3095
    %v3272 = vpack.c.b16 %v3100, %v3096
    %v3273 = vpack.c.b16 %v3101, %v3097
    %v3274 = vpack.c.b16 %v3102, %v3098
    %v3275 = vpack.c.b16 %v3107, %v3103
    %v3276 = vpack.c.b16 %v3108, %v3104
    %v3277 = vpack.c.b16 %v3109, %v3105
    %v3278 = vpack.c.b16 %v3110, %v3106
    %v3279 = vpack.c.b16 %v3115, %v3111
    %v3280 = vpack.c.b16 %v3116, %v3112
    %v3281 = vpack.c.b16 %v3117, %v3113
    %v3282 = vpack.c.b16 %v3118, %v3114
    %v3283 = vpack.c.b16 %v3123, %v3119
    %v3284 = vpack.c.b16 %v3124, %v3120
    %v3285 = vpack.c.b16 %v3125, %v3121
    %v3286 = vpack.c.b16 %v3126, %v3122
    %v3287 = vpack.c.b16 %v3131, %v3127
    %v3288 = vpack.c.b16 %v3132, %v3128
    %v3289 = vpack.c.b16 %v3133, %v3129
    %v3290 = vpack.c.b16 %v3134, %v3130
    %v3291 = vpack.c.b16 %v3139, %v3135
    %v3292 = vpack.c.b16 %v3140, %v3136
    %v3293 = vpack.c.b16 %v3141, %v3137
    %v3294 = vpack.c.b16 %v3142, %v3138
    %v3295 = vpack.c.b16 %v3147, %v3143
    %v3296 = vpack.c.b16 %v3148, %v3144
    %v3297 = vpack.c.b16 %v3149, %v3145
    %v3298 = vpack.c.b16 %v3150, %v3146
    %v3299 = vpack.c.b16 %v3155, %v3151
    %v3300 = vpack.c.b16 %v3156, %v3152
    %v3301 = vpack.c.b16 %v3157, %v3153
    %v3302 = vpack.c.b16 %v3158, %v3154
    %v3303 = vpack.c.b16 %v3163, %v3159
    %v3304 = vpack.c.b16 %v3164, %v3160
    %v3305 = vpack.c.b16 %v3165, %v3161
    %v3306 = vpack.c.b16 %v3166, %v3162
    %v3307 = vpack.c.b16 %v3171, %v3167
    %v3308 = vpack.c.b16 %v3172, %v3168
    %v3309 = vpack.c.b16 %v3173, %v3169
    %v3310 = vpack.c.b16 %v3174, %v3170
    %v3311 = vpack.c.b16 %v3179, %v3175
    %v3312 = vpack.c.b16 %v3180, %v3176
    %v3313 = vpack.c.b16 %v3181, %v3177
    %v3314 = vpack.c.b16 %v3182, %v3178
    %v3315 = vpack.c.b16 %v3187, %v3183
    %v3316 = vpack.c.b16 %v3188, %v3184
    %v3317 = vpack.c.b16 %v3189, %v3185
    %v3318 = vpack.c.b16 %v3190, %v3186
    %3447 = vmatpush.bf16.msra.mxu0 %v3219
    %3448 = vmatpush.bf16.msra.mxu0 %v3215
    %3449 = vmatpush.bf16.msra.mxu0 %v3211
    %3450 = vmatpush.bf16.msra.mxu0 %v3207
    %3451 = vmatpush.bf16.msra.mxu0 %v3203
    %3452 = vmatpush.bf16.msra.mxu0 %v3199
    %3453 = vmatpush.bf16.msra.mxu0 %v3195
    %3454 = vmatpush.bf16.msra.mxu0 %v3191
    %3455 = vmatmul.bf16.gmra.mxu0 %v2665
    %v3456 = vpop.f32.mrf.mxu0
    %v3457 = vadd.f32 %v2799, %v3456
    %v3458 = vpop.f32.mrf.mxu0
    %v3459 = vadd.f32 %v2799, %v3458
    %3460 = vdwg.mxu0
    %3461 = vmatpush.bf16.msra.mxu0 %v3251
    %3462 = vmatpush.bf16.msra.mxu0 %v3247
    %3463 = vmatpush.bf16.msra.mxu0 %v3243
    %3464 = vmatpush.bf16.msra.mxu0 %v3239
    %3465 = vmatpush.bf16.msra.mxu0 %v3235
    %3466 = vmatpush.bf16.msra.mxu0 %v3231
    %3467 = vmatpush.bf16.msra.mxu0 %v3227
    %3468 = vmatpush.bf16.msra.mxu0 %v3223
    %3469 = vmatmul.bf16.gmra.mxu0 %v2666
    %v3470 = vpop.f32.mrf.mxu0
    %v3471 = vadd.f32 %v3457, %v3470
    %v3472 = vpop.f32.mrf.mxu0
    %v3473 = vadd.f32 %v3459, %v3472
    %3474 = vdwg.mxu0
    %3475 = vmatpush.bf16.msra.mxu0 %v3283
    %3476 = vmatpush.bf16.msra.mxu0 %v3279
    %3477 = vmatpush.bf16.msra.mxu0 %v3275
    %3478 = vmatpush.bf16.msra.mxu0 %v3271
    %3479 = vmatpush.bf16.msra.mxu0 %v3267
    %3480 = vmatpush.bf16.msra.mxu0 %v3263
    %3481 = vmatpush.bf16.msra.mxu0 %v3259
    %3482 = vmatpush.bf16.msra.mxu0 %v3255
    %3483 = vmatmul.bf16.gmra.mxu0 %v2667
    %v3484 = vpop.f32.mrf.mxu0
    %v3485 = vadd.f32 %v3471, %v3484
    %v3486 = vpop.f32.mrf.mxu0
    %v3487 = vadd.f32 %v3473, %v3486
    %3488 = vdwg.mxu0
    %3489 = vmatpush.bf16.msra.mxu0 %v3315
    %3490 = vmatpush.bf16.msra.mxu0 %v3311
    %3491 = vmatpush.bf16.msra.mxu0 %v3307
    %3492 = vmatpush.bf16.msra.mxu0 %v3303
    %3493 = vmatpush.bf16.msra.mxu0 %v3299
    %3494 = vmatpush.bf16.msra.mxu0 %v3295
    %3495 = vmatpush.bf16.msra.mxu0 %v3291
    %3496 = vmatpush.bf16.msra.mxu0 %v3287
    %3497 = vmatmul.bf16.gmra.mxu0 %v2668
    %v3498 = vpop.f32.mrf.mxu0
    %v3499 = vadd.f32 %v3485, %v3498
    %v3500 = vpop.f32.mrf.mxu0
    %v3501 = vadd.f32 %v3487, %v3500
    %3502 = vdwg.mxu0
    %3503 = vmatpush.bf16.msra.mxu0 %v3220
    %3504 = vmatpush.bf16.msra.mxu0 %v3216
    %3505 = vmatpush.bf16.msra.mxu0 %v3212
    %3506 = vmatpush.bf16.msra.mxu0 %v3208
    %3507 = vmatpush.bf16.msra.mxu0 %v3204
    %3508 = vmatpush.bf16.msra.mxu0 %v3200
    %3509 = vmatpush.bf16.msra.mxu0 %v3196
    %3510 = vmatpush.bf16.msra.mxu0 %v3192
    %3511 = vmatmul.bf16.gmra.mxu0 %v2665
    %v3512 = vpop.f32.mrf.mxu0
    %v3513 = vadd.f32 %v2800, %v3512
    %v3514 = vpop.f32.mrf.mxu0
    %v3515 = vadd.f32 %v2800, %v3514
    %3516 = vdwg.mxu0
    %3517 = vmatpush.bf16.msra.mxu0 %v3252
    %3518 = vmatpush.bf16.msra.mxu0 %v3248
    %3519 = vmatpush.bf16.msra.mxu0 %v3244
    %3520 = vmatpush.bf16.msra.mxu0 %v3240
    %3521 = vmatpush.bf16.msra.mxu0 %v3236
    %3522 = vmatpush.bf16.msra.mxu0 %v3232
    %3523 = vmatpush.bf16.msra.mxu0 %v3228
    %3524 = vmatpush.bf16.msra.mxu0 %v3224
    %3525 = vmatmul.bf16.gmra.mxu0 %v2666
    %v3526 = vpop.f32.mrf.mxu0
    %v3527 = vadd.f32 %v3513, %v3526
    %v3528 = vpop.f32.mrf.mxu0
    %v3529 = vadd.f32 %v3515, %v3528
    %3530 = vdwg.mxu0
    %3531 = vmatpush.bf16.msra.mxu0 %v3284
    %3532 = vmatpush.bf16.msra.mxu0 %v3280
    %3533 = vmatpush.bf16.msra.mxu0 %v3276
    %3534 = vmatpush.bf16.msra.mxu0 %v3272
    %3535 = vmatpush.bf16.msra.mxu0 %v3268
    %3536 = vmatpush.bf16.msra.mxu0 %v3264
    %3537 = vmatpush.bf16.msra.mxu0 %v3260
    %3538 = vmatpush.bf16.msra.mxu0 %v3256
    %3539 = vmatmul.bf16.gmra.mxu0 %v2667
    %v3540 = vpop.f32.mrf.mxu0
    %v3541 = vadd.f32 %v3527, %v3540
    %v3542 = vpop.f32.mrf.mxu0
    %v3543 = vadd.f32 %v3529, %v3542
    %3544 = vdwg.mxu0
    %3545 = vmatpush.bf16.msra.mxu0 %v3316
    %3546 = vmatpush.bf16.msra.mxu0 %v3312
    %3547 = vmatpush.bf16.msra.mxu0 %v3308
    %3548 = vmatpush.bf16.msra.mxu0 %v3304
    %3549 = vmatpush.bf16.msra.mxu0 %v3300
    %3550 = vmatpush.bf16.msra.mxu0 %v3296
    %3551 = vmatpush.bf16.msra.mxu0 %v3292
    %3552 = vmatpush.bf16.msra.mxu0 %v3288
    %3553 = vmatmul.bf16.gmra.mxu0 %v2668
    %v3554 = vpop.f32.mrf.mxu0
    %v3555 = vadd.f32 %v3541, %v3554
    %v3556 = vpop.f32.mrf.mxu0
    %v3557 = vadd.f32 %v3543, %v3556
    %3558 = vdwg.mxu0
    %3559 = vmatpush.bf16.msra.mxu0 %v3221
    %3560 = vmatpush.bf16.msra.mxu0 %v3217
    %3561 = vmatpush.bf16.msra.mxu0 %v3213
    %3562 = vmatpush.bf16.msra.mxu0 %v3209
    %3563 = vmatpush.bf16.msra.mxu0 %v3205
    %3564 = vmatpush.bf16.msra.mxu0 %v3201
    %3565 = vmatpush.bf16.msra.mxu0 %v3197
    %3566 = vmatpush.bf16.msra.mxu0 %v3193
    %3567 = vmatmul.bf16.gmra.mxu0 %v2665
    %v3568 = vpop.f32.mrf.mxu0
    %v3569 = vadd.f32 %v2801, %v3568
    %v3570 = vpop.f32.mrf.mxu0
    %v3571 = vadd.f32 %v2801, %v3570
    %3572 = vdwg.mxu0
    %3573 = vmatpush.bf16.msra.mxu0 %v3253
    %3574 = vmatpush.bf16.msra.mxu0 %v3249
    %3575 = vmatpush.bf16.msra.mxu0 %v3245
    %3576 = vmatpush.bf16.msra.mxu0 %v3241
    %3577 = vmatpush.bf16.msra.mxu0 %v3237
    %3578 = vmatpush.bf16.msra.mxu0 %v3233
    %3579 = vmatpush.bf16.msra.mxu0 %v3229
    %3580 = vmatpush.bf16.msra.mxu0 %v3225
    %3581 = vmatmul.bf16.gmra.mxu0 %v2666
    %v3582 = vpop.f32.mrf.mxu0
    %v3583 = vadd.f32 %v3569, %v3582
    %v3584 = vpop.f32.mrf.mxu0
    %v3585 = vadd.f32 %v3571, %v3584
    %3586 = vdwg.mxu0
    %3587 = vmatpush.bf16.msra.mxu0 %v3285
    %3588 = vmatpush.bf16.msra.mxu0 %v3281
    %3589 = vmatpush.bf16.msra.mxu0 %v3277
    %3590 = vmatpush.bf16.msra.mxu0 %v3273
    %3591 = vmatpush.bf16.msra.mxu0 %v3269
    %3592 = vmatpush.bf16.msra.mxu0 %v3265
    %3593 = vmatpush.bf16.msra.mxu0 %v3261
    %3594 = vmatpush.bf16.msra.mxu0 %v3257
    %3595 = vmatmul.bf16.gmra.mxu0 %v2667
    %v3596 = vpop.f32.mrf.mxu0
    %v3597 = vadd.f32 %v3583, %v3596
    %v3598 = vpop.f32.mrf.mxu0
    %v3599 = vadd.f32 %v3585, %v3598
    %3600 = vdwg.mxu0
    %3601 = vmatpush.bf16.msra.mxu0 %v3317
    %3602 = vmatpush.bf16.msra.mxu0 %v3313
    %3603 = vmatpush.bf16.msra.mxu0 %v3309
    %3604 = vmatpush.bf16.msra.mxu0 %v3305
    %3605 = vmatpush.bf16.msra.mxu0 %v3301
    %3606 = vmatpush.bf16.msra.mxu0 %v3297
    %3607 = vmatpush.bf16.msra.mxu0 %v3293
    %3608 = vmatpush.bf16.msra.mxu0 %v3289
    %3609 = vmatmul.bf16.gmra.mxu0 %v2668
    %v3610 = vpop.f32.mrf.mxu0
    %v3611 = vadd.f32 %v3597, %v3610
    %v3612 = vpop.f32.mrf.mxu0
    %v3613 = vadd.f32 %v3599, %v3612
    %3614 = vdwg.mxu0
    %3615 = vmatpush.bf16.msra.mxu0 %v3222
    %3616 = vmatpush.bf16.msra.mxu0 %v3218
    %3617 = vmatpush.bf16.msra.mxu0 %v3214
    %3618 = vmatpush.bf16.msra.mxu0 %v3210
    %3619 = vmatpush.bf16.msra.mxu0 %v3206
    %3620 = vmatpush.bf16.msra.mxu0 %v3202
    %3621 = vmatpush.bf16.msra.mxu0 %v3198
    %3622 = vmatpush.bf16.msra.mxu0 %v3194
    %3623 = vmatmul.bf16.gmra.mxu0 %v2665
    %v3624 = vpop.f32.mrf.mxu0
    %v3625 = vadd.f32 %v2802, %v3624
    %v3626 = vpop.f32.mrf.mxu0
    %v3627 = vadd.f32 %v2802, %v3626
    %3628 = vdwg.mxu0
    %3629 = vmatpush.bf16.msra.mxu0 %v3254
    %3630 = vmatpush.bf16.msra.mxu0 %v3250
    %3631 = vmatpush.bf16.msra.mxu0 %v3246
    %3632 = vmatpush.bf16.msra.mxu0 %v3242
    %3633 = vmatpush.bf16.msra.mxu0 %v3238
    %3634 = vmatpush.bf16.msra.mxu0 %v3234
    %3635 = vmatpush.bf16.msra.mxu0 %v3230
    %3636 = vmatpush.bf16.msra.mxu0 %v3226
    %3637 = vmatmul.bf16.gmra.mxu0 %v2666
    %v3638 = vpop.f32.mrf.mxu0
    %v3639 = vadd.f32 %v3625, %v3638
    %v3640 = vpop.f32.mrf.mxu0
    %v3641 = vadd.f32 %v3627, %v3640
    %3642 = vdwg.mxu0
    %3643 = vmatpush.bf16.msra.mxu0 %v3286
    %3644 = vmatpush.bf16.msra.mxu0 %v3282
    %3645 = vmatpush.bf16.msra.mxu0 %v3278
    %3646 = vmatpush.bf16.msra.mxu0 %v3274
    %3647 = vmatpush.bf16.msra.mxu0 %v3270
    %3648 = vmatpush.bf16.msra.mxu0 %v3266
    %3649 = vmatpush.bf16.msra.mxu0 %v3262
    %3650 = vmatpush.bf16.msra.mxu0 %v3258
    %3651 = vmatmul.bf16.gmra.mxu0 %v2667
    %v3652 = vpop.f32.mrf.mxu0
    %v3653 = vadd.f32 %v3639, %v3652
    %v3654 = vpop.f32.mrf.mxu0
    %v3655 = vadd.f32 %v3641, %v3654
    %3656 = vdwg.mxu0
    %3657 = vmatpush.bf16.msra.mxu0 %v3318
    %3658 = vmatpush.bf16.msra.mxu0 %v3314
    %3659 = vmatpush.bf16.msra.mxu0 %v3310
    %3660 = vmatpush.bf16.msra.mxu0 %v3306
    %3661 = vmatpush.bf16.msra.mxu0 %v3302
    %3662 = vmatpush.bf16.msra.mxu0 %v3298
    %3663 = vmatpush.bf16.msra.mxu0 %v3294
    %3664 = vmatpush.bf16.msra.mxu0 %v3290
    %3665 = vmatmul.bf16.gmra.mxu0 %v2668
    %v3666 = vpop.f32.mrf.mxu0
    %v3667 = vadd.f32 %v3653, %v3666
    %v3668 = vpop.f32.mrf.mxu0
    %v3669 = vadd.f32 %v3655, %v3668
    %3670 = vdwg.mxu0
    %v3671 = vpack.c.bf16 %v3501, %v3499
    %v3672 = vpack.c.bf16 %v3557, %v3555
    %v3673 = vpack.c.bf16 %v3613, %v3611
    %v3674 = vpack.c.bf16 %v3669, %v3667
    %v3675 = vld [vmem:[%s7] sm:$0xf]
    %v3676 = vld [vmem:[%s7 + $0x4] sm:$0xf]
    %v3677 = vld [vmem:[%s7 + $0x8] sm:$0xf]
    %v3678 = vld [vmem:[%s7 + $0xc] sm:$0xf]
    %v3679 = vld [vmem:[%s7 + $0x10] sm:$0xf]
    %v3680 = vld [vmem:[%s7 + $0x14] sm:$0xf]
    %v3681 = vld [vmem:[%s7 + $0x18] sm:$0xf]
    %v3682 = vld [vmem:[%s7 + $0x1c] sm:$0xf]
    %v3683 = vld [vmem:[%s7 + $0x20] sm:$0xf]
    %v3684 = vld [vmem:[%s7 + $0x24] sm:$0xf]
    %v3685 = vld [vmem:[%s7 + $0x28] sm:$0xf]
    %v3686 = vld [vmem:[%s7 + $0x2c] sm:$0xf]
    %v3687 = vld [vmem:[%s7 + $0x30] sm:$0xf]
    %v3688 = vld [vmem:[%s7 + $0x34] sm:$0xf]
    %v3689 = vld [vmem:[%s7 + $0x38] sm:$0xf]
    %v3690 = vld [vmem:[%s7 + $0x3c] sm:$0xf]
    %v3691 = vld [vmem:[%s7 + $0x40] sm:$0xf]
    %v3692 = vld [vmem:[%s7 + $0x44] sm:$0xf]
    %v3693 = vld [vmem:[%s7 + $0x48] sm:$0xf]
    %v3694 = vld [vmem:[%s7 + $0x4c] sm:$0xf]
    %v3695 = vld [vmem:[%s7 + $0x50] sm:$0xf]
    %v3696 = vld [vmem:[%s7 + $0x54] sm:$0xf]
    %v3697 = vld [vmem:[%s7 + $0x58] sm:$0xf]
    %v3698 = vld [vmem:[%s7 + $0x5c] sm:$0xf]
    %v3699 = vld [vmem:[%s7 + $0x60] sm:$0xf]
    %v3700 = vld [vmem:[%s7 + $0x64] sm:$0xf]
    %v3701 = vld [vmem:[%s7 + $0x68] sm:$0xf]
    %v3702 = vld [vmem:[%s7 + $0x6c] sm:$0xf]
    %v3703 = vld [vmem:[%s7 + $0x70] sm:$0xf]
    %v3704 = vld [vmem:[%s7 + $0x74] sm:$0xf]
    %v3705 = vld [vmem:[%s7 + $0x78] sm:$0xf]
    %v3706 = vld [vmem:[%s7 + $0x7c] sm:$0xf]
    %v3707 = vld [vmem:[%s7 + $0x80] sm:$0xf]
    %v3708 = vld [vmem:[%s7 + $0x84] sm:$0xf]
    %v3709 = vld [vmem:[%s7 + $0x88] sm:$0xf]
    %v3710 = vld [vmem:[%s7 + $0x8c] sm:$0xf]
    %v3711 = vld [vmem:[%s7 + $0x90] sm:$0xf]
    %v3712 = vld [vmem:[%s7 + $0x94] sm:$0xf]
    %v3713 = vld [vmem:[%s7 + $0x98] sm:$0xf]
    %v3714 = vld [vmem:[%s7 + $0x9c] sm:$0xf]
    %v3715 = vld [vmem:[%s7 + $0xa0] sm:$0xf]
    %v3716 = vld [vmem:[%s7 + $0xa4] sm:$0xf]
    %v3717 = vld [vmem:[%s7 + $0xa8] sm:$0xf]
    %v3718 = vld [vmem:[%s7 + $0xac] sm:$0xf]
    %v3719 = vld [vmem:[%s7 + $0xb0] sm:$0xf]
    %v3720 = vld [vmem:[%s7 + $0xb4] sm:$0xf]
    %v3721 = vld [vmem:[%s7 + $0xb8] sm:$0xf]
    %v3722 = vld [vmem:[%s7 + $0xbc] sm:$0xf]
    %v3723 = vld [vmem:[%s7 + $0xc0] sm:$0xf]
    %v3724 = vld [vmem:[%s7 + $0xc4] sm:$0xf]
    %v3725 = vld [vmem:[%s7 + $0xc8] sm:$0xf]
    %v3726 = vld [vmem:[%s7 + $0xcc] sm:$0xf]
    %v3727 = vld [vmem:[%s7 + $0xd0] sm:$0xf]
    %v3728 = vld [vmem:[%s7 + $0xd4] sm:$0xf]
    %v3729 = vld [vmem:[%s7 + $0xd8] sm:$0xf]
    %v3730 = vld [vmem:[%s7 + $0xdc] sm:$0xf]
    %v3731 = vld [vmem:[%s7 + $0xe0] sm:$0xf]
    %v3732 = vld [vmem:[%s7 + $0xe4] sm:$0xf]
    %v3733 = vld [vmem:[%s7 + $0xe8] sm:$0xf]
    %v3734 = vld [vmem:[%s7 + $0xec] sm:$0xf]
    %v3735 = vld [vmem:[%s7 + $0xf0] sm:$0xf]
    %v3736 = vld [vmem:[%s7 + $0xf4] sm:$0xf]
    %v3737 = vld [vmem:[%s7 + $0xf8] sm:$0xf]
    %v3738 = vld [vmem:[%s7 + $0xfc] sm:$0xf]
    %v3739 = vld [vmem:[%s8] sm:$0x1]
    %v3741 = vperm.slane %v3739, 0
    %v3807 = vunpack.c.l.b16 %v3675
    %v3808 = vunpack.c.l.b16 %v3676
    %v3809 = vunpack.c.l.b16 %v3677
    %v3810 = vunpack.c.l.b16 %v3678
    %v3811 = vunpack.c.l.b16 %v3679
    %v3812 = vunpack.c.l.b16 %v3680
    %v3813 = vunpack.c.l.b16 %v3681
    %v3814 = vunpack.c.l.b16 %v3682
    %v3815 = vunpack.c.l.b16 %v3683
    %v3816 = vunpack.c.l.b16 %v3684
    %v3817 = vunpack.c.l.b16 %v3685
    %v3818 = vunpack.c.l.b16 %v3686
    %v3819 = vunpack.c.l.b16 %v3687
    %v3820 = vunpack.c.l.b16 %v3688
    %v3821 = vunpack.c.l.b16 %v3689
    %v3822 = vunpack.c.l.b16 %v3690
    %v3823 = vunpack.c.l.b16 %v3691
    %v3824 = vunpack.c.l.b16 %v3692
    %v3825 = vunpack.c.l.b16 %v3693
    %v3826 = vunpack.c.l.b16 %v3694
    %v3827 = vunpack.c.l.b16 %v3695
    %v3828 = vunpack.c.l.b16 %v3696
    %v3829 = vunpack.c.l.b16 %v3697
    %v3830 = vunpack.c.l.b16 %v3698
    %v3831 = vunpack.c.l.b16 %v3699
    %v3832 = vunpack.c.l.b16 %v3700
    %v3833 = vunpack.c.l.b16 %v3701
    %v3834 = vunpack.c.l.b16 %v3702
    %v3835 = vunpack.c.l.b16 %v3703
    %v3836 = vunpack.c.l.b16 %v3704
    %v3837 = vunpack.c.l.b16 %v3705
    %v3838 = vunpack.c.l.b16 %v3706
    %v3839 = vunpack.c.l.b16 %v3707
    %v3840 = vunpack.c.l.b16 %v3708
    %v3841 = vunpack.c.l.b16 %v3709
    %v3842 = vunpack.c.l.b16 %v3710
    %v3843 = vunpack.c.l.b16 %v3711
    %v3844 = vunpack.c.l.b16 %v3712
    %v3845 = vunpack.c.l.b16 %v3713
    %v3846 = vunpack.c.l.b16 %v3714
    %v3847 = vunpack.c.l.b16 %v3715
    %v3848 = vunpack.c.l.b16 %v3716
    %v3849 = vunpack.c.l.b16 %v3717
    %v3850 = vunpack.c.l.b16 %v3718
    %v3851 = vunpack.c.l.b16 %v3719
    %v3852 = vunpack.c.l.b16 %v3720
    %v3853 = vunpack.c.l.b16 %v3721
    %v3854 = vunpack.c.l.b16 %v3722
    %v3855 = vunpack.c.l.b16 %v3723
    %v3856 = vunpack.c.l.b16 %v3724
    %v3857 = vunpack.c.l.b16 %v3725
    %v3858 = vunpack.c.l.b16 %v3726
    %v3859 = vunpack.c.l.b16 %v3727
    %v3860 = vunpack.c.l.b16 %v3728
    %v3861 = vunpack.c.l.b16 %v3729
    %v3862 = vunpack.c.l.b16 %v3730
    %v3863 = vunpack.c.l.b16 %v3731
    %v3864 = vunpack.c.l.b16 %v3732
    %v3865 = vunpack.c.l.b16 %v3733
    %v3866 = vunpack.c.l.b16 %v3734
    %v3867 = vunpack.c.l.b16 %v3735
    %v3868 = vunpack.c.l.b16 %v3736
    %v3869 = vunpack.c.l.b16 %v3737
    %v3870 = vunpack.c.l.b16 %v3738
    %v3871 = vpack.c.b16 %v3808, %v3807
    %v3872 = vpack.c.b16 %v3810, %v3809
    %v3873 = vpack.c.b16 %v3812, %v3811
    %v3874 = vpack.c.b16 %v3814, %v3813
    %v3875 = vpack.c.b16 %v3816, %v3815
    %v3876 = vpack.c.b16 %v3818, %v3817
    %v3877 = vpack.c.b16 %v3820, %v3819
    %v3878 = vpack.c.b16 %v3822, %v3821
    %v3879 = vpack.c.b16 %v3824, %v3823
    %v3880 = vpack.c.b16 %v3826, %v3825
    %v3881 = vpack.c.b16 %v3828, %v3827
    %v3882 = vpack.c.b16 %v3830, %v3829
    %v3883 = vpack.c.b16 %v3832, %v3831
    %v3884 = vpack.c.b16 %v3834, %v3833
    %v3885 = vpack.c.b16 %v3836, %v3835
    %v3886 = vpack.c.b16 %v3838, %v3837
    %v3887 = vpack.c.b16 %v3840, %v3839
    %v3888 = vpack.c.b16 %v3842, %v3841
    %v3889 = vpack.c.b16 %v3844, %v3843
    %v3890 = vpack.c.b16 %v3846, %v3845
    %v3891 = vpack.c.b16 %v3848, %v3847
    %v3892 = vpack.c.b16 %v3850, %v3849
    %v3893 = vpack.c.b16 %v3852, %v3851
    %v3894 = vpack.c.b16 %v3854, %v3853
    %v3895 = vpack.c.b16 %v3856, %v3855
    %v3896 = vpack.c.b16 %v3858, %v3857
    %v3897 = vpack.c.b16 %v3860, %v3859
    %v3898 = vpack.c.b16 %v3862, %v3861
    %v3899 = vpack.c.b16 %v3864, %v3863
    %v3900 = vpack.c.b16 %v3866, %v3865
    %v3901 = vpack.c.b16 %v3868, %v3867
    %v3902 = vpack.c.b16 %v3870, %v3869
    %3935 = vmatpush.bf16.msra.mxu0 %v3878
    %3936 = vmatpush.bf16.msra.mxu0 %v3877
    %3937 = vmatpush.bf16.msra.mxu0 %v3876
    %3938 = vmatpush.bf16.msra.mxu0 %v3875
    %3939 = vmatpush.bf16.msra.mxu0 %v3874
    %3940 = vmatpush.bf16.msra.mxu0 %v3873
    %3941 = vmatpush.bf16.msra.mxu0 %v3872
    %3942 = vmatpush.bf16.msra.mxu0 %v3871
    %3943 = vmatmul.bf16.gmra.mxu0 %v3671
    %v3944 = vpop.f32.mrf.mxu0
    %v3945 = vadd.f32 %v3741, %v3944
    %v3946 = vpop.f32.mrf.mxu0
    %v3947 = vadd.f32 %v3741, %v3946
    %3948 = vdwg.mxu0
    %3949 = vmatpush.bf16.msra.mxu0 %v3886
    %3950 = vmatpush.bf16.msra.mxu0 %v3885
    %3951 = vmatpush.bf16.msra.mxu0 %v3884
    %3952 = vmatpush.bf16.msra.mxu0 %v3883
    %3953 = vmatpush.bf16.msra.mxu0 %v3882
    %3954 = vmatpush.bf16.msra.mxu0 %v3881
    %3955 = vmatpush.bf16.msra.mxu0 %v3880
    %3956 = vmatpush.bf16.msra.mxu0 %v3879
    %3957 = vmatmul.bf16.gmra.mxu0 %v3672
    %v3958 = vpop.f32.mrf.mxu0
    %v3959 = vadd.f32 %v3945, %v3958
    %v3960 = vpop.f32.mrf.mxu0
    %v3961 = vadd.f32 %v3947, %v3960
    %3962 = vdwg.mxu0
    %3963 = vmatpush.bf16.msra.mxu0 %v3894
    %3964 = vmatpush.bf16.msra.mxu0 %v3893
    %3965 = vmatpush.bf16.msra.mxu0 %v3892
    %3966 = vmatpush.bf16.msra.mxu0 %v3891
    %3967 = vmatpush.bf16.msra.mxu0 %v3890
    %3968 = vmatpush.bf16.msra.mxu0 %v3889
    %3969 = vmatpush.bf16.msra.mxu0 %v3888
    %3970 = vmatpush.bf16.msra.mxu0 %v3887
    %3971 = vmatmul.bf16.gmra.mxu0 %v3673
    %v3972 = vpop.f32.mrf.mxu0
    %v3973 = vadd.f32 %v3959, %v3972
    %v3974 = vpop.f32.mrf.mxu0
    %v3975 = vadd.f32 %v3961, %v3974
    %3976 = vdwg.mxu0
    %3977 = vmatpush.bf16.msra.mxu0 %v3902
    %3978 = vmatpush.bf16.msra.mxu0 %v3901
    %3979 = vmatpush.bf16.msra.mxu0 %v3900
    %3980 = vmatpush.bf16.msra.mxu0 %v3899
    %3981 = vmatpush.bf16.msra.mxu0 %v3898
    %3982 = vmatpush.bf16.msra.mxu0 %v3897
    %3983 = vmatpush.bf16.msra.mxu0 %v3896
    %3984 = vmatpush.bf16.msra.mxu0 %v3895
    %3985 = vmatmul.bf16.gmra.mxu0 %v3674
    %v3986 = vpop.f32.mrf.mxu0
    %v3987 = vadd.f32 %v3973, %v3986
    %v3988 = vpop.f32.mrf.mxu0
    %v3989 = vadd.f32 %v3975, %v3988
    %3990 = vdwg.mxu0
    %vm3991 = vcmask 80896
    %3992 = vst.msk [vmem:[#allocation2] sm:$0xff] %vm3991, %v3987
    %3993 = vst.msk [vmem:[#allocation2 + $0x8] sm:$0xff] %vm3991, %v3989
    // Predicated region
    $region38: #{mlp_forward.1} parent=1 // pred_check
      _
    $region39: #{mlp_forward.1} parent=1 // pred_check_branch
      %3995 = sbr.rel (0) target = $region41
    $region40: #{mlp_forward.1} parent=1 // pred_region
      %3997 = vsyncadd [#allocation3], 0
      %s3998 = sshll.u32 [#allocation2], 4
      %s3999 = int_to_ptr.vmem [resolvable:$true] %s3998
      %s4000 = sshll.u32 %s9, 4
      %s4001 = int_to_ptr.hbm [resolvable:$true] %s4000
      %4006 = dma.vmem_to_hbm [thread:$0]  %s3999, 256, %s4001, [#allocation3], 128, 128, 8
    $region41: #{mlp_forward.1} parent=1 // pred_fallthru
      _
    // Predicated region
    $region42: #{mlp_forward.1} parent=1 // pred_check
      _
    $region43: #{mlp_forward.1} parent=1 // pred_check_branch
      %4008 = sbr.rel (0) target = $region45
    $region44: #{mlp_forward.1} parent=1 // pred_region
      %4010 = dma.done [#allocation3], 256
    $region45: #{mlp_forward.1} parent=1 // pred_fallthru
      _
    %4011 = vsyncpa [#allocation3], 1

</llo_original>
